<compile_context>
chip_gen: v7x
topology: tpu7x:2x2x1
jax: 0.10.0
libtpu: 0.0.40
codegen_flags: <defaults>
</compile_context>

<pallas_src>
import math
from functools import partial

import jax
import jax.numpy as jnp
from jax import lax
from jax.experimental import pallas as pl
from jax.experimental.pallas import tpu as pltpu


# ----------------------------- config ---------------------------------------
N_EMBD = 128          # cfg.n_embd
N_HEAD = 4            # cfg.n_head
BLOCK_SIZE = 16       # cfg.block_size (== T)
BATCH = 2
HEAD_DIM = N_EMBD // N_HEAD
LORA_R = 32
LORA_ALPHA = 64
LORA_SCALE = LORA_ALPHA / LORA_R
LN_EPS = 1e-5
ATT_PAD = 128         # attention-prob key axis padded to a full lane width


# ----------------------------- kernel helpers --------------------------------
def _gelu_tanh(x):
    # GELU(approximate='tanh'), matching torch.nn.GELU(approximate='tanh')
    c = math.sqrt(2.0 / math.pi)
    return 0.5 * x * (1.0 + jnp.tanh(c * (x + 0.044715 * x * x * x)))


def _layernorm(x, gamma, beta):
    mu = jnp.mean(x, axis=-1, keepdims=True)
    var = jnp.mean(jnp.square(x - mu), axis=-1, keepdims=True)
    return (x - mu) * lax.rsqrt(var + LN_EPS) * gamma + beta


# ----------------------------- kernel ----------------------------------------
def _make_block_kernel(bb, T, H):
    """bb = batch elements handled per grid step (static Python int)."""

    def kernel(x_ref,
               ln1_g_ref, ln1_b_ref,
               w_qkv_ref, b_qkv_ref,
               w_attn_proj_ref, b_attn_proj_ref,
               ln2_g_ref, ln2_b_ref,
               w_fc_ref, b_fc_ref,
               w_mlp_proj_ref, b_mlp_proj_ref,
               out_ref, att_ref):
        S, C = x_ref.shape                     # S = bb * T
        D = C // H
        PAD = att_ref.shape[3]

        x = x_ref[...]                                               # (S, C) f32

        # ---- ln_1 + fused QKV projection (bf16 MXU, f32 accumulate) ----
        h = _layernorm(x, ln1_g_ref[...], ln1_b_ref[...])            # (S, C)
        qkv = jnp.dot(h.astype(jnp.bfloat16), w_qkv_ref[...],
                      preferred_element_type=jnp.float32) + b_qkv_ref[...]  # (S, 3C)

        scale = 1.0 / math.sqrt(D)
        # Causal mask on the lane-padded key axis; key columns >= T are masked
        # automatically because col <= row <= T-1.  Mask is applied BEFORE the
        # row max so valid exponentials never underflow early.
        row = lax.broadcasted_iota(jnp.int32, (T, PAD), 0)
        col = lax.broadcasted_iota(jnp.int32, (T, PAD), 1)
        valid = col <= row                                           # (T, PAD) bool
        zpad = jnp.zeros((PAD - T, 2 * C), jnp.float32)              # hoisted

        ctx_rows = []
        for b in range(bb):                                          # static unroll
            r0 = b * T
            q_b = qkv[r0:r0 + T, :C]                                 # lane-aligned slice
            # pad K and V for ALL heads with one sublane concat (lane-aligned
            # slice of the [C:3C] third of qkv).
            kv_pad = jnp.concatenate([qkv[r0:r0 + T, C:3 * C], zpad], axis=0)  # (PAD, 2C)
            k_all = kv_pad[:, :C]                                    # (PAD, C) f32
            v_all = kv_pad[:, C:].astype(jnp.bfloat16)               # (PAD, C) bf16, cast once

            ctx_heads = []
            for hh in range(H):                                      # static unroll
                q_h = q_b[:, hh * D:(hh + 1) * D]                    # (T, D)
                k_h = k_all[:, hh * D:(hh + 1) * D]                  # (PAD, D)
                # Q.K^T stays f32 to protect the attention tolerance.
                s = lax.dot_general(q_h, k_h, (((1,), (1,)), ((), ())),
                                    preferred_element_type=jnp.float32) * scale  # (T, PAD)
                s = jnp.where(valid, s, -1e30)                       # finite mask, pre-max
                m = jnp.max(s, axis=-1, keepdims=True)
                e = jnp.where(valid, jnp.exp(s - m), 0.0)
                denom = jnp.sum(e, axis=-1, keepdims=True)
                p = e * pl.reciprocal(denom, approx=True)            # EUP vrcp
                att_ref[b, hh] = p                                   # dense 128-lane store

                # p.V in bf16 (f32 accumulation); context kept per head.
                ctx_heads.append(
                    jnp.dot(p.astype(jnp.bfloat16),
                            v_all[:, hh * D:(hh + 1) * D],
                            preferred_element_type=jnp.float32))     # (T, D)
            ctx_rows.append(jnp.concatenate(ctx_heads, axis=-1))     # (T, C)

        # Single full-K attention output projection over the whole slab.
        ctx = ctx_rows[0] if bb == 1 else jnp.concatenate(ctx_rows, axis=0)  # (S, C)
        y = jnp.dot(ctx.astype(jnp.bfloat16), w_attn_proj_ref[...],
                    preferred_element_type=jnp.float32) + b_attn_proj_ref[...]
        x1 = x + y                                                   # residual 1

        # ---- ln_2 + MLP ----
        h2 = _layernorm(x1, ln2_g_ref[...], ln2_b_ref[...])
        fc = jnp.dot(h2.astype(jnp.bfloat16), w_fc_ref[...],
                     preferred_element_type=jnp.float32) + b_fc_ref[...]     # (S, 4C)
        fc = _gelu_tanh(fc)
        mlp = jnp.dot(fc.astype(jnp.bfloat16), w_mlp_proj_ref[...],
                      preferred_element_type=jnp.float32) + b_mlp_proj_ref[...]

        out_ref[...] = x1 + mlp                                      # residual 2

    return kernel


# ----------------------------- wrapper ---------------------------------------
def _full_spec(shape):
    """BlockSpec for a weight loaded whole (constant index_map -> no per-step
    re-fetch across grid iterations)."""
    nd = len(shape)
    return pl.BlockSpec(shape, lambda i, _nd=nd: (0,) * _nd)


def _default_batch_block(B):
    """Batch elements per grid step: 1 on multi-TensorCore v7x (so the
    "parallel" grid axis spreads across cores), whole batch otherwise."""
    try:
        kind = jax.devices()[0].device_kind.lower()
    except Exception:
        kind = ""
    bb = 1 if "v7" in kind else B
    if bb <= 0 or B % bb != 0:
        bb = 1
    return bb


@partial(jax.jit, static_argnames=("bb",))
def _block_forward_impl(x, params, bb):
    B, T, C = x.shape
    H = N_HEAD

    weight_args = (
        params['ln1_g'], params['ln1_b'],
        params['w_qkv'], params['b_qkv'],
        params['w_attn_proj'], params['b_attn_proj'],
        params['ln2_g'], params['ln2_b'],
        params['w_fc'], params['b_fc'],
        params['w_mlp_proj'], params['b_mlp_proj'],
    )

    x2d = x.reshape(B * T, C)                      # free (metadata-only) reshape
    grid = (B // bb,)

    in_specs = [pl.BlockSpec((bb * T, C), lambda i: (i, 0))]
    in_specs += [_full_spec(w.shape) for w in weight_args]

    out_specs = [
        pl.BlockSpec((bb * T, C), lambda i: (i, 0)),
        pl.BlockSpec((bb, H, T, ATT_PAD), lambda i: (i, 0, 0, 0)),
    ]
    out_shape = [
        jax.ShapeDtypeStruct((B * T, C), jnp.float32),
        jax.ShapeDtypeStruct((B, H, T, ATT_PAD), jnp.float32),
    ]

    out2d, att_pad = pl.pallas_call(
        _make_block_kernel(bb, T, H),
        out_shape=out_shape,
        grid_spec=pltpu.PrefetchScalarGridSpec(
            num_scalar_prefetch=0,
            grid=grid,
            in_specs=in_specs,
            out_specs=out_specs,
        ),
        compiler_params=pltpu.CompilerParams(
            dimension_semantics=("parallel",)),
    )(x2d, *weight_args)

    # Lane-padded attention tensor is returned as-is (no extra HBM slicing
    # pass); columns >= T are exact zeros.
    return out2d.reshape(B, T, C), att_pad


def block_forward(x, params, bb=None):
    if bb is None:
        bb = _default_batch_block(x.shape[0])
    return _block_forward_impl(x, params, bb)


# ----------------------------- params ----------------------------------------
def make_params(key):
    """Deterministic synthetic parameters; LoRA adapters folded into weights."""
    ks = jax.random.split(key, 20)
    C, R = N_EMBD, LORA_R

    def lora_linear(k_w, k_b, k_a, k_bb, n_in, n_out):
        # PyTorch lora.Linear stores weight as (out, in); fold the adapter and
        # return the effective weight transposed to (in, out), cast bf16.
        w = jax.random.normal(k_w, (n_out, n_in), jnp.float32) * 0.02
        b = jax.random.normal(k_b, (n_out,), jnp.float32) * 0.02
        a = jax.random.normal(k_a, (R, n_in), jnp.float32) * 0.02
        bb_ = jax.random.normal(k_bb, (n_out, R), jnp.float32) * 0.02
        w_eff = (w + LORA_SCALE * (bb_ @ a)).T                       # (in, out) f32
        return w_eff.astype(jnp.bfloat16), b.reshape(1, n_out)       # bf16 weight, f32 bias

    w_qkv, b_qkv = lora_linear(ks[0], ks[1], ks[2], ks[3], C, 3 * C)
    w_ap, b_ap = lora_linear(ks[4], ks[5], ks[6], ks[7], C, C)
    w_fc, b_fc = lora_linear(ks[8], ks[9], ks[10], ks[11], C, 4 * C)
    w_mp, b_mp = lora_linear(ks[12], ks[13], ks[14], ks[15], 4 * C, C)

    return {
        'ln1_g': jnp.ones((1, C), jnp.float32),
        'ln1_b': jnp.zeros((1, C), jnp.float32),
        'w_qkv': w_qkv, 'b_qkv': b_qkv,
        'w_attn_proj': w_ap, 'b_attn_proj': b_ap,
        'ln2_g': jnp.ones((1, C), jnp.float32),
        'ln2_b': jnp.zeros((1, C), jnp.float32),
        'w_fc': w_fc, 'b_fc': b_fc,
        'w_mlp_proj': w_mp, 'b_mlp_proj': b_mp,
    }


# ----------------------------- reference (pure JAX, f32) ----------------------
def block_reference(x, p):
    def ln(v, g, b):
        mu = jnp.mean(v, -1, keepdims=True)
        var = jnp.mean((v - mu) ** 2, -1, keepdims=True)
        return (v - mu) / jnp.sqrt(var + LN_EPS) * g + b

    f32 = jnp.float32
    w_qkv = p['w_qkv'].astype(f32)
    w_ap = p['w_attn_proj'].astype(f32)
    w_fc = p['w_fc'].astype(f32)
    w_mp = p['w_mlp_proj'].astype(f32)

    B, T, C = x.shape
    H, D = N_HEAD, HEAD_DIM
    with jax.default_matmul_precision("highest"):
        h = ln(x, p['ln1_g'][0], p['ln1_b'][0])
        qkv = h @ w_qkv + p['b_qkv'][0]
        q, k, v = jnp.split(qkv, 3, axis=-1)
        q = q.reshape(B, T, H, D).transpose(0, 2, 1, 3)
        k = k.reshape(B, T, H, D).transpose(0, 2, 1, 3)
        v = v.reshape(B, T, H, D).transpose(0, 2, 1, 3)
        att = (q @ k.transpose(0, 1, 3, 2)) / math.sqrt(D)
        mask = jnp.tril(jnp.ones((T, T), bool))
        att = jnp.where(mask, att, -jnp.inf)
        att = jax.nn.softmax(att, axis=-1)
        y = (att @ v).transpose(0, 2, 1, 3).reshape(B, T, C)
        y = y @ w_ap + p['b_attn_proj'][0]
        x1 = x + y
        h2 = ln(x1, p['ln2_g'][0], p['ln2_b'][0])
        fc = h2 @ w_fc + p['b_fc'][0]
        c = math.sqrt(2.0 / math.pi)
        fc = 0.5 * fc * (1.0 + jnp.tanh(c * (fc + 0.044715 * fc ** 3)))
        mlp = fc @ w_mp + p['b_mlp_proj'][0]
    return x1 + mlp, att


# ----------------------------- main -------------------------------------------
if __name__ == "__main__":
    key = jax.random.PRNGKey(0)
    kx, kp = jax.random.split(key)

    x = jax.random.normal(kx, (BATCH, BLOCK_SIZE, N_EMBD), jnp.float32)
    params = make_params(kp)

    # NOTE: lora_dropout=0.1 is a no-op in eval mode, which is what we model.
    out, att_pad = block_forward(x, params)
    out = jax.block_until_ready(out)
    att_pad = jax.block_until_ready(att_pad)

    ref_out, ref_att = block_reference(x, params)
    # The kernel returns the lane-padded (B,H,T,128) attention tensor; columns
    # >= T are exact zeros.  Slice only here, at check time.
    att = att_pad[:, :, :, :BLOCK_SIZE]

    # Kernel runs the dense matmuls and p.V in bf16 (f32 accumulation);
    # tolerances sized accordingly against the f32 reference.
    assert jnp.allclose(out, ref_out, atol=1e-2, rtol=1e-2), "output mismatch"
    assert jnp.allclose(att, ref_att, atol=2e-3, rtol=0.0), "attention mismatch"

    print("KERNEL_OK")
</pallas_src>

<mosaic_0001>
module attributes {stable_mosaic.version = 11 : i64} {
  func.func @kernel(%arg0: i32, %arg1: memref<32x128xf32, #tpu.memory_space<vmem>>, %arg2: memref<1x128xf32, #tpu.memory_space<vmem>>, %arg3: memref<1x128xf32, #tpu.memory_space<vmem>>, %arg4: memref<128x384xbf16, #tpu.memory_space<vmem>>, %arg5: memref<1x384xf32, #tpu.memory_space<vmem>>, %arg6: memref<128x128xbf16, #tpu.memory_space<vmem>>, %arg7: memref<1x128xf32, #tpu.memory_space<vmem>>, %arg8: memref<1x128xf32, #tpu.memory_space<vmem>>, %arg9: memref<1x128xf32, #tpu.memory_space<vmem>>, %arg10: memref<128x512xbf16, #tpu.memory_space<vmem>>, %arg11: memref<1x512xf32, #tpu.memory_space<vmem>>, %arg12: memref<512x128xbf16, #tpu.memory_space<vmem>>, %arg13: memref<1x128xf32, #tpu.memory_space<vmem>>, %arg14: memref<32x128xf32, #tpu.memory_space<vmem>>, %arg15: memref<2x4x16x128xf32, #tpu.memory_space<vmem>>) attributes {dimension_semantics = [#tpu.dimension_semantics<parallel>], iteration_bounds = array<i64: 1>, scalar_prefetch = 0 : i64, scratch_operands = 0 : i64, tpu.core_type = #tpu.core_type<tc>, window_params = [{transform_indices = @transform_0, window_bounds = array<i64: 32, 128>}, {pipeline_mode = #tpu.pipeline_mode<synchronous>, transform_indices = @transform_1, window_bounds = array<i64: 1, 128>}, {pipeline_mode = #tpu.pipeline_mode<synchronous>, transform_indices = @transform_2, window_bounds = array<i64: 1, 128>}, {pipeline_mode = #tpu.pipeline_mode<synchronous>, transform_indices = @transform_3, window_bounds = array<i64: 128, 384>}, {pipeline_mode = #tpu.pipeline_mode<synchronous>, transform_indices = @transform_4, window_bounds = array<i64: 1, 384>}, {pipeline_mode = #tpu.pipeline_mode<synchronous>, transform_indices = @transform_5, window_bounds = array<i64: 128, 128>}, {pipeline_mode = #tpu.pipeline_mode<synchronous>, transform_indices = @transform_6, window_bounds = array<i64: 1, 128>}, {pipeline_mode = #tpu.pipeline_mode<synchronous>, transform_indices = @transform_7, window_bounds = array<i64: 1, 128>}, {pipeline_mode = #tpu.pipeline_mode<synchronous>, transform_indices = @transform_8, window_bounds = array<i64: 1, 128>}, {pipeline_mode = #tpu.pipeline_mode<synchronous>, transform_indices = @transform_9, window_bounds = array<i64: 128, 512>}, {pipeline_mode = #tpu.pipeline_mode<synchronous>, transform_indices = @transform_10, window_bounds = array<i64: 1, 512>}, {pipeline_mode = #tpu.pipeline_mode<synchronous>, transform_indices = @transform_11, window_bounds = array<i64: 512, 128>}, {pipeline_mode = #tpu.pipeline_mode<synchronous>, transform_indices = @transform_12, window_bounds = array<i64: 1, 128>}, {transform_indices = @transform_13, window_bounds = array<i64: 32, 128>}, {transform_indices = @transform_14, window_bounds = array<i64: 2, 4, 16, 128>}]} {
    %c0 = arith.constant 0 : index
    %c0_0 = arith.constant 0 : index
    %0 = vector.load %arg1[%c0, %c0_0] : memref<32x128xf32, #tpu.memory_space<vmem>>, vector<32x128xf32>
    %c0_1 = arith.constant 0 : index
    %c0_2 = arith.constant 0 : index
    %1 = vector.load %arg2[%c0_1, %c0_2] : memref<1x128xf32, #tpu.memory_space<vmem>>, vector<1x128xf32>
    %c0_3 = arith.constant 0 : index
    %c0_4 = arith.constant 0 : index
    %2 = vector.load %arg3[%c0_3, %c0_4] : memref<1x128xf32, #tpu.memory_space<vmem>>, vector<1x128xf32>
    %cst = arith.constant dense<0.000000e+00> : vector<32xf32>
    %3 = vector.multi_reduction <add>, %0, %cst [1] : vector<32x128xf32> to vector<32xf32>
    %4 = vector.shape_cast %3 : vector<32xf32> to vector<32x1xf32>
    %cst_5 = arith.constant 1.280000e+02 : f32
    %5 = vector.broadcast %cst_5 : f32 to vector<32x1xf32>
    %6 = arith.divf %4, %5 : vector<32x1xf32>
    %7 = vector.broadcast %6 : vector<32x1xf32> to vector<32x128xf32>
    %8 = arith.subf %0, %7 : vector<32x128xf32>
    %9 = arith.mulf %8, %8 : vector<32x128xf32>
    %cst_6 = arith.constant dense<0.000000e+00> : vector<32xf32>
    %10 = vector.multi_reduction <add>, %9, %cst_6 [1] : vector<32x128xf32> to vector<32xf32>
    %11 = vector.shape_cast %10 : vector<32xf32> to vector<32x1xf32>
    %cst_7 = arith.constant 1.280000e+02 : f32
    %12 = vector.broadcast %cst_7 : f32 to vector<32x1xf32>
    %13 = arith.divf %11, %12 : vector<32x1xf32>
    %14 = vector.broadcast %6 : vector<32x1xf32> to vector<32x128xf32>
    %15 = arith.subf %0, %14 : vector<32x128xf32>
    %cst_8 = arith.constant 9.99999974E-6 : f32
    %16 = vector.broadcast %cst_8 : f32 to vector<32x1xf32>
    %17 = arith.addf %13, %16 : vector<32x1xf32>
    %18 = math.rsqrt %17 : vector<32x1xf32>
    %19 = vector.broadcast %18 : vector<32x1xf32> to vector<32x128xf32>
    %20 = arith.mulf %15, %19 : vector<32x128xf32>
    %21 = vector.broadcast %1 : vector<1x128xf32> to vector<32x128xf32>
    %22 = arith.mulf %20, %21 : vector<32x128xf32>
    %23 = vector.broadcast %2 : vector<1x128xf32> to vector<32x128xf32>
    %24 = arith.addf %22, %23 : vector<32x128xf32>
    %25 = arith.truncf %24 : vector<32x128xf32> to vector<32x128xbf16>
    %c0_9 = arith.constant 0 : index
    %c0_10 = arith.constant 0 : index
    %26 = vector.load %arg4[%c0_9, %c0_10] : memref<128x384xbf16, #tpu.memory_space<vmem>>, vector<128x384xbf16>
    %cst_11 = arith.constant dense<0.000000e+00> : vector<32x384xf32>
    %27 = tpu.matmul %25, %26, %cst_11 {dimension_numbers = #tpu.dot_dimension_numbers<[1], [0], [0], [1], [0, 0, 1, 1], [], []>} : vector<32x128xbf16>, vector<128x384xbf16>, vector<32x384xf32> -> vector<32x384xf32>
    %c0_12 = arith.constant 0 : index
    %c0_13 = arith.constant 0 : index
    %28 = vector.load %arg5[%c0_12, %c0_13] : memref<1x384xf32, #tpu.memory_space<vmem>>, vector<1x384xf32>
    %29 = vector.broadcast %28 : vector<1x384xf32> to vector<32x384xf32>
    %30 = arith.addf %27, %29 : vector<32x384xf32>
    %31 = tpu.iota {dimensions = array<i32: 0>} : vector<16x128xi32>
    %32 = tpu.iota {dimensions = array<i32: 1>} : vector<16x128xi32>
    %33 = arith.cmpi sle, %32, %31 : vector<16x128xi32>
    %cst_14 = arith.constant 0.000000e+00 : f32
    %34 = vector.broadcast %cst_14 : f32 to vector<112x256xf32>
    %35 = vector.extract_strided_slice %30 {offsets = [0, 0], sizes = [16, 128], strides = [1, 1]} : vector<32x384xf32> to vector<16x128xf32>
    %36 = vector.extract_strided_slice %30 {offsets = [0, 128], sizes = [16, 256], strides = [1, 1]} : vector<32x384xf32> to vector<16x256xf32>
    %37 = tpu.concatenate %36, %34 in 0 : vector<16x256xf32>, vector<112x256xf32> -> vector<128x256xf32>
    %38 = vector.extract_strided_slice %37 {offsets = [0, 0], sizes = [128, 128], strides = [1, 1]} : vector<128x256xf32> to vector<128x128xf32>
    %39 = vector.extract_strided_slice %37 {offsets = [0, 128], sizes = [128, 128], strides = [1, 1]} : vector<128x256xf32> to vector<128x128xf32>
    %40 = arith.truncf %39 : vector<128x128xf32> to vector<128x128xbf16>
    %41 = vector.extract_strided_slice %35 {offsets = [0, 0], sizes = [16, 32], strides = [1, 1]} : vector<16x128xf32> to vector<16x32xf32>
    %42 = vector.extract_strided_slice %38 {offsets = [0, 0], sizes = [128, 32], strides = [1, 1]} : vector<128x128xf32> to vector<128x32xf32>
    %cst_15 = arith.constant dense<0.000000e+00> : vector<16x128xf32>
    %43 = tpu.matmul %41, %42, %cst_15 {dimension_numbers = #tpu.dot_dimension_numbers<[1], [1], [0], [0], [0, 0, 1, 0], [], []>} : vector<16x32xf32>, vector<128x32xf32>, vector<16x128xf32> -> vector<16x128xf32>
    %cst_16 = arith.constant 0.176776692 : f32
    %44 = vector.broadcast %cst_16 : f32 to vector<16x128xf32>
    %45 = arith.mulf %43, %44 : vector<16x128xf32>
    %cst_17 = arith.constant -1.000000e+30 : f32
    %46 = vector.broadcast %cst_17 : f32 to vector<16x128xf32>
    %47 = arith.select %33, %45, %46 : vector<16x128xi1>, vector<16x128xf32>
    %cst_18 = arith.constant dense<0xFF800000> : vector<16xf32>
    %48 = vector.multi_reduction <maximumf>, %47, %cst_18 [1] : vector<16x128xf32> to vector<16xf32>
    %49 = vector.shape_cast %48 : vector<16xf32> to vector<16x1xf32>
    %50 = vector.broadcast %49 : vector<16x1xf32> to vector<16x128xf32>
    %51 = arith.subf %47, %50 : vector<16x128xf32>
    %52 = math.exp %51 : vector<16x128xf32>
    %cst_19 = arith.constant 0.000000e+00 : f32
    %53 = vector.broadcast %cst_19 : f32 to vector<16x128xf32>
    %54 = arith.select %33, %52, %53 : vector<16x128xi1>, vector<16x128xf32>
    %cst_20 = arith.constant dense<0.000000e+00> : vector<16xf32>
    %55 = vector.multi_reduction <add>, %54, %cst_20 [1] : vector<16x128xf32> to vector<16xf32>
    %56 = vector.shape_cast %55 : vector<16xf32> to vector<16x1xf32>
    %57 = tpu.reciprocal %56 {approx = true} : vector<16x1xf32> -> vector<16x1xf32>
    %58 = vector.broadcast %57 : vector<16x1xf32> to vector<16x128xf32>
    %59 = arith.mulf %54, %58 : vector<16x128xf32>
    %c0_21 = arith.constant 0 : index
    %c0_22 = arith.constant 0 : index
    %c0_23 = arith.constant 0 : index
    %c0_24 = arith.constant 0 : index
    %60 = vector.load %arg15[%c0_21, %c0_22, %c0_23, %c0_24] : memref<2x4x16x128xf32, #tpu.memory_space<vmem>>, vector<1x1x16x128xf32>
    %61 = vector.shape_cast %60 : vector<1x1x16x128xf32> to vector<16x128xf32>
    %62 = vector.shape_cast %59 : vector<16x128xf32> to vector<1x1x16x128xf32>
    tpu.vector_store %arg15[%c0_21, %c0_22, %c0_23, %c0_24], %62 {strides = array<i32>} : memref<2x4x16x128xf32, #tpu.memory_space<vmem>>, vector<1x1x16x128xf32>,
    %63 = arith.truncf %59 : vector<16x128xf32> to vector<16x128xbf16>
    %64 = vector.extract_strided_slice %40 {offsets = [0, 0], sizes = [128, 32], strides = [1, 1]} : vector<128x128xbf16> to vector<128x32xbf16>
    %cst_25 = arith.constant dense<0.000000e+00> : vector<16x32xf32>
    %65 = tpu.matmul %63, %64, %cst_25 {dimension_numbers = #tpu.dot_dimension_numbers<[1], [0], [0], [1], [0, 0, 1, 1], [], []>} : vector<16x128xbf16>, vector<128x32xbf16>, vector<16x32xf32> -> vector<16x32xf32>
    %66 = vector.extract_strided_slice %35 {offsets = [0, 32], sizes = [16, 32], strides = [1, 1]} : vector<16x128xf32> to vector<16x32xf32>
    %67 = vector.extract_strided_slice %38 {offsets = [0, 32], sizes = [128, 32], strides = [1, 1]} : vector<128x128xf32> to vector<128x32xf32>
    %cst_26 = arith.constant dense<0.000000e+00> : vector<16x128xf32>
    %68 = tpu.matmul %66, %67, %cst_26 {dimension_numbers = #tpu.dot_dimension_numbers<[1], [1], [0], [0], [0, 0, 1, 0], [], []>} : vector<16x32xf32>, vector<128x32xf32>, vector<16x128xf32> -> vector<16x128xf32>
    %cst_27 = arith.constant 0.176776692 : f32
    %69 = vector.broadcast %cst_27 : f32 to vector<16x128xf32>
    %70 = arith.mulf %68, %69 : vector<16x128xf32>
    %cst_28 = arith.constant -1.000000e+30 : f32
    %71 = vector.broadcast %cst_28 : f32 to vector<16x128xf32>
    %72 = arith.select %33, %70, %71 : vector<16x128xi1>, vector<16x128xf32>
    %cst_29 = arith.constant dense<0xFF800000> : vector<16xf32>
    %73 = vector.multi_reduction <maximumf>, %72, %cst_29 [1] : vector<16x128xf32> to vector<16xf32>
    %74 = vector.shape_cast %73 : vector<16xf32> to vector<16x1xf32>
    %75 = vector.broadcast %74 : vector<16x1xf32> to vector<16x128xf32>
    %76 = arith.subf %72, %75 : vector<16x128xf32>
    %77 = math.exp %76 : vector<16x128xf32>
    %cst_30 = arith.constant 0.000000e+00 : f32
    %78 = vector.broadcast %cst_30 : f32 to vector<16x128xf32>
    %79 = arith.select %33, %77, %78 : vector<16x128xi1>, vector<16x128xf32>
    %cst_31 = arith.constant dense<0.000000e+00> : vector<16xf32>
    %80 = vector.multi_reduction <add>, %79, %cst_31 [1] : vector<16x128xf32> to vector<16xf32>
    %81 = vector.shape_cast %80 : vector<16xf32> to vector<16x1xf32>
    %82 = tpu.reciprocal %81 {approx = true} : vector<16x1xf32> -> vector<16x1xf32>
    %83 = vector.broadcast %82 : vector<16x1xf32> to vector<16x128xf32>
    %84 = arith.mulf %79, %83 : vector<16x128xf32>
    %c0_32 = arith.constant 0 : index
    %c1 = arith.constant 1 : index
    %c0_33 = arith.constant 0 : index
    %c0_34 = arith.constant 0 : index
    %85 = vector.load %arg15[%c0_32, %c1, %c0_33, %c0_34] : memref<2x4x16x128xf32, #tpu.memory_space<vmem>>, vector<1x1x16x128xf32>
    %86 = vector.shape_cast %85 : vector<1x1x16x128xf32> to vector<16x128xf32>
    %87 = vector.shape_cast %84 : vector<16x128xf32> to vector<1x1x16x128xf32>
    tpu.vector_store %arg15[%c0_32, %c1, %c0_33, %c0_34], %87 {strides = array<i32>} : memref<2x4x16x128xf32, #tpu.memory_space<vmem>>, vector<1x1x16x128xf32>,
    %88 = arith.truncf %84 : vector<16x128xf32> to vector<16x128xbf16>
    %89 = vector.extract_strided_slice %40 {offsets = [0, 32], sizes = [128, 32], strides = [1, 1]} : vector<128x128xbf16> to vector<128x32xbf16>
    %cst_35 = arith.constant dense<0.000000e+00> : vector<16x32xf32>
    %90 = tpu.matmul %88, %89, %cst_35 {dimension_numbers = #tpu.dot_dimension_numbers<[1], [0], [0], [1], [0, 0, 1, 1], [], []>} : vector<16x128xbf16>, vector<128x32xbf16>, vector<16x32xf32> -> vector<16x32xf32>
    %91 = vector.extract_strided_slice %35 {offsets = [0, 64], sizes = [16, 32], strides = [1, 1]} : vector<16x128xf32> to vector<16x32xf32>
    %92 = vector.extract_strided_slice %38 {offsets = [0, 64], sizes = [128, 32], strides = [1, 1]} : vector<128x128xf32> to vector<128x32xf32>
    %cst_36 = arith.constant dense<0.000000e+00> : vector<16x128xf32>
    %93 = tpu.matmul %91, %92, %cst_36 {dimension_numbers = #tpu.dot_dimension_numbers<[1], [1], [0], [0], [0, 0, 1, 0], [], []>} : vector<16x32xf32>, vector<128x32xf32>, vector<16x128xf32> -> vector<16x128xf32>
    %cst_37 = arith.constant 0.176776692 : f32
    %94 = vector.broadcast %cst_37 : f32 to vector<16x128xf32>
    %95 = arith.mulf %93, %94 : vector<16x128xf32>
    %cst_38 = arith.constant -1.000000e+30 : f32
    %96 = vector.broadcast %cst_38 : f32 to vector<16x128xf32>
    %97 = arith.select %33, %95, %96 : vector<16x128xi1>, vector<16x128xf32>
    %cst_39 = arith.constant dense<0xFF800000> : vector<16xf32>
    %98 = vector.multi_reduction <maximumf>, %97, %cst_39 [1] : vector<16x128xf32> to vector<16xf32>
    %99 = vector.shape_cast %98 : vector<16xf32> to vector<16x1xf32>
    %100 = vector.broadcast %99 : vector<16x1xf32> to vector<16x128xf32>
    %101 = arith.subf %97, %100 : vector<16x128xf32>
    %102 = math.exp %101 : vector<16x128xf32>
    %cst_40 = arith.constant 0.000000e+00 : f32
    %103 = vector.broadcast %cst_40 : f32 to vector<16x128xf32>
    %104 = arith.select %33, %102, %103 : vector<16x128xi1>, vector<16x128xf32>
    %cst_41 = arith.constant dense<0.000000e+00> : vector<16xf32>
    %105 = vector.multi_reduction <add>, %104, %cst_41 [1] : vector<16x128xf32> to vector<16xf32>
    %106 = vector.shape_cast %105 : vector<16xf32> to vector<16x1xf32>
    %107 = tpu.reciprocal %106 {approx = true} : vector<16x1xf32> -> vector<16x1xf32>
    %108 = vector.broadcast %107 : vector<16x1xf32> to vector<16x128xf32>
    %109 = arith.mulf %104, %108 : vector<16x128xf32>
    %c0_42 = arith.constant 0 : index
    %c2 = arith.constant 2 : index
    %c0_43 = arith.constant 0 : index
    %c0_44 = arith.constant 0 : index
    %110 = vector.load %arg15[%c0_42, %c2, %c0_43, %c0_44] : memref<2x4x16x128xf32, #tpu.memory_space<vmem>>, vector<1x1x16x128xf32>
    %111 = vector.shape_cast %110 : vector<1x1x16x128xf32> to vector<16x128xf32>
    %112 = vector.shape_cast %109 : vector<16x128xf32> to vector<1x1x16x128xf32>
    tpu.vector_store %arg15[%c0_42, %c2, %c0_43, %c0_44], %112 {strides = array<i32>} : memref<2x4x16x128xf32, #tpu.memory_space<vmem>>, vector<1x1x16x128xf32>,
    %113 = arith.truncf %109 : vector<16x128xf32> to vector<16x128xbf16>
    %114 = vector.extract_strided_slice %40 {offsets = [0, 64], sizes = [128, 32], strides = [1, 1]} : vector<128x128xbf16> to vector<128x32xbf16>
    %cst_45 = arith.constant dense<0.000000e+00> : vector<16x32xf32>
    %115 = tpu.matmul %113, %114, %cst_45 {dimension_numbers = #tpu.dot_dimension_numbers<[1], [0], [0], [1], [0, 0, 1, 1], [], []>} : vector<16x128xbf16>, vector<128x32xbf16>, vector<16x32xf32> -> vector<16x32xf32>
    %116 = vector.extract_strided_slice %35 {offsets = [0, 96], sizes = [16, 32], strides = [1, 1]} : vector<16x128xf32> to vector<16x32xf32>
    %117 = vector.extract_strided_slice %38 {offsets = [0, 96], sizes = [128, 32], strides = [1, 1]} : vector<128x128xf32> to vector<128x32xf32>
    %cst_46 = arith.constant dense<0.000000e+00> : vector<16x128xf32>
    %118 = tpu.matmul %116, %117, %cst_46 {dimension_numbers = #tpu.dot_dimension_numbers<[1], [1], [0], [0], [0, 0, 1, 0], [], []>} : vector<16x32xf32>, vector<128x32xf32>, vector<16x128xf32> -> vector<16x128xf32>
    %cst_47 = arith.constant 0.176776692 : f32
    %119 = vector.broadcast %cst_47 : f32 to vector<16x128xf32>
    %120 = arith.mulf %118, %119 : vector<16x128xf32>
    %cst_48 = arith.constant -1.000000e+30 : f32
    %121 = vector.broadcast %cst_48 : f32 to vector<16x128xf32>
    %122 = arith.select %33, %120, %121 : vector<16x128xi1>, vector<16x128xf32>
    %cst_49 = arith.constant dense<0xFF800000> : vector<16xf32>
    %123 = vector.multi_reduction <maximumf>, %122, %cst_49 [1] : vector<16x128xf32> to vector<16xf32>
    %124 = vector.shape_cast %123 : vector<16xf32> to vector<16x1xf32>
    %125 = vector.broadcast %124 : vector<16x1xf32> to vector<16x128xf32>
    %126 = arith.subf %122, %125 : vector<16x128xf32>
    %127 = math.exp %126 : vector<16x128xf32>
    %cst_50 = arith.constant 0.000000e+00 : f32
    %128 = vector.broadcast %cst_50 : f32 to vector<16x128xf32>
    %129 = arith.select %33, %127, %128 : vector<16x128xi1>, vector<16x128xf32>
    %cst_51 = arith.constant dense<0.000000e+00> : vector<16xf32>
    %130 = vector.multi_reduction <add>, %129, %cst_51 [1] : vector<16x128xf32> to vector<16xf32>
    %131 = vector.shape_cast %130 : vector<16xf32> to vector<16x1xf32>
    %132 = tpu.reciprocal %131 {approx = true} : vector<16x1xf32> -> vector<16x1xf32>
    %133 = vector.broadcast %132 : vector<16x1xf32> to vector<16x128xf32>
    %134 = arith.mulf %129, %133 : vector<16x128xf32>
    %c0_52 = arith.constant 0 : index
    %c3 = arith.constant 3 : index
    %c0_53 = arith.constant 0 : index
    %c0_54 = arith.constant 0 : index
    %135 = vector.load %arg15[%c0_52, %c3, %c0_53, %c0_54] : memref<2x4x16x128xf32, #tpu.memory_space<vmem>>, vector<1x1x16x128xf32>
    %136 = vector.shape_cast %135 : vector<1x1x16x128xf32> to vector<16x128xf32>
    %137 = vector.shape_cast %134 : vector<16x128xf32> to vector<1x1x16x128xf32>
    tpu.vector_store %arg15[%c0_52, %c3, %c0_53, %c0_54], %137 {strides = array<i32>} : memref<2x4x16x128xf32, #tpu.memory_space<vmem>>, vector<1x1x16x128xf32>,
    %138 = arith.truncf %134 : vector<16x128xf32> to vector<16x128xbf16>
    %139 = vector.extract_strided_slice %40 {offsets = [0, 96], sizes = [128, 32], strides = [1, 1]} : vector<128x128xbf16> to vector<128x32xbf16>
    %cst_55 = arith.constant dense<0.000000e+00> : vector<16x32xf32>
    %140 = tpu.matmul %138, %139, %cst_55 {dimension_numbers = #tpu.dot_dimension_numbers<[1], [0], [0], [1], [0, 0, 1, 1], [], []>} : vector<16x128xbf16>, vector<128x32xbf16>, vector<16x32xf32> -> vector<16x32xf32>
    %141 = tpu.concatenate %65, %90, %115, %140 in 1 : vector<16x32xf32>, vector<16x32xf32>, vector<16x32xf32>, vector<16x32xf32> -> vector<16x128xf32>
    %142 = vector.extract_strided_slice %30 {offsets = [16, 0], sizes = [16, 128], strides = [1, 1]} : vector<32x384xf32> to vector<16x128xf32>
    %143 = vector.extract_strided_slice %30 {offsets = [16, 128], sizes = [16, 256], strides = [1, 1]} : vector<32x384xf32> to vector<16x256xf32>
    %144 = tpu.concatenate %143, %34 in 0 : vector<16x256xf32>, vector<112x256xf32> -> vector<128x256xf32>
    %145 = vector.extract_strided_slice %144 {offsets = [0, 0], sizes = [128, 128], strides = [1, 1]} : vector<128x256xf32> to vector<128x128xf32>
    %146 = vector.extract_strided_slice %144 {offsets = [0, 128], sizes = [128, 128], strides = [1, 1]} : vector<128x256xf32> to vector<128x128xf32>
    %147 = arith.truncf %146 : vector<128x128xf32> to vector<128x128xbf16>
    %148 = vector.extract_strided_slice %142 {offsets = [0, 0], sizes = [16, 32], strides = [1, 1]} : vector<16x128xf32> to vector<16x32xf32>
    %149 = vector.extract_strided_slice %145 {offsets = [0, 0], sizes = [128, 32], strides = [1, 1]} : vector<128x128xf32> to vector<128x32xf32>
    %cst_56 = arith.constant dense<0.000000e+00> : vector<16x128xf32>
    %150 = tpu.matmul %148, %149, %cst_56 {dimension_numbers = #tpu.dot_dimension_numbers<[1], [1], [0], [0], [0, 0, 1, 0], [], []>} : vector<16x32xf32>, vector<128x32xf32>, vector<16x128xf32> -> vector<16x128xf32>
    %cst_57 = arith.constant 0.176776692 : f32
    %151 = vector.broadcast %cst_57 : f32 to vector<16x128xf32>
    %152 = arith.mulf %150, %151 : vector<16x128xf32>
    %cst_58 = arith.constant -1.000000e+30 : f32
    %153 = vector.broadcast %cst_58 : f32 to vector<16x128xf32>
    %154 = arith.select %33, %152, %153 : vector<16x128xi1>, vector<16x128xf32>
    %cst_59 = arith.constant dense<0xFF800000> : vector<16xf32>
    %155 = vector.multi_reduction <maximumf>, %154, %cst_59 [1] : vector<16x128xf32> to vector<16xf32>
    %156 = vector.shape_cast %155 : vector<16xf32> to vector<16x1xf32>
    %157 = vector.broadcast %156 : vector<16x1xf32> to vector<16x128xf32>
    %158 = arith.subf %154, %157 : vector<16x128xf32>
    %159 = math.exp %158 : vector<16x128xf32>
    %cst_60 = arith.constant 0.000000e+00 : f32
    %160 = vector.broadcast %cst_60 : f32 to vector<16x128xf32>
    %161 = arith.select %33, %159, %160 : vector<16x128xi1>, vector<16x128xf32>
    %cst_61 = arith.constant dense<0.000000e+00> : vector<16xf32>
    %162 = vector.multi_reduction <add>, %161, %cst_61 [1] : vector<16x128xf32> to vector<16xf32>
    %163 = vector.shape_cast %162 : vector<16xf32> to vector<16x1xf32>
    %164 = tpu.reciprocal %163 {approx = true} : vector<16x1xf32> -> vector<16x1xf32>
    %165 = vector.broadcast %164 : vector<16x1xf32> to vector<16x128xf32>
    %166 = arith.mulf %161, %165 : vector<16x128xf32>
    %c1_62 = arith.constant 1 : index
    %c0_63 = arith.constant 0 : index
    %c0_64 = arith.constant 0 : index
    %c0_65 = arith.constant 0 : index
    %167 = vector.load %arg15[%c1_62, %c0_63, %c0_64, %c0_65] : memref<2x4x16x128xf32, #tpu.memory_space<vmem>>, vector<1x1x16x128xf32>
    %168 = vector.shape_cast %167 : vector<1x1x16x128xf32> to vector<16x128xf32>
    %169 = vector.shape_cast %166 : vector<16x128xf32> to vector<1x1x16x128xf32>
    tpu.vector_store %arg15[%c1_62, %c0_63, %c0_64, %c0_65], %169 {strides = array<i32>} : memref<2x4x16x128xf32, #tpu.memory_space<vmem>>, vector<1x1x16x128xf32>,
    %170 = arith.truncf %166 : vector<16x128xf32> to vector<16x128xbf16>
    %171 = vector.extract_strided_slice %147 {offsets = [0, 0], sizes = [128, 32], strides = [1, 1]} : vector<128x128xbf16> to vector<128x32xbf16>
    %cst_66 = arith.constant dense<0.000000e+00> : vector<16x32xf32>
    %172 = tpu.matmul %170, %171, %cst_66 {dimension_numbers = #tpu.dot_dimension_numbers<[1], [0], [0], [1], [0, 0, 1, 1], [], []>} : vector<16x128xbf16>, vector<128x32xbf16>, vector<16x32xf32> -> vector<16x32xf32>
    %173 = vector.extract_strided_slice %142 {offsets = [0, 32], sizes = [16, 32], strides = [1, 1]} : vector<16x128xf32> to vector<16x32xf32>
    %174 = vector.extract_strided_slice %145 {offsets = [0, 32], sizes = [128, 32], strides = [1, 1]} : vector<128x128xf32> to vector<128x32xf32>
    %cst_67 = arith.constant dense<0.000000e+00> : vector<16x128xf32>
    %175 = tpu.matmul %173, %174, %cst_67 {dimension_numbers = #tpu.dot_dimension_numbers<[1], [1], [0], [0], [0, 0, 1, 0], [], []>} : vector<16x32xf32>, vector<128x32xf32>, vector<16x128xf32> -> vector<16x128xf32>
    %cst_68 = arith.constant 0.176776692 : f32
    %176 = vector.broadcast %cst_68 : f32 to vector<16x128xf32>
    %177 = arith.mulf %175, %176 : vector<16x128xf32>
    %cst_69 = arith.constant -1.000000e+30 : f32
    %178 = vector.broadcast %cst_69 : f32 to vector<16x128xf32>
    %179 = arith.select %33, %177, %178 : vector<16x128xi1>, vector<16x128xf32>
    %cst_70 = arith.constant dense<0xFF800000> : vector<16xf32>
    %180 = vector.multi_reduction <maximumf>, %179, %cst_70 [1] : vector<16x128xf32> to vector<16xf32>
    %181 = vector.shape_cast %180 : vector<16xf32> to vector<16x1xf32>
    %182 = vector.broadcast %181 : vector<16x1xf32> to vector<16x128xf32>
    %183 = arith.subf %179, %182 : vector<16x128xf32>
    %184 = math.exp %183 : vector<16x128xf32>
    %cst_71 = arith.constant 0.000000e+00 : f32
    %185 = vector.broadcast %cst_71 : f32 to vector<16x128xf32>
    %186 = arith.select %33, %184, %185 : vector<16x128xi1>, vector<16x128xf32>
    %cst_72 = arith.constant dense<0.000000e+00> : vector<16xf32>
    %187 = vector.multi_reduction <add>, %186, %cst_72 [1] : vector<16x128xf32> to vector<16xf32>
    %188 = vector.shape_cast %187 : vector<16xf32> to vector<16x1xf32>
    %189 = tpu.reciprocal %188 {approx = true} : vector<16x1xf32> -> vector<16x1xf32>
    %190 = vector.broadcast %189 : vector<16x1xf32> to vector<16x128xf32>
    %191 = arith.mulf %186, %190 : vector<16x128xf32>
    %c1_73 = arith.constant 1 : index
    %c1_74 = arith.constant 1 : index
    %c0_75 = arith.constant 0 : index
    %c0_76 = arith.constant 0 : index
    %192 = vector.load %arg15[%c1_73, %c1_74, %c0_75, %c0_76] : memref<2x4x16x128xf32, #tpu.memory_space<vmem>>, vector<1x1x16x128xf32>
    %193 = vector.shape_cast %192 : vector<1x1x16x128xf32> to vector<16x128xf32>
    %194 = vector.shape_cast %191 : vector<16x128xf32> to vector<1x1x16x128xf32>
    tpu.vector_store %arg15[%c1_73, %c1_74, %c0_75, %c0_76], %194 {strides = array<i32>} : memref<2x4x16x128xf32, #tpu.memory_space<vmem>>, vector<1x1x16x128xf32>,
    %195 = arith.truncf %191 : vector<16x128xf32> to vector<16x128xbf16>
    %196 = vector.extract_strided_slice %147 {offsets = [0, 32], sizes = [128, 32], strides = [1, 1]} : vector<128x128xbf16> to vector<128x32xbf16>
    %cst_77 = arith.constant dense<0.000000e+00> : vector<16x32xf32>
    %197 = tpu.matmul %195, %196, %cst_77 {dimension_numbers = #tpu.dot_dimension_numbers<[1], [0], [0], [1], [0, 0, 1, 1], [], []>} : vector<16x128xbf16>, vector<128x32xbf16>, vector<16x32xf32> -> vector<16x32xf32>
    %198 = vector.extract_strided_slice %142 {offsets = [0, 64], sizes = [16, 32], strides = [1, 1]} : vector<16x128xf32> to vector<16x32xf32>
    %199 = vector.extract_strided_slice %145 {offsets = [0, 64], sizes = [128, 32], strides = [1, 1]} : vector<128x128xf32> to vector<128x32xf32>
    %cst_78 = arith.constant dense<0.000000e+00> : vector<16x128xf32>
    %200 = tpu.matmul %198, %199, %cst_78 {dimension_numbers = #tpu.dot_dimension_numbers<[1], [1], [0], [0], [0, 0, 1, 0], [], []>} : vector<16x32xf32>, vector<128x32xf32>, vector<16x128xf32> -> vector<16x128xf32>
    %cst_79 = arith.constant 0.176776692 : f32
    %201 = vector.broadcast %cst_79 : f32 to vector<16x128xf32>
    %202 = arith.mulf %200, %201 : vector<16x128xf32>
    %cst_80 = arith.constant -1.000000e+30 : f32
    %203 = vector.broadcast %cst_80 : f32 to vector<16x128xf32>
    %204 = arith.select %33, %202, %203 : vector<16x128xi1>, vector<16x128xf32>
    %cst_81 = arith.constant dense<0xFF800000> : vector<16xf32>
    %205 = vector.multi_reduction <maximumf>, %204, %cst_81 [1] : vector<16x128xf32> to vector<16xf32>
    %206 = vector.shape_cast %205 : vector<16xf32> to vector<16x1xf32>
    %207 = vector.broadcast %206 : vector<16x1xf32> to vector<16x128xf32>
    %208 = arith.subf %204, %207 : vector<16x128xf32>
    %209 = math.exp %208 : vector<16x128xf32>
    %cst_82 = arith.constant 0.000000e+00 : f32
    %210 = vector.broadcast %cst_82 : f32 to vector<16x128xf32>
    %211 = arith.select %33, %209, %210 : vector<16x128xi1>, vector<16x128xf32>
    %cst_83 = arith.constant dense<0.000000e+00> : vector<16xf32>
    %212 = vector.multi_reduction <add>, %211, %cst_83 [1] : vector<16x128xf32> to vector<16xf32>
    %213 = vector.shape_cast %212 : vector<16xf32> to vector<16x1xf32>
    %214 = tpu.reciprocal %213 {approx = true} : vector<16x1xf32> -> vector<16x1xf32>
    %215 = vector.broadcast %214 : vector<16x1xf32> to vector<16x128xf32>
    %216 = arith.mulf %211, %215 : vector<16x128xf32>
    %c1_84 = arith.constant 1 : index
    %c2_85 = arith.constant 2 : index
    %c0_86 = arith.constant 0 : index
    %c0_87 = arith.constant 0 : index
    %217 = vector.load %arg15[%c1_84, %c2_85, %c0_86, %c0_87] : memref<2x4x16x128xf32, #tpu.memory_space<vmem>>, vector<1x1x16x128xf32>
    %218 = vector.shape_cast %217 : vector<1x1x16x128xf32> to vector<16x128xf32>
    %219 = vector.shape_cast %216 : vector<16x128xf32> to vector<1x1x16x128xf32>
    tpu.vector_store %arg15[%c1_84, %c2_85, %c0_86, %c0_87], %219 {strides = array<i32>} : memref<2x4x16x128xf32, #tpu.memory_space<vmem>>, vector<1x1x16x128xf32>,
    %220 = arith.truncf %216 : vector<16x128xf32> to vector<16x128xbf16>
    %221 = vector.extract_strided_slice %147 {offsets = [0, 64], sizes = [128, 32], strides = [1, 1]} : vector<128x128xbf16> to vector<128x32xbf16>
    %cst_88 = arith.constant dense<0.000000e+00> : vector<16x32xf32>
    %222 = tpu.matmul %220, %221, %cst_88 {dimension_numbers = #tpu.dot_dimension_numbers<[1], [0], [0], [1], [0, 0, 1, 1], [], []>} : vector<16x128xbf16>, vector<128x32xbf16>, vector<16x32xf32> -> vector<16x32xf32>
    %223 = vector.extract_strided_slice %142 {offsets = [0, 96], sizes = [16, 32], strides = [1, 1]} : vector<16x128xf32> to vector<16x32xf32>
    %224 = vector.extract_strided_slice %145 {offsets = [0, 96], sizes = [128, 32], strides = [1, 1]} : vector<128x128xf32> to vector<128x32xf32>
    %cst_89 = arith.constant dense<0.000000e+00> : vector<16x128xf32>
    %225 = tpu.matmul %223, %224, %cst_89 {dimension_numbers = #tpu.dot_dimension_numbers<[1], [1], [0], [0], [0, 0, 1, 0], [], []>} : vector<16x32xf32>, vector<128x32xf32>, vector<16x128xf32> -> vector<16x128xf32>
    %cst_90 = arith.constant 0.176776692 : f32
    %226 = vector.broadcast %cst_90 : f32 to vector<16x128xf32>
    %227 = arith.mulf %225, %226 : vector<16x128xf32>
    %cst_91 = arith.constant -1.000000e+30 : f32
    %228 = vector.broadcast %cst_91 : f32 to vector<16x128xf32>
    %229 = arith.select %33, %227, %228 : vector<16x128xi1>, vector<16x128xf32>
    %cst_92 = arith.constant dense<0xFF800000> : vector<16xf32>
    %230 = vector.multi_reduction <maximumf>, %229, %cst_92 [1] : vector<16x128xf32> to vector<16xf32>
    %231 = vector.shape_cast %230 : vector<16xf32> to vector<16x1xf32>
    %232 = vector.broadcast %231 : vector<16x1xf32> to vector<16x128xf32>
    %233 = arith.subf %229, %232 : vector<16x128xf32>
    %234 = math.exp %233 : vector<16x128xf32>
    %cst_93 = arith.constant 0.000000e+00 : f32
    %235 = vector.broadcast %cst_93 : f32 to vector<16x128xf32>
    %236 = arith.select %33, %234, %235 : vector<16x128xi1>, vector<16x128xf32>
    %cst_94 = arith.constant dense<0.000000e+00> : vector<16xf32>
    %237 = vector.multi_reduction <add>, %236, %cst_94 [1] : vector<16x128xf32> to vector<16xf32>
    %238 = vector.shape_cast %237 : vector<16xf32> to vector<16x1xf32>
    %239 = tpu.reciprocal %238 {approx = true} : vector<16x1xf32> -> vector<16x1xf32>
    %240 = vector.broadcast %239 : vector<16x1xf32> to vector<16x128xf32>
    %241 = arith.mulf %236, %240 : vector<16x128xf32>
    %c1_95 = arith.constant 1 : index
    %c3_96 = arith.constant 3 : index
    %c0_97 = arith.constant 0 : index
    %c0_98 = arith.constant 0 : index
    %242 = vector.load %arg15[%c1_95, %c3_96, %c0_97, %c0_98] : memref<2x4x16x128xf32, #tpu.memory_space<vmem>>, vector<1x1x16x128xf32>
    %243 = vector.shape_cast %242 : vector<1x1x16x128xf32> to vector<16x128xf32>
    %244 = vector.shape_cast %241 : vector<16x128xf32> to vector<1x1x16x128xf32>
    tpu.vector_store %arg15[%c1_95, %c3_96, %c0_97, %c0_98], %244 {strides = array<i32>} : memref<2x4x16x128xf32, #tpu.memory_space<vmem>>, vector<1x1x16x128xf32>,
    %245 = arith.truncf %241 : vector<16x128xf32> to vector<16x128xbf16>
    %246 = vector.extract_strided_slice %147 {offsets = [0, 96], sizes = [128, 32], strides = [1, 1]} : vector<128x128xbf16> to vector<128x32xbf16>
    %cst_99 = arith.constant dense<0.000000e+00> : vector<16x32xf32>
    %247 = tpu.matmul %245, %246, %cst_99 {dimension_numbers = #tpu.dot_dimension_numbers<[1], [0], [0], [1], [0, 0, 1, 1], [], []>} : vector<16x128xbf16>, vector<128x32xbf16>, vector<16x32xf32> -> vector<16x32xf32>
    %248 = tpu.concatenate %172, %197, %222, %247 in 1 : vector<16x32xf32>, vector<16x32xf32>, vector<16x32xf32>, vector<16x32xf32> -> vector<16x128xf32>
    %249 = tpu.concatenate %141, %248 in 0 : vector<16x128xf32>, vector<16x128xf32> -> vector<32x128xf32>
    %250 = arith.truncf %249 : vector<32x128xf32> to vector<32x128xbf16>
    %c0_100 = arith.constant 0 : index
    %c0_101 = arith.constant 0 : index
    %251 = vector.load %arg6[%c0_100, %c0_101] : memref<128x128xbf16, #tpu.memory_space<vmem>>, vector<128x128xbf16>
    %cst_102 = arith.constant dense<0.000000e+00> : vector<32x128xf32>
    %252 = tpu.matmul %250, %251, %cst_102 {dimension_numbers = #tpu.dot_dimension_numbers<[1], [0], [0], [1], [0, 0, 1, 1], [], []>} : vector<32x128xbf16>, vector<128x128xbf16>, vector<32x128xf32> -> vector<32x128xf32>
    %c0_103 = arith.constant 0 : index
    %c0_104 = arith.constant 0 : index
    %253 = vector.load %arg7[%c0_103, %c0_104] : memref<1x128xf32, #tpu.memory_space<vmem>>, vector<1x128xf32>
    %254 = vector.broadcast %253 : vector<1x128xf32> to vector<32x128xf32>
    %255 = arith.addf %252, %254 : vector<32x128xf32>
    %256 = arith.addf %0, %255 : vector<32x128xf32>
    %c0_105 = arith.constant 0 : index
    %c0_106 = arith.constant 0 : index
    %257 = vector.load %arg8[%c0_105, %c0_106] : memref<1x128xf32, #tpu.memory_space<vmem>>, vector<1x128xf32>
    %c0_107 = arith.constant 0 : index
    %c0_108 = arith.constant 0 : index
    %258 = vector.load %arg9[%c0_107, %c0_108] : memref<1x128xf32, #tpu.memory_space<vmem>>, vector<1x128xf32>
    %cst_109 = arith.constant dense<0.000000e+00> : vector<32xf32>
    %259 = vector.multi_reduction <add>, %256, %cst_109 [1] : vector<32x128xf32> to vector<32xf32>
    %260 = vector.shape_cast %259 : vector<32xf32> to vector<32x1xf32>
    %cst_110 = arith.constant 1.280000e+02 : f32
    %261 = vector.broadcast %cst_110 : f32 to vector<32x1xf32>
    %262 = arith.divf %260, %261 : vector<32x1xf32>
    %263 = vector.broadcast %262 : vector<32x1xf32> to vector<32x128xf32>
    %264 = arith.subf %256, %263 : vector<32x128xf32>
    %265 = arith.mulf %264, %264 : vector<32x128xf32>
    %cst_111 = arith.constant dense<0.000000e+00> : vector<32xf32>
    %266 = vector.multi_reduction <add>, %265, %cst_111 [1] : vector<32x128xf32> to vector<32xf32>
    %267 = vector.shape_cast %266 : vector<32xf32> to vector<32x1xf32>
    %cst_112 = arith.constant 1.280000e+02 : f32
    %268 = vector.broadcast %cst_112 : f32 to vector<32x1xf32>
    %269 = arith.divf %267, %268 : vector<32x1xf32>
    %270 = vector.broadcast %262 : vector<32x1xf32> to vector<32x128xf32>
    %271 = arith.subf %256, %270 : vector<32x128xf32>
    %cst_113 = arith.constant 9.99999974E-6 : f32
    %272 = vector.broadcast %cst_113 : f32 to vector<32x1xf32>
    %273 = arith.addf %269, %272 : vector<32x1xf32>
    %274 = math.rsqrt %273 : vector<32x1xf32>
    %275 = vector.broadcast %274 : vector<32x1xf32> to vector<32x128xf32>
    %276 = arith.mulf %271, %275 : vector<32x128xf32>
    %277 = vector.broadcast %257 : vector<1x128xf32> to vector<32x128xf32>
    %278 = arith.mulf %276, %277 : vector<32x128xf32>
    %279 = vector.broadcast %258 : vector<1x128xf32> to vector<32x128xf32>
    %280 = arith.addf %278, %279 : vector<32x128xf32>
    %281 = arith.truncf %280 : vector<32x128xf32> to vector<32x128xbf16>
    %c0_114 = arith.constant 0 : index
    %c0_115 = arith.constant 0 : index
    %282 = vector.load %arg10[%c0_114, %c0_115] : memref<128x512xbf16, #tpu.memory_space<vmem>>, vector<128x512xbf16>
    %cst_116 = arith.constant dense<0.000000e+00> : vector<32x512xf32>
    %283 = tpu.matmul %281, %282, %cst_116 {dimension_numbers = #tpu.dot_dimension_numbers<[1], [0], [0], [1], [0, 0, 1, 1], [], []>} : vector<32x128xbf16>, vector<128x512xbf16>, vector<32x512xf32> -> vector<32x512xf32>
    %c0_117 = arith.constant 0 : index
    %c0_118 = arith.constant 0 : index
    %284 = vector.load %arg11[%c0_117, %c0_118] : memref<1x512xf32, #tpu.memory_space<vmem>>, vector<1x512xf32>
    %285 = vector.broadcast %284 : vector<1x512xf32> to vector<32x512xf32>
    %286 = arith.addf %283, %285 : vector<32x512xf32>
    %cst_119 = arith.constant 5.000000e-01 : f32
    %287 = vector.broadcast %cst_119 : f32 to vector<32x512xf32>
    %288 = arith.mulf %287, %286 : vector<32x512xf32>
    %cst_120 = arith.constant 4.471500e-02 : f32
    %289 = vector.broadcast %cst_120 : f32 to vector<32x512xf32>
    %290 = arith.mulf %289, %286 : vector<32x512xf32>
    %291 = arith.mulf %290, %286 : vector<32x512xf32>
    %292 = arith.mulf %291, %286 : vector<32x512xf32>
    %293 = arith.addf %286, %292 : vector<32x512xf32>
    %cst_121 = arith.constant 0.797884583 : f32
    %294 = vector.broadcast %cst_121 : f32 to vector<32x512xf32>
    %295 = arith.mulf %294, %293 : vector<32x512xf32>
    %296 = math.tanh %295 : vector<32x512xf32>
    %cst_122 = arith.constant 1.000000e+00 : f32
    %297 = vector.broadcast %cst_122 : f32 to vector<32x512xf32>
    %298 = arith.addf %297, %296 : vector<32x512xf32>
    %299 = arith.mulf %288, %298 : vector<32x512xf32>
    %300 = arith.truncf %299 : vector<32x512xf32> to vector<32x512xbf16>
    %c0_123 = arith.constant 0 : index
    %c0_124 = arith.constant 0 : index
    %301 = vector.load %arg12[%c0_123, %c0_124] : memref<512x128xbf16, #tpu.memory_space<vmem>>, vector<512x128xbf16>
    %cst_125 = arith.constant dense<0.000000e+00> : vector<32x128xf32>
    %302 = tpu.matmul %300, %301, %cst_125 {dimension_numbers = #tpu.dot_dimension_numbers<[1], [0], [0], [1], [0, 0, 1, 1], [], []>} : vector<32x512xbf16>, vector<512x128xbf16>, vector<32x128xf32> -> vector<32x128xf32>
    %c0_126 = arith.constant 0 : index
    %c0_127 = arith.constant 0 : index
    %303 = vector.load %arg13[%c0_126, %c0_127] : memref<1x128xf32, #tpu.memory_space<vmem>>, vector<1x128xf32>
    %304 = vector.broadcast %303 : vector<1x128xf32> to vector<32x128xf32>
    %305 = arith.addf %302, %304 : vector<32x128xf32>
    %306 = arith.addf %256, %305 : vector<32x128xf32>
    %c0_128 = arith.constant 0 : index
    %c0_129 = arith.constant 0 : index
    %307 = vector.load %arg14[%c0_128, %c0_129] : memref<32x128xf32, #tpu.memory_space<vmem>>, vector<32x128xf32>
    tpu.vector_store %arg14[%c0_128, %c0_129], %306 {strides = array<i32>} : memref<32x128xf32, #tpu.memory_space<vmem>>, vector<32x128xf32>,
    return
  }
  func.func @transform_0(%arg0: i32) -> (i32, i32) {
    %c0_i32 = arith.constant 0 : i32
    %c0_i32_0 = arith.constant 0 : i32
    return %arg0, %c0_i32 : i32, i32
  }
  func.func @transform_1(%arg0: i32) -> (i32, i32) {
    %c0_i32 = arith.constant 0 : i32
    %c0_i32_0 = arith.constant 0 : i32
    %c0_i32_1 = arith.constant 0 : i32
    return %c0_i32, %c0_i32_0 : i32, i32
  }
  func.func @transform_2(%arg0: i32) -> (i32, i32) {
    %c0_i32 = arith.constant 0 : i32
    %c0_i32_0 = arith.constant 0 : i32
    %c0_i32_1 = arith.constant 0 : i32
    return %c0_i32, %c0_i32_0 : i32, i32
  }
  func.func @transform_3(%arg0: i32) -> (i32, i32) {
    %c0_i32 = arith.constant 0 : i32
    %c0_i32_0 = arith.constant 0 : i32
    %c0_i32_1 = arith.constant 0 : i32
    return %c0_i32, %c0_i32_0 : i32, i32
  }
  func.func @transform_4(%arg0: i32) -> (i32, i32) {
    %c0_i32 = arith.constant 0 : i32
    %c0_i32_0 = arith.constant 0 : i32
    %c0_i32_1 = arith.constant 0 : i32
    return %c0_i32, %c0_i32_0 : i32, i32
  }
  func.func @transform_5(%arg0: i32) -> (i32, i32) {
    %c0_i32 = arith.constant 0 : i32
    %c0_i32_0 = arith.constant 0 : i32
    %c0_i32_1 = arith.constant 0 : i32
    return %c0_i32, %c0_i32_0 : i32, i32
  }
  func.func @transform_6(%arg0: i32) -> (i32, i32) {
    %c0_i32 = arith.constant 0 : i32
    %c0_i32_0 = arith.constant 0 : i32
    %c0_i32_1 = arith.constant 0 : i32
    return %c0_i32, %c0_i32_0 : i32, i32
  }
  func.func @transform_7(%arg0: i32) -> (i32, i32) {
    %c0_i32 = arith.constant 0 : i32
    %c0_i32_0 = arith.constant 0 : i32
    %c0_i32_1 = arith.constant 0 : i32
    return %c0_i32, %c0_i32_0 : i32, i32
  }
  func.func @transform_8(%arg0: i32) -> (i32, i32) {
    %c0_i32 = arith.constant 0 : i32
    %c0_i32_0 = arith.constant 0 : i32
    %c0_i32_1 = arith.constant 0 : i32
    return %c0_i32, %c0_i32_0 : i32, i32
  }
  func.func @transform_9(%arg0: i32) -> (i32, i32) {
    %c0_i32 = arith.constant 0 : i32
    %c0_i32_0 = arith.constant 0 : i32
    %c0_i32_1 = arith.constant 0 : i32
    return %c0_i32, %c0_i32_0 : i32, i32
  }
  func.func @transform_10(%arg0: i32) -> (i32, i32) {
    %c0_i32 = arith.constant 0 : i32
    %c0_i32_0 = arith.constant 0 : i32
    %c0_i32_1 = arith.constant 0 : i32
    return %c0_i32, %c0_i32_0 : i32, i32
  }
  func.func @transform_11(%arg0: i32) -> (i32, i32) {
    %c0_i32 = arith.constant 0 : i32
    %c0_i32_0 = arith.constant 0 : i32
    %c0_i32_1 = arith.constant 0 : i32
    return %c0_i32, %c0_i32_0 : i32, i32
  }
  func.func @transform_12(%arg0: i32) -> (i32, i32) {
    %c0_i32 = arith.constant 0 : i32
    %c0_i32_0 = arith.constant 0 : i32
    %c0_i32_1 = arith.constant 0 : i32
    return %c0_i32, %c0_i32_0 : i32, i32
  }
  func.func @transform_13(%arg0: i32) -> (i32, i32) {
    %c0_i32 = arith.constant 0 : i32
    %c0_i32_0 = arith.constant 0 : i32
    return %arg0, %c0_i32 : i32, i32
  }
  func.func @transform_14(%arg0: i32) -> (i32, i32, i32, i32) {
    %c0_i32 = arith.constant 0 : i32
    %c0_i32_0 = arith.constant 0 : i32
    %c0_i32_1 = arith.constant 0 : i32
    %c0_i32_2 = arith.constant 0 : i32
    return %arg0, %c0_i32, %c0_i32_0, %c0_i32_1 : i32, i32, i32, i32
  }
}

</mosaic_0001>

<llo_original>
// kernel: _block_forward_impl.1
$region0: #{_block_forward_impl.1}
  #allocation0 [shape = 'u32[]', space=smem, size = 0x4, offset = 0x4, fixed_abs, tag = 'smem constant byte address 0x4 - core index']
  #allocation1 [shape = 'u32[144,128]{1,0:T(1,128)}', space=vmem, size = 0x12000, scoped, tag = 'internal scratch']
  %s0 = inlined_call_operand.hbm [shape: f32[32,128], index: 0, kind: input, shape index: {}]
  %s1 = inlined_call_operand.vmem [shape: f32[1,128], index: 1, kind: input, shape index: {}]
  %s2 = inlined_call_operand.vmem [shape: f32[1,128], index: 2, kind: input, shape index: {}]
  %s3 = inlined_call_operand.hbm [shape: bf16[128,384], index: 3, kind: input, shape index: {}]
  %s4 = inlined_call_operand.vmem [shape: f32[1,384], index: 4, kind: input, shape index: {}]
  %s5 = inlined_call_operand.hbm [shape: bf16[128,128], index: 5, kind: input, shape index: {}]
  %s6 = inlined_call_operand.hbm [shape: f32[1,128], index: 6, kind: input, shape index: {}]
  %s7 = inlined_call_operand.vmem [shape: f32[1,128], index: 7, kind: input, shape index: {}]
  %s8 = inlined_call_operand.vmem [shape: f32[1,128], index: 8, kind: input, shape index: {}]
  %s9 = inlined_call_operand.hbm [shape: bf16[128,512], index: 9, kind: input, shape index: {}]
  %s10 = inlined_call_operand.vmem [shape: f32[1,512], index: 10, kind: input, shape index: {}]
  %s11 = inlined_call_operand.hbm [shape: bf16[512,128], index: 11, kind: input, shape index: {}]
  %s12 = inlined_call_operand.vmem [shape: f32[1,128], index: 12, kind: input, shape index: {}]
  %s13 = inlined_call_operand.hbm [shape: f32[32,128], index: 13, kind: output, shape index: {0}]
  %s14 = inlined_call_operand.hbm [shape: f32[2,4,16,128], index: 14, kind: output, shape index: {1}]
  %15 = xla_tuple %s13, %s14
  %s16 = sld [smem:[#allocation0]]
  $region94: #{_block_forward_impl.1} parent=0
    _
  %s18 = ssub.s32 1, %s16
  %s19 = scalar_select 0, %s18, %s16
  $region1: #{_block_forward_impl.1} parent=0
    #allocation2 [shape = 'u8[16384]{0}', space=vmem, size = 0x4000, scoped, tag = 'input window, operand 0, single buffered']
    #allocation3 [shape = 's32[1]{0}', space=sflag, size = 0x4, scoped, tag = 'scoped memory for _block_forward_impl.1']
    #allocation4 [shape = 's32[1]{0}', space=sflag, size = 0x4, scoped, tag = 'scoped memory for _block_forward_impl.1']
    #allocation5 [shape = 'u8[98304]{0}', space=vmem, size = 0x18000, scoped, tag = 'input window, operand 3, single buffered']
    #allocation6 [shape = 's32[1]{0}', space=sflag, size = 0x4, scoped, tag = 'scoped memory for _block_forward_impl.1']
    #allocation7 [shape = 'u8[32768]{0}', space=vmem, size = 0x8000, scoped, tag = 'input window, operand 5, single buffered']
    #allocation8 [shape = 'u8[512]{0}', space=vmem, size = 0x400, scoped, tag = 'input window, operand 6, single buffered']
    #allocation9 [shape = 's32[1]{0}', space=sflag, size = 0x4, scoped, tag = 'scoped memory for _block_forward_impl.1']
    #allocation10 [shape = 'u8[131072]{0}', space=vmem, size = 0x20000, scoped, tag = 'input window, operand 9, single buffered']
    #allocation11 [shape = 'u8[131072]{0}', space=vmem, size = 0x20000, scoped, tag = 'input window, operand 11, single buffered']
    #allocation12 [shape = 's32[1]{0}', space=sflag, size = 0x4, scoped, tag = 'scoped memory for _block_forward_impl.1']
    #allocation13 [shape = 'u8[16384]{0}', space=vmem, size = 0x4000, scoped, tag = 'output window, operand 0, single buffered']
    #allocation14 [shape = 'u8[65536]{0}', space=vmem, size = 0x10000, scoped, tag = 'output window, operand 1, single buffered']
    #allocation15 [shape = 's32[1]{0}', space=sflag, size = 0x4, scoped, tag = 'scoped memory for _block_forward_impl.1']
    %20 = vsyncpa [#allocation3], 0
    %21 = vsyncpa [#allocation6], 0
    %22 = vsyncpa [#allocation9], 0
    %23 = vsyncpa [#allocation12], 0
    %24 = vsyncpa [#allocation4], 0
    %25 = vsyncpa [#allocation15], 0
    // Predicated region
    $region2: #{_block_forward_impl.1} parent=1 // pred_check
      _
    $region3: #{_block_forward_impl.1} parent=1 // pred_check_branch
      %27 = sbr.rel (0) target = $region5
    $region4: #{_block_forward_impl.1} parent=1 // pred_region
      %s29 = ssub.s32 512, 512
      %30 = vsyncadd [#allocation3], %s29
      %s31 = sshll.u32 [#allocation2], 4
      %s32 = int_to_ptr.vmem [resolvable:$true] %s31
      %37 = dma.hbm_to_vmem [thread:$0]  %s0, 512, %s32, [#allocation3], 128, 128, 8
    $region5: #{_block_forward_impl.1} parent=1 // pred_fallthru
      _
    // Predicated region
    $region6: #{_block_forward_impl.1} parent=1 // pred_check
      _
    $region7: #{_block_forward_impl.1} parent=1 // pred_check_branch
      %39 = sbr.rel (0) target = $region9
    $region8: #{_block_forward_impl.1} parent=1 // pred_region
      _
    $region9: #{_block_forward_impl.1} parent=1 // pred_fallthru
      _
    // Predicated region
    $region10: #{_block_forward_impl.1} parent=1 // pred_check
      _
    $region11: #{_block_forward_impl.1} parent=1 // pred_check_branch
      %41 = sbr.rel (0) target = $region13
    $region12: #{_block_forward_impl.1} parent=1 // pred_region
      _
    $region13: #{_block_forward_impl.1} parent=1 // pred_fallthru
      _
    // Predicated region
    $region14: #{_block_forward_impl.1} parent=1 // pred_check
      _
    $region15: #{_block_forward_impl.1} parent=1 // pred_check_branch
      %43 = sbr.rel (0) target = $region17
    $region16: #{_block_forward_impl.1} parent=1 // pred_region
      %s45 = ssub.s32 3072, 3072
      %46 = vsyncadd [#allocation6], %s45
      %s47 = sshll.u32 [#allocation5], 4
      %s48 = int_to_ptr.vmem [resolvable:$true] %s47
      %53 = dma.hbm_to_vmem [thread:$0]  %s3, 3072, %s48, [#allocation6], 192, 192, 12
    $region17: #{_block_forward_impl.1} parent=1 // pred_fallthru
      _
    // Predicated region
    $region18: #{_block_forward_impl.1} parent=1 // pred_check
      _
    $region19: #{_block_forward_impl.1} parent=1 // pred_check_branch
      %55 = sbr.rel (0) target = $region21
    $region20: #{_block_forward_impl.1} parent=1 // pred_region
      _
    $region21: #{_block_forward_impl.1} parent=1 // pred_fallthru
      _
    // Predicated region
    $region22: #{_block_forward_impl.1} parent=1 // pred_check
      _
    $region23: #{_block_forward_impl.1} parent=1 // pred_check_branch
      %57 = sbr.rel (0) target = $region25
    $region24: #{_block_forward_impl.1} parent=1 // pred_region
      %s59 = ssub.s32 1024, 1024
      %60 = vsyncadd [#allocation6], %s59
      %s61 = sshll.u32 [#allocation7], 4
      %s62 = int_to_ptr.vmem [resolvable:$true] %s61
      %67 = dma.hbm_to_vmem [thread:$0]  %s5, 1024, %s62, [#allocation6], 64, 64, 4
    $region25: #{_block_forward_impl.1} parent=1 // pred_fallthru
      _
    // Predicated region
    $region26: #{_block_forward_impl.1} parent=1 // pred_check
      _
    $region27: #{_block_forward_impl.1} parent=1 // pred_check_branch
      %69 = sbr.rel (0) target = $region29
    $region28: #{_block_forward_impl.1} parent=1 // pred_region
      %s71 = ssub.s32 16, 16
      %72 = vsyncadd [#allocation9], %s71
      %s74 = sshll.u32 [#allocation8], 4
      %s75 = int_to_ptr.vmem [resolvable:$true] %s74
      %77 = dma.hbm_to_vmem [thread:$0]  %s6, 16, %s75, [#allocation9]
    $region29: #{_block_forward_impl.1} parent=1 // pred_fallthru
      _
    // Predicated region
    $region30: #{_block_forward_impl.1} parent=1 // pred_check
      _
    $region31: #{_block_forward_impl.1} parent=1 // pred_check_branch
      %79 = sbr.rel (0) target = $region33
    $region32: #{_block_forward_impl.1} parent=1 // pred_region
      _
    $region33: #{_block_forward_impl.1} parent=1 // pred_fallthru
      _
    // Predicated region
    $region34: #{_block_forward_impl.1} parent=1 // pred_check
      _
    $region35: #{_block_forward_impl.1} parent=1 // pred_check_branch
      %81 = sbr.rel (0) target = $region37
    $region36: #{_block_forward_impl.1} parent=1 // pred_region
      _
    $region37: #{_block_forward_impl.1} parent=1 // pred_fallthru
      _
    // Predicated region
    $region38: #{_block_forward_impl.1} parent=1 // pred_check
      _
    $region39: #{_block_forward_impl.1} parent=1 // pred_check_branch
      %83 = sbr.rel (0) target = $region41
    $region40: #{_block_forward_impl.1} parent=1 // pred_region
      %s85 = ssub.s32 4096, 4096
      %86 = vsyncadd [#allocation9], %s85
      %s87 = sshll.u32 [#allocation10], 4
      %s88 = int_to_ptr.vmem [resolvable:$true] %s87
      %93 = dma.hbm_to_vmem [thread:$0]  %s9, 4096, %s88, [#allocation9], 256, 256, 16
    $region41: #{_block_forward_impl.1} parent=1 // pred_fallthru
      _
    // Predicated region
    $region42: #{_block_forward_impl.1} parent=1 // pred_check
      _
    $region43: #{_block_forward_impl.1} parent=1 // pred_check_branch
      %95 = sbr.rel (0) target = $region45
    $region44: #{_block_forward_impl.1} parent=1 // pred_region
      _
    $region45: #{_block_forward_impl.1} parent=1 // pred_fallthru
      _
    // Predicated region
    $region46: #{_block_forward_impl.1} parent=1 // pred_check
      _
    $region47: #{_block_forward_impl.1} parent=1 // pred_check_branch
      %97 = sbr.rel (0) target = $region49
    $region48: #{_block_forward_impl.1} parent=1 // pred_region
      %s99 = ssub.s32 4096, 4096
      %100 = vsyncadd [#allocation12], %s99
      %s101 = sshll.u32 [#allocation11], 4
      %s102 = int_to_ptr.vmem [resolvable:$true] %s101
      %107 = dma.hbm_to_vmem [thread:$0]  %s11, 4096, %s102, [#allocation12], 64, 64, 4
    $region49: #{_block_forward_impl.1} parent=1 // pred_fallthru
      _
    // Predicated region
    $region50: #{_block_forward_impl.1} parent=1 // pred_check
      _
    $region51: #{_block_forward_impl.1} parent=1 // pred_check_branch
      %109 = sbr.rel (0) target = $region53
    $region52: #{_block_forward_impl.1} parent=1 // pred_region
      _
    $region53: #{_block_forward_impl.1} parent=1 // pred_fallthru
      _
    // Predicated region
    $region54: #{_block_forward_impl.1} parent=1 // pred_check
      _
    $region55: #{_block_forward_impl.1} parent=1 // pred_check_branch
      %111 = sbr.rel (0) target = $region57
    $region56: #{_block_forward_impl.1} parent=1 // pred_region
      %112 = dma.done [#allocation3], 512
    $region57: #{_block_forward_impl.1} parent=1 // pred_fallthru
      _
    // Predicated region
    $region58: #{_block_forward_impl.1} parent=1 // pred_check
      _
    $region59: #{_block_forward_impl.1} parent=1 // pred_check_branch
      %114 = sbr.rel (0) target = $region61
    $region60: #{_block_forward_impl.1} parent=1 // pred_region
      %115 = dma.done [#allocation6], 3072
    $region61: #{_block_forward_impl.1} parent=1 // pred_fallthru
      _
    // Predicated region
    $region62: #{_block_forward_impl.1} parent=1 // pred_check
      _
    $region63: #{_block_forward_impl.1} parent=1 // pred_check_branch
      %117 = sbr.rel (0) target = $region65
    $region64: #{_block_forward_impl.1} parent=1 // pred_region
      %118 = dma.done [#allocation6], 1024
    $region65: #{_block_forward_impl.1} parent=1 // pred_fallthru
      _
    // Predicated region
    $region66: #{_block_forward_impl.1} parent=1 // pred_check
      _
    $region67: #{_block_forward_impl.1} parent=1 // pred_check_branch
      %120 = sbr.rel (0) target = $region69
    $region68: #{_block_forward_impl.1} parent=1 // pred_region
      %121 = dma.done [#allocation9], 16
    $region69: #{_block_forward_impl.1} parent=1 // pred_fallthru
      _
    // Predicated region
    $region70: #{_block_forward_impl.1} parent=1 // pred_check
      _
    $region71: #{_block_forward_impl.1} parent=1 // pred_check_branch
      %123 = sbr.rel (0) target = $region73
    $region72: #{_block_forward_impl.1} parent=1 // pred_region
      %124 = dma.done [#allocation9], 4096
    $region73: #{_block_forward_impl.1} parent=1 // pred_fallthru
      _
    // Predicated region
    $region74: #{_block_forward_impl.1} parent=1 // pred_check
      _
    $region75: #{_block_forward_impl.1} parent=1 // pred_check_branch
      %126 = sbr.rel (0) target = $region77
    $region76: #{_block_forward_impl.1} parent=1 // pred_region
      %127 = dma.done [#allocation12], 4096
    $region77: #{_block_forward_impl.1} parent=1 // pred_fallthru
      _
    %v129 = vld [vmem:[#allocation2] sm:$0xff]
    %v130 = vld [vmem:[#allocation2 + $0x8] sm:$0xff]
    %v131 = vld [vmem:[#allocation2 + $0x10] sm:$0xff]
    %v132 = vld [vmem:[#allocation2 + $0x18] sm:$0xff]
    %v133 = vld [vmem:[%s1] sm:$0x1]
    %v134 = vld [vmem:[%s2] sm:$0x1]
    %135 = vadd.xlane.f32.xlu0 %v129
    %v136 = vpop.xlane.xlu0 %135
    %137 = vadd.xlane.f32.xlu0 %v130
    %v138 = vpop.xlane.xlu0 %137
    %139 = vadd.xlane.f32.xlu0 %v131
    %v140 = vpop.xlane.xlu0 %139
    %141 = vadd.xlane.f32.xlu0 %v132
    %v142 = vpop.xlane.xlu0 %141
    %v143 = vrcp.pop 128.0
    %v144 = vmul.f32 %v136, %v143
    %v145 = vmul.f32 %v138, %v143
    %v146 = vmul.f32 %v140, %v143
    %v147 = vmul.f32 %v142, %v143
    %v148 = vsub.f32 %v129, %v144
    %v149 = vsub.f32 %v130, %v145
    %v150 = vsub.f32 %v131, %v146
    %v151 = vsub.f32 %v132, %v147
    %v152 = vmul.f32 %v148, %v148
    %v153 = vmul.f32 %v149, %v149
    %v154 = vmul.f32 %v150, %v150
    %v155 = vmul.f32 %v151, %v151
    %156 = vadd.xlane.f32.xlu0 %v152
    %v157 = vpop.xlane.xlu0 %156
    %158 = vadd.xlane.f32.xlu0 %v153
    %v159 = vpop.xlane.xlu0 %158
    %160 = vadd.xlane.f32.xlu0 %v154
    %v161 = vpop.xlane.xlu0 %160
    %162 = vadd.xlane.f32.xlu0 %v155
    %v163 = vpop.xlane.xlu0 %162
    %v164 = vmul.f32 %v157, %v143
    %v165 = vmul.f32 %v159, %v143
    %v166 = vmul.f32 %v161, %v143
    %v167 = vmul.f32 %v163, %v143
    %v168 = vadd.f32 %v164, 1e-05
    %v169 = vadd.f32 %v165, 1e-05
    %v170 = vadd.f32 %v166, 1e-05
    %v171 = vadd.f32 %v167, 1e-05
    %v172 = vrsqrt.pop %v168
    %v173 = vrsqrt.pop %v169
    %v174 = vrsqrt.pop %v170
    %v175 = vrsqrt.pop %v171
    %v176 = vmul.f32 %v148, %v172
    %v177 = vmul.f32 %v149, %v173
    %v178 = vmul.f32 %v150, %v174
    %v179 = vmul.f32 %v151, %v175
    %v181 = vlaneseq
    %v182 = vshrl.u32 %v181, 7
    %v183 = vsub.s32 0, %v182
    %v184 = vrot.slane %v133, %v183
    %v186 = vmul.f32 %v176, %v184
    %v187 = vmul.f32 %v177, %v184
    %v188 = vmul.f32 %v178, %v184
    %v189 = vmul.f32 %v179, %v184
    %v191 = vlaneseq
    %v192 = vshrl.u32 %v191, 7
    %v193 = vsub.s32 0, %v192
    %v194 = vrot.slane %v134, %v193
    %v196 = vadd.f32 %v186, %v194
    %v197 = vadd.f32 %v187, %v194
    %v198 = vadd.f32 %v188, %v194
    %v199 = vadd.f32 %v189, %v194
    %v200 = vpack.c.bf16 %v197, %v196
    %v201 = vpack.c.bf16 %v199, %v198
    %v202 = vld [vmem:[#allocation5] sm:$0xff]
    %v203 = vld [vmem:[#allocation5 + $0x8] sm:$0xf]
    %v204 = vld [vmem:[#allocation5 + $0xc] sm:$0xff]
    %v205 = vld [vmem:[#allocation5 + $0x14] sm:$0xf]
    %v206 = vld [vmem:[#allocation5 + $0x18] sm:$0xff]
    %v207 = vld [vmem:[#allocation5 + $0x20] sm:$0xf]
    %v208 = vld [vmem:[#allocation5 + $0x24] sm:$0xff]
    %v209 = vld [vmem:[#allocation5 + $0x2c] sm:$0xf]
    %v210 = vld [vmem:[#allocation5 + $0x30] sm:$0xff]
    %v211 = vld [vmem:[#allocation5 + $0x38] sm:$0xf]
    %v212 = vld [vmem:[#allocation5 + $0x3c] sm:$0xff]
    %v213 = vld [vmem:[#allocation5 + $0x44] sm:$0xf]
    %v214 = vld [vmem:[#allocation5 + $0x48] sm:$0xff]
    %v215 = vld [vmem:[#allocation5 + $0x50] sm:$0xf]
    %v216 = vld [vmem:[#allocation5 + $0x54] sm:$0xff]
    %v217 = vld [vmem:[#allocation5 + $0x5c] sm:$0xf]
    %v218 = vld [vmem:[#allocation5 + $0x60] sm:$0xff]
    %v219 = vld [vmem:[#allocation5 + $0x68] sm:$0xf]
    %v220 = vld [vmem:[#allocation5 + $0x6c] sm:$0xff]
    %v221 = vld [vmem:[#allocation5 + $0x74] sm:$0xf]
    %v222 = vld [vmem:[#allocation5 + $0x78] sm:$0xff]
    %v223 = vld [vmem:[#allocation5 + $0x80] sm:$0xf]
    %v224 = vld [vmem:[#allocation5 + $0x84] sm:$0xff]
    %v225 = vld [vmem:[#allocation5 + $0x8c] sm:$0xf]
    %v226 = vld [vmem:[#allocation5 + $0x90] sm:$0xff]
    %v227 = vld [vmem:[#allocation5 + $0x98] sm:$0xf]
    %v228 = vld [vmem:[#allocation5 + $0x9c] sm:$0xff]
    %v229 = vld [vmem:[#allocation5 + $0xa4] sm:$0xf]
    %v230 = vld [vmem:[#allocation5 + $0xa8] sm:$0xff]
    %v231 = vld [vmem:[#allocation5 + $0xb0] sm:$0xf]
    %v232 = vld [vmem:[#allocation5 + $0xb4] sm:$0xff]
    %v233 = vld [vmem:[#allocation5 + $0xbc] sm:$0xf]
    %v234 = vld [vmem:[%s4] sm:$0x7]
    %v236 = vlaneseq
    %v237 = vshrl.u32 %v236, 7
    %v238 = vsub.s32 0, %v237
    %v239 = vrot.slane %v234, %v238
    %v240 = vlaneseq
    %v241 = vshrl.u32 %v240, 7
    %v242 = vsub.s32 1, %v241
    %v243 = vrot.slane %v234, %v242
    %v244 = vlaneseq
    %v245 = vshrl.u32 %v244, 7
    %v246 = vsub.s32 2, %v245
    %v247 = vrot.slane %v234, %v246
    %v283 = vunpack.c.l.b16 %v202
    %v284 = vunpack.c.h.b16 %v202
    %v285 = vunpack.c.l.b16 %v203
    %v286 = vunpack.c.l.b16 %v204
    %v287 = vunpack.c.h.b16 %v204
    %v288 = vunpack.c.l.b16 %v205
    %v289 = vunpack.c.l.b16 %v206
    %v290 = vunpack.c.h.b16 %v206
    %v291 = vunpack.c.l.b16 %v207
    %v292 = vunpack.c.l.b16 %v208
    %v293 = vunpack.c.h.b16 %v208
    %v294 = vunpack.c.l.b16 %v209
    %v295 = vunpack.c.l.b16 %v210
    %v296 = vunpack.c.h.b16 %v210
    %v297 = vunpack.c.l.b16 %v211
    %v298 = vunpack.c.l.b16 %v212
    %v299 = vunpack.c.h.b16 %v212
    %v300 = vunpack.c.l.b16 %v213
    %v301 = vunpack.c.l.b16 %v214
    %v302 = vunpack.c.h.b16 %v214
    %v303 = vunpack.c.l.b16 %v215
    %v304 = vunpack.c.l.b16 %v216
    %v305 = vunpack.c.h.b16 %v216
    %v306 = vunpack.c.l.b16 %v217
    %v307 = vunpack.c.l.b16 %v218
    %v308 = vunpack.c.h.b16 %v218
    %v309 = vunpack.c.l.b16 %v219
    %v310 = vunpack.c.l.b16 %v220
    %v311 = vunpack.c.h.b16 %v220
    %v312 = vunpack.c.l.b16 %v221
    %v313 = vunpack.c.l.b16 %v222
    %v314 = vunpack.c.h.b16 %v222
    %v315 = vunpack.c.l.b16 %v223
    %v316 = vunpack.c.l.b16 %v224
    %v317 = vunpack.c.h.b16 %v224
    %v318 = vunpack.c.l.b16 %v225
    %v319 = vunpack.c.l.b16 %v226
    %v320 = vunpack.c.h.b16 %v226
    %v321 = vunpack.c.l.b16 %v227
    %v322 = vunpack.c.l.b16 %v228
    %v323 = vunpack.c.h.b16 %v228
    %v324 = vunpack.c.l.b16 %v229
    %v325 = vunpack.c.l.b16 %v230
    %v326 = vunpack.c.h.b16 %v230
    %v327 = vunpack.c.l.b16 %v231
    %v328 = vunpack.c.l.b16 %v232
    %v329 = vunpack.c.h.b16 %v232
    %v330 = vunpack.c.l.b16 %v233
    %v331 = vpack.c.b16 %v286, %v283
    %v332 = vpack.c.b16 %v287, %v284
    %v333 = vpack.c.b16 %v288, %v285
    %v334 = vpack.c.b16 %v292, %v289
    %v335 = vpack.c.b16 %v293, %v290
    %v336 = vpack.c.b16 %v294, %v291
    %v337 = vpack.c.b16 %v298, %v295
    %v338 = vpack.c.b16 %v299, %v296
    %v339 = vpack.c.b16 %v300, %v297
    %v340 = vpack.c.b16 %v304, %v301
    %v341 = vpack.c.b16 %v305, %v302
    %v342 = vpack.c.b16 %v306, %v303
    %v343 = vpack.c.b16 %v310, %v307
    %v344 = vpack.c.b16 %v311, %v308
    %v345 = vpack.c.b16 %v312, %v309
    %v346 = vpack.c.b16 %v316, %v313
    %v347 = vpack.c.b16 %v317, %v314
    %v348 = vpack.c.b16 %v318, %v315
    %v349 = vpack.c.b16 %v322, %v319
    %v350 = vpack.c.b16 %v323, %v320
    %v351 = vpack.c.b16 %v324, %v321
    %v352 = vpack.c.b16 %v328, %v325
    %v353 = vpack.c.b16 %v329, %v326
    %v354 = vpack.c.b16 %v330, %v327
    %379 = vmatprep.subr.bf16.mxu0 %v332
    %380 = vmatpush1.bf16.msra.mxu0 %v331
    %381 = vmatprep.subr.bf16.mxu0 %v335
    %382 = vmatpush1.bf16.msra.mxu0 %v334
    %383 = vmatprep.subr.bf16.mxu0 %v338
    %384 = vmatpush1.bf16.msra.mxu0 %v337
    %385 = vmatprep.subr.bf16.mxu0 %v341
    %386 = vmatpush1.bf16.msra.mxu0 %v340
    %387 = vmatprep.subr.bf16.mxu0 %v344
    %388 = vmatpush1.bf16.msra.mxu0 %v343
    %389 = vmatprep.subr.bf16.mxu0 %v347
    %390 = vmatpush1.bf16.msra.mxu0 %v346
    %391 = vmatprep.subr.bf16.mxu0 %v350
    %392 = vmatpush1.bf16.msra.mxu0 %v349
    %393 = vmatprep.subr.bf16.mxu0 %v353
    %394 = vmatpush1.bf16.msra.mxu0 %v352
    %395 = vmatprep.subr.bf16.mxu0 0
    %396 = vmatpush1.bf16.msra.mxu0 0
    %397 = vmatprep.subr.bf16.mxu0 0
    %398 = vmatpush1.bf16.msra.mxu0 0
    %399 = vmatprep.subr.bf16.mxu0 0
    %400 = vmatpush1.bf16.msra.mxu0 0
    %401 = vmatprep.subr.bf16.mxu0 0
    %402 = vmatpush1.bf16.msra.mxu0 0
    %403 = vmatprep.subr.bf16.mxu0 0
    %404 = vmatpush1.bf16.msra.mxu0 0
    %405 = vmatprep.subr.bf16.mxu0 0
    %406 = vmatpush1.bf16.msra.mxu0 0
    %407 = vmatprep.subr.bf16.mxu0 0
    %408 = vmatpush1.bf16.msra.mxu0 0
    %409 = vmatprep.subr.bf16.mxu0 0
    %410 = vmatpush1.bf16.msra.mxu0 0
    %411 = vmatprep.mubr.bf16.mxu0 0
    %412 = vmatmul.mubr.bf16.gmra.mrb[0].mxu0 %v200
    %v413 = vpop.f32.mrb[0].mxu0
    %v414 = vadd.f32 %v239, %v413
    %v415 = vpop.f32.mrb[0].mxu0
    %v416 = vadd.f32 %v243, %v415
    %v417 = vpop.f32.mrb[0].mxu0
    %v418 = vadd.f32 %v239, %v417
    %v419 = vpop.f32.mrb[0].mxu0
    %v420 = vadd.f32 %v243, %v419
    %421 = vmatprep.mubr.bf16.mxu0 0
    %422 = vmatmul.mubr.bf16.gmra.mrb[0].mxu0 %v201
    %v423 = vpop.f32.mrb[0].mxu0
    %v424 = vadd.f32 %v239, %v423
    %v425 = vpop.f32.mrb[0].mxu0
    %v426 = vadd.f32 %v243, %v425
    %v427 = vpop.f32.mrb[0].mxu0
    %v428 = vadd.f32 %v239, %v427
    %v429 = vpop.f32.mrb[0].mxu0
    %v430 = vadd.f32 %v243, %v429
    %431 = vdwg.mxu0
    %432 = vmatprep.subr.bf16.mxu0 0
    %433 = vmatpush1.bf16.msra.mxu0 %v333
    %434 = vmatprep.subr.bf16.mxu0 0
    %435 = vmatpush1.bf16.msra.mxu0 %v336
    %436 = vmatprep.subr.bf16.mxu0 0
    %437 = vmatpush1.bf16.msra.mxu0 %v339
    %438 = vmatprep.subr.bf16.mxu0 0
    %439 = vmatpush1.bf16.msra.mxu0 %v342
    %440 = vmatprep.subr.bf16.mxu0 0
    %441 = vmatpush1.bf16.msra.mxu0 %v345
    %442 = vmatprep.subr.bf16.mxu0 0
    %443 = vmatpush1.bf16.msra.mxu0 %v348
    %444 = vmatprep.subr.bf16.mxu0 0
    %445 = vmatpush1.bf16.msra.mxu0 %v351
    %446 = vmatprep.subr.bf16.mxu0 0
    %447 = vmatpush1.bf16.msra.mxu0 %v354
    %448 = vmatprep.subr.bf16.mxu0 0
    %449 = vmatpush1.bf16.msra.mxu0 0
    %450 = vmatprep.subr.bf16.mxu0 0
    %451 = vmatpush1.bf16.msra.mxu0 0
    %452 = vmatprep.subr.bf16.mxu0 0
    %453 = vmatpush1.bf16.msra.mxu0 0
    %454 = vmatprep.subr.bf16.mxu0 0
    %455 = vmatpush1.bf16.msra.mxu0 0
    %456 = vmatprep.subr.bf16.mxu0 0
    %457 = vmatpush1.bf16.msra.mxu0 0
    %458 = vmatprep.subr.bf16.mxu0 0
    %459 = vmatpush1.bf16.msra.mxu0 0
    %460 = vmatprep.subr.bf16.mxu0 0
    %461 = vmatpush1.bf16.msra.mxu0 0
    %462 = vmatprep.subr.bf16.mxu0 0
    %463 = vmatpush1.bf16.msra.mxu0 0
    %464 = vmatprep.mubr.bf16.mxu0 0
    %465 = vmatmul.mubr.bf16.gmra.mrb[0].mxu0 %v200
    %v466 = vpop.f32.mrb[0].mxu0
    %v467 = vadd.f32 %v247, %v466
    %v468 = vpop.f32.mrb[0].mxu0
    %v469 = vpop.f32.mrb[0].mxu0
    %v470 = vadd.f32 %v247, %v469
    %v471 = vpop.f32.mrb[0].mxu0
    %472 = vmatprep.mubr.bf16.mxu0 0
    %473 = vmatmul.mubr.bf16.gmra.mrb[0].mxu0 %v201
    %v474 = vpop.f32.mrb[0].mxu0
    %v475 = vadd.f32 %v247, %v474
    %v476 = vpop.f32.mrb[0].mxu0
    %v477 = vpop.f32.mrb[0].mxu0
    %v478 = vadd.f32 %v247, %v477
    %v479 = vpop.f32.mrb[0].mxu0
    %480 = vdwg.mxu0
    %v481 = vlaneseq
    %v482 = vshrl.u32 %v481, 7
    %v483 = vadd.s32 %v482, 8
    %v484 = vlaneseq
    %v485 = vand.u32 %v484, 127
    %vm486 = vcmp.le.s32.totalorder %v485, %v482
    %vm487 = vcmp.le.s32.totalorder %v485, %v483
    %v488 = vpack.c.bf16 %v470, %v467
    %v489 = vpack.c.bf16 0.0, 0.0
    %vm490 = vcmask 261120
    %v492 = vsel %vm490, %v414, 0
    %v495 = vsel %vm490, %v418, 0
    %v498 = vsel %vm490, %v416, 0
    %v501 = vsel %vm490, %v420, 0
    %v504 = vsel %vm490, 0.0, 0
    %506 = vmatprep.subr.mxu0 0.0
    %507 = vmatpush1.xpose.msra.mxu0 %v498
    %508 = vmatprep.subr.mxu0 0.0
    %509 = vmatpush1.xpose.msra.mxu0 %v501
    %510 = vmatprep.subr.mxu0 0.0
    %511 = vmatpush1.xpose.msra.mxu0 %v504
    %512 = vmatprep.subr.mxu0 0.0
    %513 = vmatpush1.xpose.msra.mxu0 %v504
    %514 = vmatprep.subr.mxu0 0.0
    %515 = vmatpush1.xpose.msra.mxu0 %v504
    %516 = vmatprep.subr.mxu0 0.0
    %517 = vmatpush1.xpose.msra.mxu0 %v504
    %518 = vmatprep.subr.mxu0 0.0
    %519 = vmatpush1.xpose.msra.mxu0 %v504
    %520 = vmatprep.subr.mxu0 0.0
    %521 = vmatpush1.xpose.msra.mxu0 %v504
    %522 = vmatprep.subr.mxu0 0.0
    %523 = vmatpush1.xpose.msra.mxu0 %v504
    %524 = vmatprep.subr.mxu0 0.0
    %525 = vmatpush1.xpose.msra.mxu0 %v504
    %526 = vmatprep.subr.mxu0 0.0
    %527 = vmatpush1.xpose.msra.mxu0 %v504
    %528 = vmatprep.subr.mxu0 0.0
    %529 = vmatpush1.xpose.msra.mxu0 %v504
    %530 = vmatprep.subr.mxu0 0.0
    %531 = vmatpush1.xpose.msra.mxu0 %v504
    %532 = vmatprep.subr.mxu0 0.0
    %533 = vmatpush1.xpose.msra.mxu0 %v504
    %534 = vmatprep.subr.mxu0 0.0
    %535 = vmatpush1.xpose.msra.mxu0 %v504
    %536 = vmatprep.subr.mxu0 0.0
    %537 = vmatpush1.xpose.msra.mxu0 %v504
    %538 = vmatprep.subr.mxu0 0.0
    %539 = vmatpush1.xpose.msra.mxu0 0.0
    %540 = vmatprep.subr.mxu0 0.0
    %541 = vmatpush1.xpose.msra.mxu0 0.0
    %542 = vmatprep.subr.mxu0 0.0
    %543 = vmatpush1.xpose.msra.mxu0 0.0
    %544 = vmatprep.subr.mxu0 0.0
    %545 = vmatpush1.xpose.msra.mxu0 0.0
    %546 = vmatprep.subr.mxu0 0.0
    %547 = vmatpush1.xpose.msra.mxu0 0.0
    %548 = vmatprep.subr.mxu0 0.0
    %549 = vmatpush1.xpose.msra.mxu0 0.0
    %550 = vmatprep.subr.mxu0 0.0
    %551 = vmatpush1.xpose.msra.mxu0 0.0
    %552 = vmatprep.subr.mxu0 0.0
    %553 = vmatpush1.xpose.msra.mxu0 0.0
    %554 = vmatprep.subr.mxu0 0.0
    %555 = vmatpush1.xpose.msra.mxu0 0.0
    %556 = vmatprep.subr.mxu0 0.0
    %557 = vmatpush1.xpose.msra.mxu0 0.0
    %558 = vmatprep.subr.mxu0 0.0
    %559 = vmatpush1.xpose.msra.mxu0 0.0
    %560 = vmatprep.subr.mxu0 0.0
    %561 = vmatpush1.xpose.msra.mxu0 0.0
    %562 = vmatprep.subr.mxu0 0.0
    %563 = vmatpush1.xpose.msra.mxu0 0.0
    %564 = vmatprep.subr.mxu0 0.0
    %565 = vmatpush1.xpose.msra.mxu0 0.0
    %566 = vmatprep.subr.mxu0 0.0
    %567 = vmatpush1.xpose.msra.mxu0 0.0
    %568 = vmatprep.subr.mxu0 0.0
    %569 = vmatpush1.xpose.msra.mxu0 0.0
    %570 = vmatprep.mubr.f32.mxu0 0.0
    %571 = vmatmul.mubr.f32.gmra.mrb[0].mxu0 %v492
    %v572 = vpop.f32.mrb[0].mxu0
    %v573 = vadd.f32 0.0, %v572
    %v574 = vpop.f32.mrb[0].mxu0
    %575 = vmatprep.mubr.f32.mxu0 0.0
    %576 = vmatmul.mubr.f32.gmra.mrb[0].mxu0 %v495
    %v577 = vpop.f32.mrb[0].mxu0
    %v578 = vadd.f32 0.0, %v577
    %v579 = vpop.f32.mrb[0].mxu0
    %580 = vdwg.mxu0
    %v581 = vmul.f32 %v573, 0.17677669
    %v582 = vmul.f32 %v578, 0.17677669
    %v583 = vsel %vm486, %v581, -1e+30
    %v584 = vsel %vm487, %v582, -1e+30
    %585 = vmax.xlane.f32.xlu0 %v583
    %v586 = vpop.xlane.xlu0 %585
    %587 = vmax.xlane.f32.xlu0 %v584
    %v588 = vpop.xlane.xlu0 %587
    %v589 = vsub.f32 %v583, %v586
    %v590 = vsub.f32 %v584, %v588
    %v591 = vmul.f32 %v589, 1.442695
    %v592 = vpow.pop %v591
    %v593 = vmul.f32 %v590, 1.442695
    %v594 = vpow.pop %v593
    %v595 = vsel %vm486, %v592, 0.0
    %v596 = vsel %vm487, %v594, 0.0
    %597 = vadd.xlane.f32.xlu0 %v595
    %v598 = vpop.xlane.xlu0 %597
    %599 = vadd.xlane.f32.xlu0 %v596
    %v600 = vpop.xlane.xlu0 %599
    %v601 = vrcp.pop %v598
    %v602 = vrcp.pop %v600
    %v603 = vmul.f32 %v595, %v601
    %v604 = vmul.f32 %v596, %v602
    %605 = vst [vmem:[#allocation14] sm:$0xff] %v603
    %606 = vst [vmem:[#allocation14 + $0x8] sm:$0xff] %v604
    %v607 = vpack.c.bf16 %v604, %v603
    %608 = vmatprep.subr.bf16.mxu0 0
    %609 = vmatpush1.bf16.msra.mxu0 %v488
    %610 = vmatprep.subr.bf16.mxu0 0
    %611 = vmatpush1.bf16.msra.mxu0 %v489
    %612 = vmatprep.subr.bf16.mxu0 0
    %613 = vmatpush1.bf16.msra.mxu0 %v489
    %614 = vmatprep.subr.bf16.mxu0 0
    %615 = vmatpush1.bf16.msra.mxu0 %v489
    %616 = vmatprep.subr.bf16.mxu0 0
    %617 = vmatpush1.bf16.msra.mxu0 %v489
    %618 = vmatprep.subr.bf16.mxu0 0
    %619 = vmatpush1.bf16.msra.mxu0 %v489
    %620 = vmatprep.subr.bf16.mxu0 0
    %621 = vmatpush1.bf16.msra.mxu0 %v489
    %622 = vmatprep.subr.bf16.mxu0 0
    %623 = vmatpush1.bf16.msra.mxu0 %v489
    %624 = vmatprep.subr.bf16.mxu0 0
    %625 = vmatpush1.bf16.msra.mxu0 0
    %626 = vmatprep.subr.bf16.mxu0 0
    %627 = vmatpush1.bf16.msra.mxu0 0
    %628 = vmatprep.subr.bf16.mxu0 0
    %629 = vmatpush1.bf16.msra.mxu0 0
    %630 = vmatprep.subr.bf16.mxu0 0
    %631 = vmatpush1.bf16.msra.mxu0 0
    %632 = vmatprep.subr.bf16.mxu0 0
    %633 = vmatpush1.bf16.msra.mxu0 0
    %634 = vmatprep.subr.bf16.mxu0 0
    %635 = vmatpush1.bf16.msra.mxu0 0
    %636 = vmatprep.subr.bf16.mxu0 0
    %637 = vmatpush1.bf16.msra.mxu0 0
    %638 = vmatprep.subr.bf16.mxu0 0
    %639 = vmatpush1.bf16.msra.mxu0 0
    %640 = vmatprep.mubr.bf16.mxu0 0
    %641 = vmatmul.mubr.bf16.gmra.mrb[0].mxu0 %v607
    %v642 = vpop.f32.mrb[0].mxu0
    %v643 = vadd.f32 0.0, %v642
    %v644 = vpop.f32.mrb[0].mxu0
    %v645 = vpop.f32.mrb[0].mxu0
    %v646 = vadd.f32 0.0, %v645
    %v647 = vpop.f32.mrb[0].mxu0
    %648 = vdwg.mxu0
    %649 = vrot.lane.b32.xlu0 %v414, 96
    %v650 = vpop.permute.xlu0 %649
    %651 = vrot.lane.b32.xlu0 %v418, 96
    %v652 = vpop.permute.xlu0 %651
    %653 = vrot.lane.b32.xlu0 %v416, 96
    %v654 = vpop.permute.xlu0 %653
    %655 = vrot.lane.b32.xlu0 %v420, 96
    %v656 = vpop.permute.xlu0 %655
    %657 = vrot.lane.b32.xlu0 0.0, 96
    %v658 = vpop.permute.xlu0 %657
    %v659 = vsel %vm490, %v650, 0
    %v661 = vsel %vm490, %v652, 0
    %v663 = vsel %vm490, %v654, 0
    %v665 = vsel %vm490, %v656, 0
    %v667 = vsel %vm490, %v658, 0
    %669 = vmatprep.subr.mxu0 0.0
    %670 = vmatpush1.xpose.msra.mxu0 %v663
    %671 = vmatprep.subr.mxu0 0.0
    %672 = vmatpush1.xpose.msra.mxu0 %v665
    %673 = vmatprep.subr.mxu0 0.0
    %674 = vmatpush1.xpose.msra.mxu0 %v667
    %675 = vmatprep.subr.mxu0 0.0
    %676 = vmatpush1.xpose.msra.mxu0 %v667
    %677 = vmatprep.subr.mxu0 0.0
    %678 = vmatpush1.xpose.msra.mxu0 %v667
    %679 = vmatprep.subr.mxu0 0.0
    %680 = vmatpush1.xpose.msra.mxu0 %v667
    %681 = vmatprep.subr.mxu0 0.0
    %682 = vmatpush1.xpose.msra.mxu0 %v667
    %683 = vmatprep.subr.mxu0 0.0
    %684 = vmatpush1.xpose.msra.mxu0 %v667
    %685 = vmatprep.subr.mxu0 0.0
    %686 = vmatpush1.xpose.msra.mxu0 %v667
    %687 = vmatprep.subr.mxu0 0.0
    %688 = vmatpush1.xpose.msra.mxu0 %v667
    %689 = vmatprep.subr.mxu0 0.0
    %690 = vmatpush1.xpose.msra.mxu0 %v667
    %691 = vmatprep.subr.mxu0 0.0
    %692 = vmatpush1.xpose.msra.mxu0 %v667
    %693 = vmatprep.subr.mxu0 0.0
    %694 = vmatpush1.xpose.msra.mxu0 %v667
    %695 = vmatprep.subr.mxu0 0.0
    %696 = vmatpush1.xpose.msra.mxu0 %v667
    %697 = vmatprep.subr.mxu0 0.0
    %698 = vmatpush1.xpose.msra.mxu0 %v667
    %699 = vmatprep.subr.mxu0 0.0
    %700 = vmatpush1.xpose.msra.mxu0 %v667
    %701 = vmatprep.subr.mxu0 0.0
    %702 = vmatpush1.xpose.msra.mxu0 0.0
    %703 = vmatprep.subr.mxu0 0.0
    %704 = vmatpush1.xpose.msra.mxu0 0.0
    %705 = vmatprep.subr.mxu0 0.0
    %706 = vmatpush1.xpose.msra.mxu0 0.0
    %707 = vmatprep.subr.mxu0 0.0
    %708 = vmatpush1.xpose.msra.mxu0 0.0
    %709 = vmatprep.subr.mxu0 0.0
    %710 = vmatpush1.xpose.msra.mxu0 0.0
    %711 = vmatprep.subr.mxu0 0.0
    %712 = vmatpush1.xpose.msra.mxu0 0.0
    %713 = vmatprep.subr.mxu0 0.0
    %714 = vmatpush1.xpose.msra.mxu0 0.0
    %715 = vmatprep.subr.mxu0 0.0
    %716 = vmatpush1.xpose.msra.mxu0 0.0
    %717 = vmatprep.subr.mxu0 0.0
    %718 = vmatpush1.xpose.msra.mxu0 0.0
    %719 = vmatprep.subr.mxu0 0.0
    %720 = vmatpush1.xpose.msra.mxu0 0.0
    %721 = vmatprep.subr.mxu0 0.0
    %722 = vmatpush1.xpose.msra.mxu0 0.0
    %723 = vmatprep.subr.mxu0 0.0
    %724 = vmatpush1.xpose.msra.mxu0 0.0
    %725 = vmatprep.subr.mxu0 0.0
    %726 = vmatpush1.xpose.msra.mxu0 0.0
    %727 = vmatprep.subr.mxu0 0.0
    %728 = vmatpush1.xpose.msra.mxu0 0.0
    %729 = vmatprep.subr.mxu0 0.0
    %730 = vmatpush1.xpose.msra.mxu0 0.0
    %731 = vmatprep.subr.mxu0 0.0
    %732 = vmatpush1.xpose.msra.mxu0 0.0
    %733 = vmatprep.mubr.f32.mxu0 0.0
    %734 = vmatmul.mubr.f32.gmra.mrb[0].mxu0 %v659
    %v735 = vpop.f32.mrb[0].mxu0
    %v736 = vadd.f32 0.0, %v735
    %v737 = vpop.f32.mrb[0].mxu0
    %738 = vmatprep.mubr.f32.mxu0 0.0
    %739 = vmatmul.mubr.f32.gmra.mrb[0].mxu0 %v661
    %v740 = vpop.f32.mrb[0].mxu0
    %v741 = vadd.f32 0.0, %v740
    %v742 = vpop.f32.mrb[0].mxu0
    %743 = vdwg.mxu0
    %v744 = vmul.f32 %v736, 0.17677669
    %v745 = vmul.f32 %v741, 0.17677669
    %v746 = vsel %vm486, %v744, -1e+30
    %v747 = vsel %vm487, %v745, -1e+30
    %748 = vmax.xlane.f32.xlu0 %v746
    %v749 = vpop.xlane.xlu0 %748
    %750 = vmax.xlane.f32.xlu0 %v747
    %v751 = vpop.xlane.xlu0 %750
    %v752 = vsub.f32 %v746, %v749
    %v753 = vsub.f32 %v747, %v751
    %v754 = vmul.f32 %v752, 1.442695
    %v755 = vpow.pop %v754
    %v756 = vmul.f32 %v753, 1.442695
    %v757 = vpow.pop %v756
    %v758 = vsel %vm486, %v755, 0.0
    %v759 = vsel %vm487, %v757, 0.0
    %760 = vadd.xlane.f32.xlu0 %v758
    %v761 = vpop.xlane.xlu0 %760
    %762 = vadd.xlane.f32.xlu0 %v759
    %v763 = vpop.xlane.xlu0 %762
    %v764 = vrcp.pop %v761
    %v765 = vrcp.pop %v763
    %v766 = vmul.f32 %v758, %v764
    %v767 = vmul.f32 %v759, %v765
    %s768 = scalar_lea.vmem [#allocation14], 16
    %769 = vst [vmem:[%s768] sm:$0xff] %v766
    %770 = vst [vmem:[%s768 + $0x8] sm:$0xff] %v767
    %v771 = vpack.c.bf16 %v767, %v766
    %774 = vrot.lane.b32.xlu0 %v488, 96
    %v775 = vpop.permute.xlu0 %774
    %776 = vrot.lane.b32.xlu0 %v489, 96
    %v777 = vpop.permute.xlu0 %776
    %780 = vmatprep.subr.bf16.mxu0 0
    %781 = vmatpush1.bf16.msra.mxu0 %v775
    %782 = vmatprep.subr.bf16.mxu0 0
    %783 = vmatpush1.bf16.msra.mxu0 %v777
    %784 = vmatprep.subr.bf16.mxu0 0
    %785 = vmatpush1.bf16.msra.mxu0 %v777
    %786 = vmatprep.subr.bf16.mxu0 0
    %787 = vmatpush1.bf16.msra.mxu0 %v777
    %788 = vmatprep.subr.bf16.mxu0 0
    %789 = vmatpush1.bf16.msra.mxu0 %v777
    %790 = vmatprep.subr.bf16.mxu0 0
    %791 = vmatpush1.bf16.msra.mxu0 %v777
    %792 = vmatprep.subr.bf16.mxu0 0
    %793 = vmatpush1.bf16.msra.mxu0 %v777
    %794 = vmatprep.subr.bf16.mxu0 0
    %795 = vmatpush1.bf16.msra.mxu0 %v777
    %796 = vmatprep.subr.bf16.mxu0 0
    %797 = vmatpush1.bf16.msra.mxu0 0
    %798 = vmatprep.subr.bf16.mxu0 0
    %799 = vmatpush1.bf16.msra.mxu0 0
    %800 = vmatprep.subr.bf16.mxu0 0
    %801 = vmatpush1.bf16.msra.mxu0 0
    %802 = vmatprep.subr.bf16.mxu0 0
    %803 = vmatpush1.bf16.msra.mxu0 0
    %804 = vmatprep.subr.bf16.mxu0 0
    %805 = vmatpush1.bf16.msra.mxu0 0
    %806 = vmatprep.subr.bf16.mxu0 0
    %807 = vmatpush1.bf16.msra.mxu0 0
    %808 = vmatprep.subr.bf16.mxu0 0
    %809 = vmatpush1.bf16.msra.mxu0 0
    %810 = vmatprep.subr.bf16.mxu0 0
    %811 = vmatpush1.bf16.msra.mxu0 0
    %812 = vmatprep.mubr.bf16.mxu0 0
    %813 = vmatmul.mubr.bf16.gmra.mrb[0].mxu0 %v771
    %v814 = vpop.f32.mrb[0].mxu0
    %v815 = vadd.f32 0.0, %v814
    %v816 = vpop.f32.mrb[0].mxu0
    %v817 = vpop.f32.mrb[0].mxu0
    %v818 = vadd.f32 0.0, %v817
    %v819 = vpop.f32.mrb[0].mxu0
    %820 = vdwg.mxu0
    %821 = vrot.lane.b32.xlu0 %v414, 64
    %v822 = vpop.permute.xlu0 %821
    %823 = vrot.lane.b32.xlu0 %v418, 64
    %v824 = vpop.permute.xlu0 %823
    %825 = vrot.lane.b32.xlu0 %v416, 64
    %v826 = vpop.permute.xlu0 %825
    %827 = vrot.lane.b32.xlu0 %v420, 64
    %v828 = vpop.permute.xlu0 %827
    %829 = vrot.lane.b32.xlu0 0.0, 64
    %v830 = vpop.permute.xlu0 %829
    %v831 = vsel %vm490, %v822, 0
    %v833 = vsel %vm490, %v824, 0
    %v835 = vsel %vm490, %v826, 0
    %v837 = vsel %vm490, %v828, 0
    %v839 = vsel %vm490, %v830, 0
    %841 = vmatprep.subr.mxu0 0.0
    %842 = vmatpush1.xpose.msra.mxu0 %v835
    %843 = vmatprep.subr.mxu0 0.0
    %844 = vmatpush1.xpose.msra.mxu0 %v837
    %845 = vmatprep.subr.mxu0 0.0
    %846 = vmatpush1.xpose.msra.mxu0 %v839
    %847 = vmatprep.subr.mxu0 0.0
    %848 = vmatpush1.xpose.msra.mxu0 %v839
    %849 = vmatprep.subr.mxu0 0.0
    %850 = vmatpush1.xpose.msra.mxu0 %v839
    %851 = vmatprep.subr.mxu0 0.0
    %852 = vmatpush1.xpose.msra.mxu0 %v839
    %853 = vmatprep.subr.mxu0 0.0
    %854 = vmatpush1.xpose.msra.mxu0 %v839
    %855 = vmatprep.subr.mxu0 0.0
    %856 = vmatpush1.xpose.msra.mxu0 %v839
    %857 = vmatprep.subr.mxu0 0.0
    %858 = vmatpush1.xpose.msra.mxu0 %v839
    %859 = vmatprep.subr.mxu0 0.0
    %860 = vmatpush1.xpose.msra.mxu0 %v839
    %861 = vmatprep.subr.mxu0 0.0
    %862 = vmatpush1.xpose.msra.mxu0 %v839
    %863 = vmatprep.subr.mxu0 0.0
    %864 = vmatpush1.xpose.msra.mxu0 %v839
    %865 = vmatprep.subr.mxu0 0.0
    %866 = vmatpush1.xpose.msra.mxu0 %v839
    %867 = vmatprep.subr.mxu0 0.0
    %868 = vmatpush1.xpose.msra.mxu0 %v839
    %869 = vmatprep.subr.mxu0 0.0
    %870 = vmatpush1.xpose.msra.mxu0 %v839
    %871 = vmatprep.subr.mxu0 0.0
    %872 = vmatpush1.xpose.msra.mxu0 %v839
    %873 = vmatprep.subr.mxu0 0.0
    %874 = vmatpush1.xpose.msra.mxu0 0.0
    %875 = vmatprep.subr.mxu0 0.0
    %876 = vmatpush1.xpose.msra.mxu0 0.0
    %877 = vmatprep.subr.mxu0 0.0
    %878 = vmatpush1.xpose.msra.mxu0 0.0
    %879 = vmatprep.subr.mxu0 0.0
    %880 = vmatpush1.xpose.msra.mxu0 0.0
    %881 = vmatprep.subr.mxu0 0.0
    %882 = vmatpush1.xpose.msra.mxu0 0.0
    %883 = vmatprep.subr.mxu0 0.0
    %884 = vmatpush1.xpose.msra.mxu0 0.0
    %885 = vmatprep.subr.mxu0 0.0
    %886 = vmatpush1.xpose.msra.mxu0 0.0
    %887 = vmatprep.subr.mxu0 0.0
    %888 = vmatpush1.xpose.msra.mxu0 0.0
    %889 = vmatprep.subr.mxu0 0.0
    %890 = vmatpush1.xpose.msra.mxu0 0.0
    %891 = vmatprep.subr.mxu0 0.0
    %892 = vmatpush1.xpose.msra.mxu0 0.0
    %893 = vmatprep.subr.mxu0 0.0
    %894 = vmatpush1.xpose.msra.mxu0 0.0
    %895 = vmatprep.subr.mxu0 0.0
    %896 = vmatpush1.xpose.msra.mxu0 0.0
    %897 = vmatprep.subr.mxu0 0.0
    %898 = vmatpush1.xpose.msra.mxu0 0.0
    %899 = vmatprep.subr.mxu0 0.0
    %900 = vmatpush1.xpose.msra.mxu0 0.0
    %901 = vmatprep.subr.mxu0 0.0
    %902 = vmatpush1.xpose.msra.mxu0 0.0
    %903 = vmatprep.subr.mxu0 0.0
    %904 = vmatpush1.xpose.msra.mxu0 0.0
    %905 = vmatprep.mubr.f32.mxu0 0.0
    %906 = vmatmul.mubr.f32.gmra.mrb[0].mxu0 %v831
    %v907 = vpop.f32.mrb[0].mxu0
    %v908 = vadd.f32 0.0, %v907
    %v909 = vpop.f32.mrb[0].mxu0
    %910 = vmatprep.mubr.f32.mxu0 0.0
    %911 = vmatmul.mubr.f32.gmra.mrb[0].mxu0 %v833
    %v912 = vpop.f32.mrb[0].mxu0
    %v913 = vadd.f32 0.0, %v912
    %v914 = vpop.f32.mrb[0].mxu0
    %915 = vdwg.mxu0
    %v916 = vmul.f32 %v908, 0.17677669
    %v917 = vmul.f32 %v913, 0.17677669
    %v918 = vsel %vm486, %v916, -1e+30
    %v919 = vsel %vm487, %v917, -1e+30
    %920 = vmax.xlane.f32.xlu0 %v918
    %v921 = vpop.xlane.xlu0 %920
    %922 = vmax.xlane.f32.xlu0 %v919
    %v923 = vpop.xlane.xlu0 %922
    %v924 = vsub.f32 %v918, %v921
    %v925 = vsub.f32 %v919, %v923
    %v926 = vmul.f32 %v924, 1.442695
    %v927 = vpow.pop %v926
    %v928 = vmul.f32 %v925, 1.442695
    %v929 = vpow.pop %v928
    %v930 = vsel %vm486, %v927, 0.0
    %v931 = vsel %vm487, %v929, 0.0
    %932 = vadd.xlane.f32.xlu0 %v930
    %v933 = vpop.xlane.xlu0 %932
    %934 = vadd.xlane.f32.xlu0 %v931
    %v935 = vpop.xlane.xlu0 %934
    %v936 = vrcp.pop %v933
    %v937 = vrcp.pop %v935
    %v938 = vmul.f32 %v930, %v936
    %v939 = vmul.f32 %v931, %v937
    %s940 = scalar_lea.vmem [#allocation14], 32
    %941 = vst [vmem:[%s940] sm:$0xff] %v938
    %942 = vst [vmem:[%s940 + $0x8] sm:$0xff] %v939
    %v943 = vpack.c.bf16 %v939, %v938
    %944 = vrot.lane.b32.xlu0 %v488, 64
    %v945 = vpop.permute.xlu0 %944
    %946 = vrot.lane.b32.xlu0 %v489, 64
    %v947 = vpop.permute.xlu0 %946
    %950 = vmatprep.subr.bf16.mxu0 0
    %951 = vmatpush1.bf16.msra.mxu0 %v945
    %952 = vmatprep.subr.bf16.mxu0 0
    %953 = vmatpush1.bf16.msra.mxu0 %v947
    %954 = vmatprep.subr.bf16.mxu0 0
    %955 = vmatpush1.bf16.msra.mxu0 %v947
    %956 = vmatprep.subr.bf16.mxu0 0
    %957 = vmatpush1.bf16.msra.mxu0 %v947
    %958 = vmatprep.subr.bf16.mxu0 0
    %959 = vmatpush1.bf16.msra.mxu0 %v947
    %960 = vmatprep.subr.bf16.mxu0 0
    %961 = vmatpush1.bf16.msra.mxu0 %v947
    %962 = vmatprep.subr.bf16.mxu0 0
    %963 = vmatpush1.bf16.msra.mxu0 %v947
    %964 = vmatprep.subr.bf16.mxu0 0
    %965 = vmatpush1.bf16.msra.mxu0 %v947
    %966 = vmatprep.subr.bf16.mxu0 0
    %967 = vmatpush1.bf16.msra.mxu0 0
    %968 = vmatprep.subr.bf16.mxu0 0
    %969 = vmatpush1.bf16.msra.mxu0 0
    %970 = vmatprep.subr.bf16.mxu0 0
    %971 = vmatpush1.bf16.msra.mxu0 0
    %972 = vmatprep.subr.bf16.mxu0 0
    %973 = vmatpush1.bf16.msra.mxu0 0
    %974 = vmatprep.subr.bf16.mxu0 0
    %975 = vmatpush1.bf16.msra.mxu0 0
    %976 = vmatprep.subr.bf16.mxu0 0
    %977 = vmatpush1.bf16.msra.mxu0 0
    %978 = vmatprep.subr.bf16.mxu0 0
    %979 = vmatpush1.bf16.msra.mxu0 0
    %980 = vmatprep.subr.bf16.mxu0 0
    %981 = vmatpush1.bf16.msra.mxu0 0
    %982 = vmatprep.mubr.bf16.mxu0 0
    %983 = vmatmul.mubr.bf16.gmra.mrb[0].mxu0 %v943
    %v984 = vpop.f32.mrb[0].mxu0
    %v985 = vadd.f32 0.0, %v984
    %v986 = vpop.f32.mrb[0].mxu0
    %v987 = vpop.f32.mrb[0].mxu0
    %v988 = vadd.f32 0.0, %v987
    %v989 = vpop.f32.mrb[0].mxu0
    %990 = vdwg.mxu0
    %991 = vrot.lane.b32.xlu0 %v414, 32
    %v992 = vpop.permute.xlu0 %991
    %993 = vrot.lane.b32.xlu0 %v418, 32
    %v994 = vpop.permute.xlu0 %993
    %995 = vrot.lane.b32.xlu0 %v416, 32
    %v996 = vpop.permute.xlu0 %995
    %997 = vrot.lane.b32.xlu0 %v420, 32
    %v998 = vpop.permute.xlu0 %997
    %999 = vrot.lane.b32.xlu0 0.0, 32
    %v1000 = vpop.permute.xlu0 %999
    %v1001 = vsel %vm490, %v992, 0
    %v1003 = vsel %vm490, %v994, 0
    %v1005 = vsel %vm490, %v996, 0
    %v1007 = vsel %vm490, %v998, 0
    %v1009 = vsel %vm490, %v1000, 0
    %1011 = vmatprep.subr.mxu0 0.0
    %1012 = vmatpush1.xpose.msra.mxu0 %v1005
    %1013 = vmatprep.subr.mxu0 0.0
    %1014 = vmatpush1.xpose.msra.mxu0 %v1007
    %1015 = vmatprep.subr.mxu0 0.0
    %1016 = vmatpush1.xpose.msra.mxu0 %v1009
    %1017 = vmatprep.subr.mxu0 0.0
    %1018 = vmatpush1.xpose.msra.mxu0 %v1009
    %1019 = vmatprep.subr.mxu0 0.0
    %1020 = vmatpush1.xpose.msra.mxu0 %v1009
    %1021 = vmatprep.subr.mxu0 0.0
    %1022 = vmatpush1.xpose.msra.mxu0 %v1009
    %1023 = vmatprep.subr.mxu0 0.0
    %1024 = vmatpush1.xpose.msra.mxu0 %v1009
    %1025 = vmatprep.subr.mxu0 0.0
    %1026 = vmatpush1.xpose.msra.mxu0 %v1009
    %1027 = vmatprep.subr.mxu0 0.0
    %1028 = vmatpush1.xpose.msra.mxu0 %v1009
    %1029 = vmatprep.subr.mxu0 0.0
    %1030 = vmatpush1.xpose.msra.mxu0 %v1009
    %1031 = vmatprep.subr.mxu0 0.0
    %1032 = vmatpush1.xpose.msra.mxu0 %v1009
    %1033 = vmatprep.subr.mxu0 0.0
    %1034 = vmatpush1.xpose.msra.mxu0 %v1009
    %1035 = vmatprep.subr.mxu0 0.0
    %1036 = vmatpush1.xpose.msra.mxu0 %v1009
    %1037 = vmatprep.subr.mxu0 0.0
    %1038 = vmatpush1.xpose.msra.mxu0 %v1009
    %1039 = vmatprep.subr.mxu0 0.0
    %1040 = vmatpush1.xpose.msra.mxu0 %v1009
    %1041 = vmatprep.subr.mxu0 0.0
    %1042 = vmatpush1.xpose.msra.mxu0 %v1009
    %1043 = vmatprep.subr.mxu0 0.0
    %1044 = vmatpush1.xpose.msra.mxu0 0.0
    %1045 = vmatprep.subr.mxu0 0.0
    %1046 = vmatpush1.xpose.msra.mxu0 0.0
    %1047 = vmatprep.subr.mxu0 0.0
    %1048 = vmatpush1.xpose.msra.mxu0 0.0
    %1049 = vmatprep.subr.mxu0 0.0
    %1050 = vmatpush1.xpose.msra.mxu0 0.0
    %1051 = vmatprep.subr.mxu0 0.0
    %1052 = vmatpush1.xpose.msra.mxu0 0.0
    %1053 = vmatprep.subr.mxu0 0.0
    %1054 = vmatpush1.xpose.msra.mxu0 0.0
    %1055 = vmatprep.subr.mxu0 0.0
    %1056 = vmatpush1.xpose.msra.mxu0 0.0
    %1057 = vmatprep.subr.mxu0 0.0
    %1058 = vmatpush1.xpose.msra.mxu0 0.0
    %1059 = vmatprep.subr.mxu0 0.0
    %1060 = vmatpush1.xpose.msra.mxu0 0.0
    %1061 = vmatprep.subr.mxu0 0.0
    %1062 = vmatpush1.xpose.msra.mxu0 0.0
    %1063 = vmatprep.subr.mxu0 0.0
    %1064 = vmatpush1.xpose.msra.mxu0 0.0
    %1065 = vmatprep.subr.mxu0 0.0
    %1066 = vmatpush1.xpose.msra.mxu0 0.0
    %1067 = vmatprep.subr.mxu0 0.0
    %1068 = vmatpush1.xpose.msra.mxu0 0.0
    %1069 = vmatprep.subr.mxu0 0.0
    %1070 = vmatpush1.xpose.msra.mxu0 0.0
    %1071 = vmatprep.subr.mxu0 0.0
    %1072 = vmatpush1.xpose.msra.mxu0 0.0
    %1073 = vmatprep.subr.mxu0 0.0
    %1074 = vmatpush1.xpose.msra.mxu0 0.0
    %1075 = vmatprep.mubr.f32.mxu0 0.0
    %1076 = vmatmul.mubr.f32.gmra.mrb[0].mxu0 %v1001
    %v1077 = vpop.f32.mrb[0].mxu0
    %v1078 = vadd.f32 0.0, %v1077
    %v1079 = vpop.f32.mrb[0].mxu0
    %1080 = vmatprep.mubr.f32.mxu0 0.0
    %1081 = vmatmul.mubr.f32.gmra.mrb[0].mxu0 %v1003
    %v1082 = vpop.f32.mrb[0].mxu0
    %v1083 = vadd.f32 0.0, %v1082
    %v1084 = vpop.f32.mrb[0].mxu0
    %1085 = vdwg.mxu0
    %v1086 = vmul.f32 %v1078, 0.17677669
    %v1087 = vmul.f32 %v1083, 0.17677669
    %v1088 = vsel %vm486, %v1086, -1e+30
    %v1089 = vsel %vm487, %v1087, -1e+30
    %1090 = vmax.xlane.f32.xlu0 %v1088
    %v1091 = vpop.xlane.xlu0 %1090
    %1092 = vmax.xlane.f32.xlu0 %v1089
    %v1093 = vpop.xlane.xlu0 %1092
    %v1094 = vsub.f32 %v1088, %v1091
    %v1095 = vsub.f32 %v1089, %v1093
    %v1096 = vmul.f32 %v1094, 1.442695
    %v1097 = vpow.pop %v1096
    %v1098 = vmul.f32 %v1095, 1.442695
    %v1099 = vpow.pop %v1098
    %v1100 = vsel %vm486, %v1097, 0.0
    %v1101 = vsel %vm487, %v1099, 0.0
    %1102 = vadd.xlane.f32.xlu0 %v1100
    %v1103 = vpop.xlane.xlu0 %1102
    %1104 = vadd.xlane.f32.xlu0 %v1101
    %v1105 = vpop.xlane.xlu0 %1104
    %v1106 = vrcp.pop %v1103
    %v1107 = vrcp.pop %v1105
    %v1108 = vmul.f32 %v1100, %v1106
    %v1109 = vmul.f32 %v1101, %v1107
    %s1110 = scalar_lea.vmem [#allocation14], 48
    %1111 = vst [vmem:[%s1110] sm:$0xff] %v1108
    %1112 = vst [vmem:[%s1110 + $0x8] sm:$0xff] %v1109
    %v1113 = vpack.c.bf16 %v1109, %v1108
    %1114 = vrot.lane.b32.xlu0 %v488, 32
    %v1115 = vpop.permute.xlu0 %1114
    %1116 = vrot.lane.b32.xlu0 %v489, 32
    %v1117 = vpop.permute.xlu0 %1116
    %1120 = vmatprep.subr.bf16.mxu0 0
    %1121 = vmatpush1.bf16.msra.mxu0 %v1115
    %1122 = vmatprep.subr.bf16.mxu0 0
    %1123 = vmatpush1.bf16.msra.mxu0 %v1117
    %1124 = vmatprep.subr.bf16.mxu0 0
    %1125 = vmatpush1.bf16.msra.mxu0 %v1117
    %1126 = vmatprep.subr.bf16.mxu0 0
    %1127 = vmatpush1.bf16.msra.mxu0 %v1117
    %1128 = vmatprep.subr.bf16.mxu0 0
    %1129 = vmatpush1.bf16.msra.mxu0 %v1117
    %1130 = vmatprep.subr.bf16.mxu0 0
    %1131 = vmatpush1.bf16.msra.mxu0 %v1117
    %1132 = vmatprep.subr.bf16.mxu0 0
    %1133 = vmatpush1.bf16.msra.mxu0 %v1117
    %1134 = vmatprep.subr.bf16.mxu0 0
    %1135 = vmatpush1.bf16.msra.mxu0 %v1117
    %1136 = vmatprep.subr.bf16.mxu0 0
    %1137 = vmatpush1.bf16.msra.mxu0 0
    %1138 = vmatprep.subr.bf16.mxu0 0
    %1139 = vmatpush1.bf16.msra.mxu0 0
    %1140 = vmatprep.subr.bf16.mxu0 0
    %1141 = vmatpush1.bf16.msra.mxu0 0
    %1142 = vmatprep.subr.bf16.mxu0 0
    %1143 = vmatpush1.bf16.msra.mxu0 0
    %1144 = vmatprep.subr.bf16.mxu0 0
    %1145 = vmatpush1.bf16.msra.mxu0 0
    %1146 = vmatprep.subr.bf16.mxu0 0
    %1147 = vmatpush1.bf16.msra.mxu0 0
    %1148 = vmatprep.subr.bf16.mxu0 0
    %1149 = vmatpush1.bf16.msra.mxu0 0
    %1150 = vmatprep.subr.bf16.mxu0 0
    %1151 = vmatpush1.bf16.msra.mxu0 0
    %1152 = vmatprep.mubr.bf16.mxu0 0
    %1153 = vmatmul.mubr.bf16.gmra.mrb[0].mxu0 %v1113
    %v1154 = vpop.f32.mrb[0].mxu0
    %v1155 = vadd.f32 0.0, %v1154
    %v1156 = vpop.f32.mrb[0].mxu0
    %v1157 = vpop.f32.mrb[0].mxu0
    %v1158 = vadd.f32 0.0, %v1157
    %v1159 = vpop.f32.mrb[0].mxu0
    %1160 = vdwg.mxu0
    %1163 = vrot.lane.b32.xlu0 %v815, 32
    %v1164 = vpop.permute.xlu0 %1163
    %1165 = vrot.lane.b32.xlu0 %v818, 32
    %v1166 = vpop.permute.xlu0 %1165
    %1171 = vrot.lane.b32.xlu0 %v985, 64
    %v1172 = vpop.permute.xlu0 %1171
    %1173 = vrot.lane.b32.xlu0 %v988, 64
    %v1174 = vpop.permute.xlu0 %1173
    %1179 = vrot.lane.b32.xlu0 %v1155, 96
    %v1180 = vpop.permute.xlu0 %1179
    %1181 = vrot.lane.b32.xlu0 %v1158, 96
    %v1182 = vpop.permute.xlu0 %1181
    %v1185 = vsel %vm490, %v643, %v1164
    %v1186 = vsel %vm490, %v646, %v1166
    %vm1187 = vcmask 523264
    %v1188 = vsel %vm1187, %v1185, %v1172
    %v1189 = vsel %vm1187, %v1186, %v1174
    %vm1190 = vcmask 785408
    %v1191 = vsel %vm1190, %v1188, %v1180
    %v1192 = vsel %vm1190, %v1189, %v1182
    %v1193 = vpack.c.bf16 %v478, %v475
    %v1195 = vsel %vm490, %v424, 0
    %v1198 = vsel %vm490, %v428, 0
    %v1201 = vsel %vm490, %v426, 0
    %v1204 = vsel %vm490, %v430, 0
    %1206 = vmatprep.subr.mxu0 0.0
    %1207 = vmatpush1.xpose.msra.mxu0 %v1201
    %1208 = vmatprep.subr.mxu0 0.0
    %1209 = vmatpush1.xpose.msra.mxu0 %v1204
    %1210 = vmatprep.subr.mxu0 0.0
    %1211 = vmatpush1.xpose.msra.mxu0 %v504
    %1212 = vmatprep.subr.mxu0 0.0
    %1213 = vmatpush1.xpose.msra.mxu0 %v504
    %1214 = vmatprep.subr.mxu0 0.0
    %1215 = vmatpush1.xpose.msra.mxu0 %v504
    %1216 = vmatprep.subr.mxu0 0.0
    %1217 = vmatpush1.xpose.msra.mxu0 %v504
    %1218 = vmatprep.subr.mxu0 0.0
    %1219 = vmatpush1.xpose.msra.mxu0 %v504
    %1220 = vmatprep.subr.mxu0 0.0
    %1221 = vmatpush1.xpose.msra.mxu0 %v504
    %1222 = vmatprep.subr.mxu0 0.0
    %1223 = vmatpush1.xpose.msra.mxu0 %v504
    %1224 = vmatprep.subr.mxu0 0.0
    %1225 = vmatpush1.xpose.msra.mxu0 %v504
    %1226 = vmatprep.subr.mxu0 0.0
    %1227 = vmatpush1.xpose.msra.mxu0 %v504
    %1228 = vmatprep.subr.mxu0 0.0
    %1229 = vmatpush1.xpose.msra.mxu0 %v504
    %1230 = vmatprep.subr.mxu0 0.0
    %1231 = vmatpush1.xpose.msra.mxu0 %v504
    %1232 = vmatprep.subr.mxu0 0.0
    %1233 = vmatpush1.xpose.msra.mxu0 %v504
    %1234 = vmatprep.subr.mxu0 0.0
    %1235 = vmatpush1.xpose.msra.mxu0 %v504
    %1236 = vmatprep.subr.mxu0 0.0
    %1237 = vmatpush1.xpose.msra.mxu0 %v504
    %1238 = vmatprep.subr.mxu0 0.0
    %1239 = vmatpush1.xpose.msra.mxu0 0.0
    %1240 = vmatprep.subr.mxu0 0.0
    %1241 = vmatpush1.xpose.msra.mxu0 0.0
    %1242 = vmatprep.subr.mxu0 0.0
    %1243 = vmatpush1.xpose.msra.mxu0 0.0
    %1244 = vmatprep.subr.mxu0 0.0
    %1245 = vmatpush1.xpose.msra.mxu0 0.0
    %1246 = vmatprep.subr.mxu0 0.0
    %1247 = vmatpush1.xpose.msra.mxu0 0.0
    %1248 = vmatprep.subr.mxu0 0.0
    %1249 = vmatpush1.xpose.msra.mxu0 0.0
    %1250 = vmatprep.subr.mxu0 0.0
    %1251 = vmatpush1.xpose.msra.mxu0 0.0
    %1252 = vmatprep.subr.mxu0 0.0
    %1253 = vmatpush1.xpose.msra.mxu0 0.0
    %1254 = vmatprep.subr.mxu0 0.0
    %1255 = vmatpush1.xpose.msra.mxu0 0.0
    %1256 = vmatprep.subr.mxu0 0.0
    %1257 = vmatpush1.xpose.msra.mxu0 0.0
    %1258 = vmatprep.subr.mxu0 0.0
    %1259 = vmatpush1.xpose.msra.mxu0 0.0
    %1260 = vmatprep.subr.mxu0 0.0
    %1261 = vmatpush1.xpose.msra.mxu0 0.0
    %1262 = vmatprep.subr.mxu0 0.0
    %1263 = vmatpush1.xpose.msra.mxu0 0.0
    %1264 = vmatprep.subr.mxu0 0.0
    %1265 = vmatpush1.xpose.msra.mxu0 0.0
    %1266 = vmatprep.subr.mxu0 0.0
    %1267 = vmatpush1.xpose.msra.mxu0 0.0
    %1268 = vmatprep.subr.mxu0 0.0
    %1269 = vmatpush1.xpose.msra.mxu0 0.0
    %1270 = vmatprep.mubr.f32.mxu0 0.0
    %1271 = vmatmul.mubr.f32.gmra.mrb[0].mxu0 %v1195
    %v1272 = vpop.f32.mrb[0].mxu0
    %v1273 = vadd.f32 0.0, %v1272
    %v1274 = vpop.f32.mrb[0].mxu0
    %1275 = vmatprep.mubr.f32.mxu0 0.0
    %1276 = vmatmul.mubr.f32.gmra.mrb[0].mxu0 %v1198
    %v1277 = vpop.f32.mrb[0].mxu0
    %v1278 = vadd.f32 0.0, %v1277
    %v1279 = vpop.f32.mrb[0].mxu0
    %1280 = vdwg.mxu0
    %v1281 = vmul.f32 %v1273, 0.17677669
    %v1282 = vmul.f32 %v1278, 0.17677669
    %v1283 = vsel %vm486, %v1281, -1e+30
    %v1284 = vsel %vm487, %v1282, -1e+30
    %1285 = vmax.xlane.f32.xlu0 %v1283
    %v1286 = vpop.xlane.xlu0 %1285
    %1287 = vmax.xlane.f32.xlu0 %v1284
    %v1288 = vpop.xlane.xlu0 %1287
    %v1289 = vsub.f32 %v1283, %v1286
    %v1290 = vsub.f32 %v1284, %v1288
    %v1291 = vmul.f32 %v1289, 1.442695
    %v1292 = vpow.pop %v1291
    %v1293 = vmul.f32 %v1290, 1.442695
    %v1294 = vpow.pop %v1293
    %v1295 = vsel %vm486, %v1292, 0.0
    %v1296 = vsel %vm487, %v1294, 0.0
    %1297 = vadd.xlane.f32.xlu0 %v1295
    %v1298 = vpop.xlane.xlu0 %1297
    %1299 = vadd.xlane.f32.xlu0 %v1296
    %v1300 = vpop.xlane.xlu0 %1299
    %v1301 = vrcp.pop %v1298
    %v1302 = vrcp.pop %v1300
    %v1303 = vmul.f32 %v1295, %v1301
    %v1304 = vmul.f32 %v1296, %v1302
    %s1305 = scalar_lea.vmem [#allocation14], 64
    %1306 = vst [vmem:[%s1305] sm:$0xff] %v1303
    %1307 = vst [vmem:[%s1305 + $0x8] sm:$0xff] %v1304
    %v1308 = vpack.c.bf16 %v1304, %v1303
    %1309 = vmatprep.subr.bf16.mxu0 0
    %1310 = vmatpush1.bf16.msra.mxu0 %v1193
    %1311 = vmatprep.subr.bf16.mxu0 0
    %1312 = vmatpush1.bf16.msra.mxu0 %v489
    %1313 = vmatprep.subr.bf16.mxu0 0
    %1314 = vmatpush1.bf16.msra.mxu0 %v489
    %1315 = vmatprep.subr.bf16.mxu0 0
    %1316 = vmatpush1.bf16.msra.mxu0 %v489
    %1317 = vmatprep.subr.bf16.mxu0 0
    %1318 = vmatpush1.bf16.msra.mxu0 %v489
    %1319 = vmatprep.subr.bf16.mxu0 0
    %1320 = vmatpush1.bf16.msra.mxu0 %v489
    %1321 = vmatprep.subr.bf16.mxu0 0
    %1322 = vmatpush1.bf16.msra.mxu0 %v489
    %1323 = vmatprep.subr.bf16.mxu0 0
    %1324 = vmatpush1.bf16.msra.mxu0 %v489
    %1325 = vmatprep.subr.bf16.mxu0 0
    %1326 = vmatpush1.bf16.msra.mxu0 0
    %1327 = vmatprep.subr.bf16.mxu0 0
    %1328 = vmatpush1.bf16.msra.mxu0 0
    %1329 = vmatprep.subr.bf16.mxu0 0
    %1330 = vmatpush1.bf16.msra.mxu0 0
    %1331 = vmatprep.subr.bf16.mxu0 0
    %1332 = vmatpush1.bf16.msra.mxu0 0
    %1333 = vmatprep.subr.bf16.mxu0 0
    %1334 = vmatpush1.bf16.msra.mxu0 0
    %1335 = vmatprep.subr.bf16.mxu0 0
    %1336 = vmatpush1.bf16.msra.mxu0 0
    %1337 = vmatprep.subr.bf16.mxu0 0
    %1338 = vmatpush1.bf16.msra.mxu0 0
    %1339 = vmatprep.subr.bf16.mxu0 0
    %1340 = vmatpush1.bf16.msra.mxu0 0
    %1341 = vmatprep.mubr.bf16.mxu0 0
    %1342 = vmatmul.mubr.bf16.gmra.mrb[0].mxu0 %v1308
    %v1343 = vpop.f32.mrb[0].mxu0
    %v1344 = vadd.f32 0.0, %v1343
    %v1345 = vpop.f32.mrb[0].mxu0
    %v1346 = vpop.f32.mrb[0].mxu0
    %v1347 = vadd.f32 0.0, %v1346
    %v1348 = vpop.f32.mrb[0].mxu0
    %1349 = vdwg.mxu0
    %1350 = vrot.lane.b32.xlu0 %v424, 96
    %v1351 = vpop.permute.xlu0 %1350
    %1352 = vrot.lane.b32.xlu0 %v428, 96
    %v1353 = vpop.permute.xlu0 %1352
    %1354 = vrot.lane.b32.xlu0 %v426, 96
    %v1355 = vpop.permute.xlu0 %1354
    %1356 = vrot.lane.b32.xlu0 %v430, 96
    %v1357 = vpop.permute.xlu0 %1356
    %v1358 = vsel %vm490, %v1351, 0
    %v1360 = vsel %vm490, %v1353, 0
    %v1362 = vsel %vm490, %v1355, 0
    %v1364 = vsel %vm490, %v1357, 0
    %1366 = vmatprep.subr.mxu0 0.0
    %1367 = vmatpush1.xpose.msra.mxu0 %v1362
    %1368 = vmatprep.subr.mxu0 0.0
    %1369 = vmatpush1.xpose.msra.mxu0 %v1364
    %1370 = vmatprep.subr.mxu0 0.0
    %1371 = vmatpush1.xpose.msra.mxu0 %v667
    %1372 = vmatprep.subr.mxu0 0.0
    %1373 = vmatpush1.xpose.msra.mxu0 %v667
    %1374 = vmatprep.subr.mxu0 0.0
    %1375 = vmatpush1.xpose.msra.mxu0 %v667
    %1376 = vmatprep.subr.mxu0 0.0
    %1377 = vmatpush1.xpose.msra.mxu0 %v667
    %1378 = vmatprep.subr.mxu0 0.0
    %1379 = vmatpush1.xpose.msra.mxu0 %v667
    %1380 = vmatprep.subr.mxu0 0.0
    %1381 = vmatpush1.xpose.msra.mxu0 %v667
    %1382 = vmatprep.subr.mxu0 0.0
    %1383 = vmatpush1.xpose.msra.mxu0 %v667
    %1384 = vmatprep.subr.mxu0 0.0
    %1385 = vmatpush1.xpose.msra.mxu0 %v667
    %1386 = vmatprep.subr.mxu0 0.0
    %1387 = vmatpush1.xpose.msra.mxu0 %v667
    %1388 = vmatprep.subr.mxu0 0.0
    %1389 = vmatpush1.xpose.msra.mxu0 %v667
    %1390 = vmatprep.subr.mxu0 0.0
    %1391 = vmatpush1.xpose.msra.mxu0 %v667
    %1392 = vmatprep.subr.mxu0 0.0
    %1393 = vmatpush1.xpose.msra.mxu0 %v667
    %1394 = vmatprep.subr.mxu0 0.0
    %1395 = vmatpush1.xpose.msra.mxu0 %v667
    %1396 = vmatprep.subr.mxu0 0.0
    %1397 = vmatpush1.xpose.msra.mxu0 %v667
    %1398 = vmatprep.subr.mxu0 0.0
    %1399 = vmatpush1.xpose.msra.mxu0 0.0
    %1400 = vmatprep.subr.mxu0 0.0
    %1401 = vmatpush1.xpose.msra.mxu0 0.0
    %1402 = vmatprep.subr.mxu0 0.0
    %1403 = vmatpush1.xpose.msra.mxu0 0.0
    %1404 = vmatprep.subr.mxu0 0.0
    %1405 = vmatpush1.xpose.msra.mxu0 0.0
    %1406 = vmatprep.subr.mxu0 0.0
    %1407 = vmatpush1.xpose.msra.mxu0 0.0
    %1408 = vmatprep.subr.mxu0 0.0
    %1409 = vmatpush1.xpose.msra.mxu0 0.0
    %1410 = vmatprep.subr.mxu0 0.0
    %1411 = vmatpush1.xpose.msra.mxu0 0.0
    %1412 = vmatprep.subr.mxu0 0.0
    %1413 = vmatpush1.xpose.msra.mxu0 0.0
    %1414 = vmatprep.subr.mxu0 0.0
    %1415 = vmatpush1.xpose.msra.mxu0 0.0
    %1416 = vmatprep.subr.mxu0 0.0
    %1417 = vmatpush1.xpose.msra.mxu0 0.0
    %1418 = vmatprep.subr.mxu0 0.0
    %1419 = vmatpush1.xpose.msra.mxu0 0.0
    %1420 = vmatprep.subr.mxu0 0.0
    %1421 = vmatpush1.xpose.msra.mxu0 0.0
    %1422 = vmatprep.subr.mxu0 0.0
    %1423 = vmatpush1.xpose.msra.mxu0 0.0
    %1424 = vmatprep.subr.mxu0 0.0
    %1425 = vmatpush1.xpose.msra.mxu0 0.0
    %1426 = vmatprep.subr.mxu0 0.0
    %1427 = vmatpush1.xpose.msra.mxu0 0.0
    %1428 = vmatprep.subr.mxu0 0.0
    %1429 = vmatpush1.xpose.msra.mxu0 0.0
    %1430 = vmatprep.mubr.f32.mxu0 0.0
    %1431 = vmatmul.mubr.f32.gmra.mrb[0].mxu0 %v1358
    %v1432 = vpop.f32.mrb[0].mxu0
    %v1433 = vadd.f32 0.0, %v1432
    %v1434 = vpop.f32.mrb[0].mxu0
    %1435 = vmatprep.mubr.f32.mxu0 0.0
    %1436 = vmatmul.mubr.f32.gmra.mrb[0].mxu0 %v1360
    %v1437 = vpop.f32.mrb[0].mxu0
    %v1438 = vadd.f32 0.0, %v1437
    %v1439 = vpop.f32.mrb[0].mxu0
    %1440 = vdwg.mxu0
    %v1441 = vmul.f32 %v1433, 0.17677669
    %v1442 = vmul.f32 %v1438, 0.17677669
    %v1443 = vsel %vm486, %v1441, -1e+30
    %v1444 = vsel %vm487, %v1442, -1e+30
    %1445 = vmax.xlane.f32.xlu0 %v1443
    %v1446 = vpop.xlane.xlu0 %1445
    %1447 = vmax.xlane.f32.xlu0 %v1444
    %v1448 = vpop.xlane.xlu0 %1447
    %v1449 = vsub.f32 %v1443, %v1446
    %v1450 = vsub.f32 %v1444, %v1448
    %v1451 = vmul.f32 %v1449, 1.442695
    %v1452 = vpow.pop %v1451
    %v1453 = vmul.f32 %v1450, 1.442695
    %v1454 = vpow.pop %v1453
    %v1455 = vsel %vm486, %v1452, 0.0
    %v1456 = vsel %vm487, %v1454, 0.0
    %1457 = vadd.xlane.f32.xlu0 %v1455
    %v1458 = vpop.xlane.xlu0 %1457
    %1459 = vadd.xlane.f32.xlu0 %v1456
    %v1460 = vpop.xlane.xlu0 %1459
    %v1461 = vrcp.pop %v1458
    %v1462 = vrcp.pop %v1460
    %v1463 = vmul.f32 %v1455, %v1461
    %v1464 = vmul.f32 %v1456, %v1462
    %s1465 = scalar_lea.vmem [#allocation14], 80
    %1466 = vst [vmem:[%s1465] sm:$0xff] %v1463
    %1467 = vst [vmem:[%s1465 + $0x8] sm:$0xff] %v1464
    %v1468 = vpack.c.bf16 %v1464, %v1463
    %1470 = vrot.lane.b32.xlu0 %v1193, 96
    %v1471 = vpop.permute.xlu0 %1470
    %1473 = vmatprep.subr.bf16.mxu0 0
    %1474 = vmatpush1.bf16.msra.mxu0 %v1471
    %1475 = vmatprep.subr.bf16.mxu0 0
    %1476 = vmatpush1.bf16.msra.mxu0 %v777
    %1477 = vmatprep.subr.bf16.mxu0 0
    %1478 = vmatpush1.bf16.msra.mxu0 %v777
    %1479 = vmatprep.subr.bf16.mxu0 0
    %1480 = vmatpush1.bf16.msra.mxu0 %v777
    %1481 = vmatprep.subr.bf16.mxu0 0
    %1482 = vmatpush1.bf16.msra.mxu0 %v777
    %1483 = vmatprep.subr.bf16.mxu0 0
    %1484 = vmatpush1.bf16.msra.mxu0 %v777
    %1485 = vmatprep.subr.bf16.mxu0 0
    %1486 = vmatpush1.bf16.msra.mxu0 %v777
    %1487 = vmatprep.subr.bf16.mxu0 0
    %1488 = vmatpush1.bf16.msra.mxu0 %v777
    %1489 = vmatprep.subr.bf16.mxu0 0
    %1490 = vmatpush1.bf16.msra.mxu0 0
    %1491 = vmatprep.subr.bf16.mxu0 0
    %1492 = vmatpush1.bf16.msra.mxu0 0
    %1493 = vmatprep.subr.bf16.mxu0 0
    %1494 = vmatpush1.bf16.msra.mxu0 0
    %1495 = vmatprep.subr.bf16.mxu0 0
    %1496 = vmatpush1.bf16.msra.mxu0 0
    %1497 = vmatprep.subr.bf16.mxu0 0
    %1498 = vmatpush1.bf16.msra.mxu0 0
    %1499 = vmatprep.subr.bf16.mxu0 0
    %1500 = vmatpush1.bf16.msra.mxu0 0
    %1501 = vmatprep.subr.bf16.mxu0 0
    %1502 = vmatpush1.bf16.msra.mxu0 0
    %1503 = vmatprep.subr.bf16.mxu0 0
    %1504 = vmatpush1.bf16.msra.mxu0 0
    %1505 = vmatprep.mubr.bf16.mxu0 0
    %1506 = vmatmul.mubr.bf16.gmra.mrb[0].mxu0 %v1468
    %v1507 = vpop.f32.mrb[0].mxu0
    %v1508 = vadd.f32 0.0, %v1507
    %v1509 = vpop.f32.mrb[0].mxu0
    %v1510 = vpop.f32.mrb[0].mxu0
    %v1511 = vadd.f32 0.0, %v1510
    %v1512 = vpop.f32.mrb[0].mxu0
    %1513 = vdwg.mxu0
    %1514 = vrot.lane.b32.xlu0 %v424, 64
    %v1515 = vpop.permute.xlu0 %1514
    %1516 = vrot.lane.b32.xlu0 %v428, 64
    %v1517 = vpop.permute.xlu0 %1516
    %1518 = vrot.lane.b32.xlu0 %v426, 64
    %v1519 = vpop.permute.xlu0 %1518
    %1520 = vrot.lane.b32.xlu0 %v430, 64
    %v1521 = vpop.permute.xlu0 %1520
    %v1522 = vsel %vm490, %v1515, 0
    %v1524 = vsel %vm490, %v1517, 0
    %v1526 = vsel %vm490, %v1519, 0
    %v1528 = vsel %vm490, %v1521, 0
    %1530 = vmatprep.subr.mxu0 0.0
    %1531 = vmatpush1.xpose.msra.mxu0 %v1526
    %1532 = vmatprep.subr.mxu0 0.0
    %1533 = vmatpush1.xpose.msra.mxu0 %v1528
    %1534 = vmatprep.subr.mxu0 0.0
    %1535 = vmatpush1.xpose.msra.mxu0 %v839
    %1536 = vmatprep.subr.mxu0 0.0
    %1537 = vmatpush1.xpose.msra.mxu0 %v839
    %1538 = vmatprep.subr.mxu0 0.0
    %1539 = vmatpush1.xpose.msra.mxu0 %v839
    %1540 = vmatprep.subr.mxu0 0.0
    %1541 = vmatpush1.xpose.msra.mxu0 %v839
    %1542 = vmatprep.subr.mxu0 0.0
    %1543 = vmatpush1.xpose.msra.mxu0 %v839
    %1544 = vmatprep.subr.mxu0 0.0
    %1545 = vmatpush1.xpose.msra.mxu0 %v839
    %1546 = vmatprep.subr.mxu0 0.0
    %1547 = vmatpush1.xpose.msra.mxu0 %v839
    %1548 = vmatprep.subr.mxu0 0.0
    %1549 = vmatpush1.xpose.msra.mxu0 %v839
    %1550 = vmatprep.subr.mxu0 0.0
    %1551 = vmatpush1.xpose.msra.mxu0 %v839
    %1552 = vmatprep.subr.mxu0 0.0
    %1553 = vmatpush1.xpose.msra.mxu0 %v839
    %1554 = vmatprep.subr.mxu0 0.0
    %1555 = vmatpush1.xpose.msra.mxu0 %v839
    %1556 = vmatprep.subr.mxu0 0.0
    %1557 = vmatpush1.xpose.msra.mxu0 %v839
    %1558 = vmatprep.subr.mxu0 0.0
    %1559 = vmatpush1.xpose.msra.mxu0 %v839
    %1560 = vmatprep.subr.mxu0 0.0
    %1561 = vmatpush1.xpose.msra.mxu0 %v839
    %1562 = vmatprep.subr.mxu0 0.0
    %1563 = vmatpush1.xpose.msra.mxu0 0.0
    %1564 = vmatprep.subr.mxu0 0.0
    %1565 = vmatpush1.xpose.msra.mxu0 0.0
    %1566 = vmatprep.subr.mxu0 0.0
    %1567 = vmatpush1.xpose.msra.mxu0 0.0
    %1568 = vmatprep.subr.mxu0 0.0
    %1569 = vmatpush1.xpose.msra.mxu0 0.0
    %1570 = vmatprep.subr.mxu0 0.0
    %1571 = vmatpush1.xpose.msra.mxu0 0.0
    %1572 = vmatprep.subr.mxu0 0.0
    %1573 = vmatpush1.xpose.msra.mxu0 0.0
    %1574 = vmatprep.subr.mxu0 0.0
    %1575 = vmatpush1.xpose.msra.mxu0 0.0
    %1576 = vmatprep.subr.mxu0 0.0
    %1577 = vmatpush1.xpose.msra.mxu0 0.0
    %1578 = vmatprep.subr.mxu0 0.0
    %1579 = vmatpush1.xpose.msra.mxu0 0.0
    %1580 = vmatprep.subr.mxu0 0.0
    %1581 = vmatpush1.xpose.msra.mxu0 0.0
    %1582 = vmatprep.subr.mxu0 0.0
    %1583 = vmatpush1.xpose.msra.mxu0 0.0
    %1584 = vmatprep.subr.mxu0 0.0
    %1585 = vmatpush1.xpose.msra.mxu0 0.0
    %1586 = vmatprep.subr.mxu0 0.0
    %1587 = vmatpush1.xpose.msra.mxu0 0.0
    %1588 = vmatprep.subr.mxu0 0.0
    %1589 = vmatpush1.xpose.msra.mxu0 0.0
    %1590 = vmatprep.subr.mxu0 0.0
    %1591 = vmatpush1.xpose.msra.mxu0 0.0
    %1592 = vmatprep.subr.mxu0 0.0
    %1593 = vmatpush1.xpose.msra.mxu0 0.0
    %1594 = vmatprep.mubr.f32.mxu0 0.0
    %1595 = vmatmul.mubr.f32.gmra.mrb[0].mxu0 %v1522
    %v1596 = vpop.f32.mrb[0].mxu0
    %v1597 = vadd.f32 0.0, %v1596
    %v1598 = vpop.f32.mrb[0].mxu0
    %1599 = vmatprep.mubr.f32.mxu0 0.0
    %1600 = vmatmul.mubr.f32.gmra.mrb[0].mxu0 %v1524
    %v1601 = vpop.f32.mrb[0].mxu0
    %v1602 = vadd.f32 0.0, %v1601
    %v1603 = vpop.f32.mrb[0].mxu0
    %1604 = vdwg.mxu0
    %v1605 = vmul.f32 %v1597, 0.17677669
    %v1606 = vmul.f32 %v1602, 0.17677669
    %v1607 = vsel %vm486, %v1605, -1e+30
    %v1608 = vsel %vm487, %v1606, -1e+30
    %1609 = vmax.xlane.f32.xlu0 %v1607
    %v1610 = vpop.xlane.xlu0 %1609
    %1611 = vmax.xlane.f32.xlu0 %v1608
    %v1612 = vpop.xlane.xlu0 %1611
    %v1613 = vsub.f32 %v1607, %v1610
    %v1614 = vsub.f32 %v1608, %v1612
    %v1615 = vmul.f32 %v1613, 1.442695
    %v1616 = vpow.pop %v1615
    %v1617 = vmul.f32 %v1614, 1.442695
    %v1618 = vpow.pop %v1617
    %v1619 = vsel %vm486, %v1616, 0.0
    %v1620 = vsel %vm487, %v1618, 0.0
    %1621 = vadd.xlane.f32.xlu0 %v1619
    %v1622 = vpop.xlane.xlu0 %1621
    %1623 = vadd.xlane.f32.xlu0 %v1620
    %v1624 = vpop.xlane.xlu0 %1623
    %v1625 = vrcp.pop %v1622
    %v1626 = vrcp.pop %v1624
    %v1627 = vmul.f32 %v1619, %v1625
    %v1628 = vmul.f32 %v1620, %v1626
    %s1629 = scalar_lea.vmem [#allocation14], 96
    %1630 = vst [vmem:[%s1629] sm:$0xff] %v1627
    %1631 = vst [vmem:[%s1629 + $0x8] sm:$0xff] %v1628
    %v1632 = vpack.c.bf16 %v1628, %v1627
    %1633 = vrot.lane.b32.xlu0 %v1193, 64
    %v1634 = vpop.permute.xlu0 %1633
    %1636 = vmatprep.subr.bf16.mxu0 0
    %1637 = vmatpush1.bf16.msra.mxu0 %v1634
    %1638 = vmatprep.subr.bf16.mxu0 0
    %1639 = vmatpush1.bf16.msra.mxu0 %v947
    %1640 = vmatprep.subr.bf16.mxu0 0
    %1641 = vmatpush1.bf16.msra.mxu0 %v947
    %1642 = vmatprep.subr.bf16.mxu0 0
    %1643 = vmatpush1.bf16.msra.mxu0 %v947
    %1644 = vmatprep.subr.bf16.mxu0 0
    %1645 = vmatpush1.bf16.msra.mxu0 %v947
    %1646 = vmatprep.subr.bf16.mxu0 0
    %1647 = vmatpush1.bf16.msra.mxu0 %v947
    %1648 = vmatprep.subr.bf16.mxu0 0
    %1649 = vmatpush1.bf16.msra.mxu0 %v947
    %1650 = vmatprep.subr.bf16.mxu0 0
    %1651 = vmatpush1.bf16.msra.mxu0 %v947
    %1652 = vmatprep.subr.bf16.mxu0 0
    %1653 = vmatpush1.bf16.msra.mxu0 0
    %1654 = vmatprep.subr.bf16.mxu0 0
    %1655 = vmatpush1.bf16.msra.mxu0 0
    %1656 = vmatprep.subr.bf16.mxu0 0
    %1657 = vmatpush1.bf16.msra.mxu0 0
    %1658 = vmatprep.subr.bf16.mxu0 0
    %1659 = vmatpush1.bf16.msra.mxu0 0
    %1660 = vmatprep.subr.bf16.mxu0 0
    %1661 = vmatpush1.bf16.msra.mxu0 0
    %1662 = vmatprep.subr.bf16.mxu0 0
    %1663 = vmatpush1.bf16.msra.mxu0 0
    %1664 = vmatprep.subr.bf16.mxu0 0
    %1665 = vmatpush1.bf16.msra.mxu0 0
    %1666 = vmatprep.subr.bf16.mxu0 0
    %1667 = vmatpush1.bf16.msra.mxu0 0
    %1668 = vmatprep.mubr.bf16.mxu0 0
    %1669 = vmatmul.mubr.bf16.gmra.mrb[0].mxu0 %v1632
    %v1670 = vpop.f32.mrb[0].mxu0
    %v1671 = vadd.f32 0.0, %v1670
    %v1672 = vpop.f32.mrb[0].mxu0
    %v1673 = vpop.f32.mrb[0].mxu0
    %v1674 = vadd.f32 0.0, %v1673
    %v1675 = vpop.f32.mrb[0].mxu0
    %1676 = vdwg.mxu0
    %1677 = vrot.lane.b32.xlu0 %v424, 32
    %v1678 = vpop.permute.xlu0 %1677
    %1679 = vrot.lane.b32.xlu0 %v428, 32
    %v1680 = vpop.permute.xlu0 %1679
    %1681 = vrot.lane.b32.xlu0 %v426, 32
    %v1682 = vpop.permute.xlu0 %1681
    %1683 = vrot.lane.b32.xlu0 %v430, 32
    %v1684 = vpop.permute.xlu0 %1683
    %v1685 = vsel %vm490, %v1678, 0
    %v1687 = vsel %vm490, %v1680, 0
    %v1689 = vsel %vm490, %v1682, 0
    %v1691 = vsel %vm490, %v1684, 0
    %1693 = vmatprep.subr.mxu0 0.0
    %1694 = vmatpush1.xpose.msra.mxu0 %v1689
    %1695 = vmatprep.subr.mxu0 0.0
    %1696 = vmatpush1.xpose.msra.mxu0 %v1691
    %1697 = vmatprep.subr.mxu0 0.0
    %1698 = vmatpush1.xpose.msra.mxu0 %v1009
    %1699 = vmatprep.subr.mxu0 0.0
    %1700 = vmatpush1.xpose.msra.mxu0 %v1009
    %1701 = vmatprep.subr.mxu0 0.0
    %1702 = vmatpush1.xpose.msra.mxu0 %v1009
    %1703 = vmatprep.subr.mxu0 0.0
    %1704 = vmatpush1.xpose.msra.mxu0 %v1009
    %1705 = vmatprep.subr.mxu0 0.0
    %1706 = vmatpush1.xpose.msra.mxu0 %v1009
    %1707 = vmatprep.subr.mxu0 0.0
    %1708 = vmatpush1.xpose.msra.mxu0 %v1009
    %1709 = vmatprep.subr.mxu0 0.0
    %1710 = vmatpush1.xpose.msra.mxu0 %v1009
    %1711 = vmatprep.subr.mxu0 0.0
    %1712 = vmatpush1.xpose.msra.mxu0 %v1009
    %1713 = vmatprep.subr.mxu0 0.0
    %1714 = vmatpush1.xpose.msra.mxu0 %v1009
    %1715 = vmatprep.subr.mxu0 0.0
    %1716 = vmatpush1.xpose.msra.mxu0 %v1009
    %1717 = vmatprep.subr.mxu0 0.0
    %1718 = vmatpush1.xpose.msra.mxu0 %v1009
    %1719 = vmatprep.subr.mxu0 0.0
    %1720 = vmatpush1.xpose.msra.mxu0 %v1009
    %1721 = vmatprep.subr.mxu0 0.0
    %1722 = vmatpush1.xpose.msra.mxu0 %v1009
    %1723 = vmatprep.subr.mxu0 0.0
    %1724 = vmatpush1.xpose.msra.mxu0 %v1009
    %1725 = vmatprep.subr.mxu0 0.0
    %1726 = vmatpush1.xpose.msra.mxu0 0.0
    %1727 = vmatprep.subr.mxu0 0.0
    %1728 = vmatpush1.xpose.msra.mxu0 0.0
    %1729 = vmatprep.subr.mxu0 0.0
    %1730 = vmatpush1.xpose.msra.mxu0 0.0
    %1731 = vmatprep.subr.mxu0 0.0
    %1732 = vmatpush1.xpose.msra.mxu0 0.0
    %1733 = vmatprep.subr.mxu0 0.0
    %1734 = vmatpush1.xpose.msra.mxu0 0.0
    %1735 = vmatprep.subr.mxu0 0.0
    %1736 = vmatpush1.xpose.msra.mxu0 0.0
    %1737 = vmatprep.subr.mxu0 0.0
    %1738 = vmatpush1.xpose.msra.mxu0 0.0
    %1739 = vmatprep.subr.mxu0 0.0
    %1740 = vmatpush1.xpose.msra.mxu0 0.0
    %1741 = vmatprep.subr.mxu0 0.0
    %1742 = vmatpush1.xpose.msra.mxu0 0.0
    %1743 = vmatprep.subr.mxu0 0.0
    %1744 = vmatpush1.xpose.msra.mxu0 0.0
    %1745 = vmatprep.subr.mxu0 0.0
    %1746 = vmatpush1.xpose.msra.mxu0 0.0
    %1747 = vmatprep.subr.mxu0 0.0
    %1748 = vmatpush1.xpose.msra.mxu0 0.0
    %1749 = vmatprep.subr.mxu0 0.0
    %1750 = vmatpush1.xpose.msra.mxu0 0.0
    %1751 = vmatprep.subr.mxu0 0.0
    %1752 = vmatpush1.xpose.msra.mxu0 0.0
    %1753 = vmatprep.subr.mxu0 0.0
    %1754 = vmatpush1.xpose.msra.mxu0 0.0
    %1755 = vmatprep.subr.mxu0 0.0
    %1756 = vmatpush1.xpose.msra.mxu0 0.0
    %1757 = vmatprep.mubr.f32.mxu0 0.0
    %1758 = vmatmul.mubr.f32.gmra.mrb[0].mxu0 %v1685
    %v1759 = vpop.f32.mrb[0].mxu0
    %v1760 = vadd.f32 0.0, %v1759
    %v1761 = vpop.f32.mrb[0].mxu0
    %1762 = vmatprep.mubr.f32.mxu0 0.0
    %1763 = vmatmul.mubr.f32.gmra.mrb[0].mxu0 %v1687
    %v1764 = vpop.f32.mrb[0].mxu0
    %v1765 = vadd.f32 0.0, %v1764
    %v1766 = vpop.f32.mrb[0].mxu0
    %1767 = vdwg.mxu0
    %v1768 = vmul.f32 %v1760, 0.17677669
    %v1769 = vmul.f32 %v1765, 0.17677669
    %v1770 = vsel %vm486, %v1768, -1e+30
    %v1771 = vsel %vm487, %v1769, -1e+30
    %1772 = vmax.xlane.f32.xlu0 %v1770
    %v1773 = vpop.xlane.xlu0 %1772
    %1774 = vmax.xlane.f32.xlu0 %v1771
    %v1775 = vpop.xlane.xlu0 %1774
    %v1776 = vsub.f32 %v1770, %v1773
    %v1777 = vsub.f32 %v1771, %v1775
    %v1778 = vmul.f32 %v1776, 1.442695
    %v1779 = vpow.pop %v1778
    %v1780 = vmul.f32 %v1777, 1.442695
    %v1781 = vpow.pop %v1780
    %v1782 = vsel %vm486, %v1779, 0.0
    %v1783 = vsel %vm487, %v1781, 0.0
    %1784 = vadd.xlane.f32.xlu0 %v1782
    %v1785 = vpop.xlane.xlu0 %1784
    %1786 = vadd.xlane.f32.xlu0 %v1783
    %v1787 = vpop.xlane.xlu0 %1786
    %v1788 = vrcp.pop %v1785
    %v1789 = vrcp.pop %v1787
    %v1790 = vmul.f32 %v1782, %v1788
    %v1791 = vmul.f32 %v1783, %v1789
    %s1792 = scalar_lea.vmem [#allocation14], 112
    %1793 = vst [vmem:[%s1792] sm:$0xff] %v1790
    %1794 = vst [vmem:[%s1792 + $0x8] sm:$0xff] %v1791
    %v1795 = vpack.c.bf16 %v1791, %v1790
    %1796 = vrot.lane.b32.xlu0 %v1193, 32
    %v1797 = vpop.permute.xlu0 %1796
    %1799 = vmatprep.subr.bf16.mxu0 0
    %1800 = vmatpush1.bf16.msra.mxu0 %v1797
    %1801 = vmatprep.subr.bf16.mxu0 0
    %1802 = vmatpush1.bf16.msra.mxu0 %v1117
    %1803 = vmatprep.subr.bf16.mxu0 0
    %1804 = vmatpush1.bf16.msra.mxu0 %v1117
    %1805 = vmatprep.subr.bf16.mxu0 0
    %1806 = vmatpush1.bf16.msra.mxu0 %v1117
    %1807 = vmatprep.subr.bf16.mxu0 0
    %1808 = vmatpush1.bf16.msra.mxu0 %v1117
    %1809 = vmatprep.subr.bf16.mxu0 0
    %1810 = vmatpush1.bf16.msra.mxu0 %v1117
    %1811 = vmatprep.subr.bf16.mxu0 0
    %1812 = vmatpush1.bf16.msra.mxu0 %v1117
    %1813 = vmatprep.subr.bf16.mxu0 0
    %1814 = vmatpush1.bf16.msra.mxu0 %v1117
    %1815 = vmatprep.subr.bf16.mxu0 0
    %1816 = vmatpush1.bf16.msra.mxu0 0
    %1817 = vmatprep.subr.bf16.mxu0 0
    %1818 = vmatpush1.bf16.msra.mxu0 0
    %1819 = vmatprep.subr.bf16.mxu0 0
    %1820 = vmatpush1.bf16.msra.mxu0 0
    %1821 = vmatprep.subr.bf16.mxu0 0
    %1822 = vmatpush1.bf16.msra.mxu0 0
    %1823 = vmatprep.subr.bf16.mxu0 0
    %1824 = vmatpush1.bf16.msra.mxu0 0
    %1825 = vmatprep.subr.bf16.mxu0 0
    %1826 = vmatpush1.bf16.msra.mxu0 0
    %1827 = vmatprep.subr.bf16.mxu0 0
    %1828 = vmatpush1.bf16.msra.mxu0 0
    %1829 = vmatprep.subr.bf16.mxu0 0
    %1830 = vmatpush1.bf16.msra.mxu0 0
    %1831 = vmatprep.mubr.bf16.mxu0 0
    %1832 = vmatmul.mubr.bf16.gmra.mrb[0].mxu0 %v1795
    %v1833 = vpop.f32.mrb[0].mxu0
    %v1834 = vadd.f32 0.0, %v1833
    %v1835 = vpop.f32.mrb[0].mxu0
    %v1836 = vpop.f32.mrb[0].mxu0
    %v1837 = vadd.f32 0.0, %v1836
    %v1838 = vpop.f32.mrb[0].mxu0
    %1839 = vdwg.mxu0
    %1842 = vrot.lane.b32.xlu0 %v1508, 32
    %v1843 = vpop.permute.xlu0 %1842
    %1844 = vrot.lane.b32.xlu0 %v1511, 32
    %v1845 = vpop.permute.xlu0 %1844
    %1850 = vrot.lane.b32.xlu0 %v1671, 64
    %v1851 = vpop.permute.xlu0 %1850
    %1852 = vrot.lane.b32.xlu0 %v1674, 64
    %v1853 = vpop.permute.xlu0 %1852
    %1858 = vrot.lane.b32.xlu0 %v1834, 96
    %v1859 = vpop.permute.xlu0 %1858
    %1860 = vrot.lane.b32.xlu0 %v1837, 96
    %v1861 = vpop.permute.xlu0 %1860
    %v1864 = vsel %vm490, %v1344, %v1843
    %v1865 = vsel %vm490, %v1347, %v1845
    %v1866 = vsel %vm1187, %v1864, %v1851
    %v1867 = vsel %vm1187, %v1865, %v1853
    %v1868 = vsel %vm1190, %v1866, %v1859
    %v1869 = vsel %vm1190, %v1867, %v1861
    %v1870 = vpack.c.bf16 %v1192, %v1191
    %v1871 = vpack.c.bf16 %v1869, %v1868
    %v1872 = vld [vmem:[#allocation7] sm:$0xf]
    %v1873 = vld [vmem:[#allocation7 + $0x4] sm:$0xf]
    %v1874 = vld [vmem:[#allocation7 + $0x8] sm:$0xf]
    %v1875 = vld [vmem:[#allocation7 + $0xc] sm:$0xf]
    %v1876 = vld [vmem:[#allocation7 + $0x10] sm:$0xf]
    %v1877 = vld [vmem:[#allocation7 + $0x14] sm:$0xf]
    %v1878 = vld [vmem:[#allocation7 + $0x18] sm:$0xf]
    %v1879 = vld [vmem:[#allocation7 + $0x1c] sm:$0xf]
    %v1880 = vld [vmem:[#allocation7 + $0x20] sm:$0xf]
    %v1881 = vld [vmem:[#allocation7 + $0x24] sm:$0xf]
    %v1882 = vld [vmem:[#allocation7 + $0x28] sm:$0xf]
    %v1883 = vld [vmem:[#allocation7 + $0x2c] sm:$0xf]
    %v1884 = vld [vmem:[#allocation7 + $0x30] sm:$0xf]
    %v1885 = vld [vmem:[#allocation7 + $0x34] sm:$0xf]
    %v1886 = vld [vmem:[#allocation7 + $0x38] sm:$0xf]
    %v1887 = vld [vmem:[#allocation7 + $0x3c] sm:$0xf]
    %v1888 = vld [vmem:[#allocation8] sm:$0x1]
    %v1890 = vlaneseq
    %v1891 = vshrl.u32 %v1890, 7
    %v1892 = vsub.s32 0, %v1891
    %v1893 = vrot.slane %v1888, %v1892
    %v1911 = vunpack.c.l.b16 %v1872
    %v1912 = vunpack.c.l.b16 %v1873
    %v1913 = vunpack.c.l.b16 %v1874
    %v1914 = vunpack.c.l.b16 %v1875
    %v1915 = vunpack.c.l.b16 %v1876
    %v1916 = vunpack.c.l.b16 %v1877
    %v1917 = vunpack.c.l.b16 %v1878
    %v1918 = vunpack.c.l.b16 %v1879
    %v1919 = vunpack.c.l.b16 %v1880
    %v1920 = vunpack.c.l.b16 %v1881
    %v1921 = vunpack.c.l.b16 %v1882
    %v1922 = vunpack.c.l.b16 %v1883
    %v1923 = vunpack.c.l.b16 %v1884
    %v1924 = vunpack.c.l.b16 %v1885
    %v1925 = vunpack.c.l.b16 %v1886
    %v1926 = vunpack.c.l.b16 %v1887
    %v1927 = vpack.c.b16 %v1912, %v1911
    %v1928 = vpack.c.b16 %v1914, %v1913
    %v1929 = vpack.c.b16 %v1916, %v1915
    %v1930 = vpack.c.b16 %v1918, %v1917
    %v1931 = vpack.c.b16 %v1920, %v1919
    %v1932 = vpack.c.b16 %v1922, %v1921
    %v1933 = vpack.c.b16 %v1924, %v1923
    %v1934 = vpack.c.b16 %v1926, %v1925
    %1943 = vmatprep.subr.bf16.mxu0 0
    %1944 = vmatpush1.bf16.msra.mxu0 %v1927
    %1945 = vmatprep.subr.bf16.mxu0 0
    %1946 = vmatpush1.bf16.msra.mxu0 %v1928
    %1947 = vmatprep.subr.bf16.mxu0 0
    %1948 = vmatpush1.bf16.msra.mxu0 %v1929
    %1949 = vmatprep.subr.bf16.mxu0 0
    %1950 = vmatpush1.bf16.msra.mxu0 %v1930
    %1951 = vmatprep.subr.bf16.mxu0 0
    %1952 = vmatpush1.bf16.msra.mxu0 %v1931
    %1953 = vmatprep.subr.bf16.mxu0 0
    %1954 = vmatpush1.bf16.msra.mxu0 %v1932
    %1955 = vmatprep.subr.bf16.mxu0 0
    %1956 = vmatpush1.bf16.msra.mxu0 %v1933
    %1957 = vmatprep.subr.bf16.mxu0 0
    %1958 = vmatpush1.bf16.msra.mxu0 %v1934
    %1959 = vmatprep.subr.bf16.mxu0 0
    %1960 = vmatpush1.bf16.msra.mxu0 0
    %1961 = vmatprep.subr.bf16.mxu0 0
    %1962 = vmatpush1.bf16.msra.mxu0 0
    %1963 = vmatprep.subr.bf16.mxu0 0
    %1964 = vmatpush1.bf16.msra.mxu0 0
    %1965 = vmatprep.subr.bf16.mxu0 0
    %1966 = vmatpush1.bf16.msra.mxu0 0
    %1967 = vmatprep.subr.bf16.mxu0 0
    %1968 = vmatpush1.bf16.msra.mxu0 0
    %1969 = vmatprep.subr.bf16.mxu0 0
    %1970 = vmatpush1.bf16.msra.mxu0 0
    %1971 = vmatprep.subr.bf16.mxu0 0
    %1972 = vmatpush1.bf16.msra.mxu0 0
    %1973 = vmatprep.subr.bf16.mxu0 0
    %1974 = vmatpush1.bf16.msra.mxu0 0
    %1975 = vmatprep.mubr.bf16.mxu0 0
    %1976 = vmatmul.mubr.bf16.gmra.mrb[0].mxu0 %v1870
    %v1977 = vpop.f32.mrb[0].mxu0
    %v1978 = vadd.f32 %v1893, %v1977
    %v1979 = vpop.f32.mrb[0].mxu0
    %v1980 = vpop.f32.mrb[0].mxu0
    %v1981 = vadd.f32 %v1893, %v1980
    %v1982 = vpop.f32.mrb[0].mxu0
    %1983 = vmatprep.mubr.bf16.mxu0 0
    %1984 = vmatmul.mubr.bf16.gmra.mrb[0].mxu0 %v1871
    %v1985 = vpop.f32.mrb[0].mxu0
    %v1986 = vadd.f32 %v1893, %v1985
    %v1987 = vpop.f32.mrb[0].mxu0
    %v1988 = vpop.f32.mrb[0].mxu0
    %v1989 = vadd.f32 %v1893, %v1988
    %v1990 = vpop.f32.mrb[0].mxu0
    %1991 = vdwg.mxu0
    %v1992 = vadd.f32 %v129, %v1978
    %v1993 = vadd.f32 %v130, %v1981
    %v1994 = vadd.f32 %v131, %v1986
    %v1995 = vadd.f32 %v132, %v1989
    %v1996 = vld [vmem:[%s7] sm:$0x1]
    %v1997 = vld [vmem:[%s8] sm:$0x1]
    %1998 = vadd.xlane.f32.xlu0 %v1992
    %v1999 = vpop.xlane.xlu0 %1998
    %2000 = vadd.xlane.f32.xlu0 %v1993
    %v2001 = vpop.xlane.xlu0 %2000
    %2002 = vadd.xlane.f32.xlu0 %v1994
    %v2003 = vpop.xlane.xlu0 %2002
    %2004 = vadd.xlane.f32.xlu0 %v1995
    %v2005 = vpop.xlane.xlu0 %2004
    %v2006 = vmul.f32 %v1999, %v143
    %v2007 = vmul.f32 %v2001, %v143
    %v2008 = vmul.f32 %v2003, %v143
    %v2009 = vmul.f32 %v2005, %v143
    %v2010 = vsub.f32 %v1992, %v2006
    %v2011 = vsub.f32 %v1993, %v2007
    %v2012 = vsub.f32 %v1994, %v2008
    %v2013 = vsub.f32 %v1995, %v2009
    %v2014 = vmul.f32 %v2010, %v2010
    %v2015 = vmul.f32 %v2011, %v2011
    %v2016 = vmul.f32 %v2012, %v2012
    %v2017 = vmul.f32 %v2013, %v2013
    %2018 = vadd.xlane.f32.xlu0 %v2014
    %v2019 = vpop.xlane.xlu0 %2018
    %2020 = vadd.xlane.f32.xlu0 %v2015
    %v2021 = vpop.xlane.xlu0 %2020
    %2022 = vadd.xlane.f32.xlu0 %v2016
    %v2023 = vpop.xlane.xlu0 %2022
    %2024 = vadd.xlane.f32.xlu0 %v2017
    %v2025 = vpop.xlane.xlu0 %2024
    %v2026 = vmul.f32 %v2019, %v143
    %v2027 = vmul.f32 %v2021, %v143
    %v2028 = vmul.f32 %v2023, %v143
    %v2029 = vmul.f32 %v2025, %v143
    %v2030 = vadd.f32 %v2026, 1e-05
    %v2031 = vadd.f32 %v2027, 1e-05
    %v2032 = vadd.f32 %v2028, 1e-05
    %v2033 = vadd.f32 %v2029, 1e-05
    %v2034 = vrsqrt.pop %v2030
    %v2035 = vrsqrt.pop %v2031
    %v2036 = vrsqrt.pop %v2032
    %v2037 = vrsqrt.pop %v2033
    %v2038 = vmul.f32 %v2010, %v2034
    %v2039 = vmul.f32 %v2011, %v2035
    %v2040 = vmul.f32 %v2012, %v2036
    %v2041 = vmul.f32 %v2013, %v2037
    %v2043 = vlaneseq
    %v2044 = vshrl.u32 %v2043, 7
    %v2045 = vsub.s32 0, %v2044
    %v2046 = vrot.slane %v1996, %v2045
    %v2048 = vmul.f32 %v2038, %v2046
    %v2049 = vmul.f32 %v2039, %v2046
    %v2050 = vmul.f32 %v2040, %v2046
    %v2051 = vmul.f32 %v2041, %v2046
    %v2053 = vlaneseq
    %v2054 = vshrl.u32 %v2053, 7
    %v2055 = vsub.s32 0, %v2054
    %v2056 = vrot.slane %v1997, %v2055
    %v2058 = vadd.f32 %v2048, %v2056
    %v2059 = vadd.f32 %v2049, %v2056
    %v2060 = vadd.f32 %v2050, %v2056
    %v2061 = vadd.f32 %v2051, %v2056
    %v2062 = vpack.c.bf16 %v2059, %v2058
    %v2063 = vpack.c.bf16 %v2061, %v2060
    %v2064 = vld [vmem:[#allocation10] sm:$0xff]
    %v2065 = vld [vmem:[#allocation10 + $0x8] sm:$0xff]
    %v2066 = vld [vmem:[#allocation10 + $0x10] sm:$0xff]
    %v2067 = vld [vmem:[#allocation10 + $0x18] sm:$0xff]
    %v2068 = vld [vmem:[#allocation10 + $0x20] sm:$0xff]
    %v2069 = vld [vmem:[#allocation10 + $0x28] sm:$0xff]
    %v2070 = vld [vmem:[#allocation10 + $0x30] sm:$0xff]
    %v2071 = vld [vmem:[#allocation10 + $0x38] sm:$0xff]
    %v2072 = vld [vmem:[#allocation10 + $0x40] sm:$0xff]
    %v2073 = vld [vmem:[#allocation10 + $0x48] sm:$0xff]
    %v2074 = vld [vmem:[#allocation10 + $0x50] sm:$0xff]
    %v2075 = vld [vmem:[#allocation10 + $0x58] sm:$0xff]
    %v2076 = vld [vmem:[#allocation10 + $0x60] sm:$0xff]
    %v2077 = vld [vmem:[#allocation10 + $0x68] sm:$0xff]
    %v2078 = vld [vmem:[#allocation10 + $0x70] sm:$0xff]
    %v2079 = vld [vmem:[#allocation10 + $0x78] sm:$0xff]
    %v2080 = vld [vmem:[#allocation10 + $0x80] sm:$0xff]
    %v2081 = vld [vmem:[#allocation10 + $0x88] sm:$0xff]
    %v2082 = vld [vmem:[#allocation10 + $0x90] sm:$0xff]
    %v2083 = vld [vmem:[#allocation10 + $0x98] sm:$0xff]
    %v2084 = vld [vmem:[#allocation10 + $0xa0] sm:$0xff]
    %v2085 = vld [vmem:[#allocation10 + $0xa8] sm:$0xff]
    %v2086 = vld [vmem:[#allocation10 + $0xb0] sm:$0xff]
    %v2087 = vld [vmem:[#allocation10 + $0xb8] sm:$0xff]
    %v2088 = vld [vmem:[#allocation10 + $0xc0] sm:$0xff]
    %v2089 = vld [vmem:[#allocation10 + $0xc8] sm:$0xff]
    %v2090 = vld [vmem:[#allocation10 + $0xd0] sm:$0xff]
    %v2091 = vld [vmem:[#allocation10 + $0xd8] sm:$0xff]
    %v2092 = vld [vmem:[#allocation10 + $0xe0] sm:$0xff]
    %v2093 = vld [vmem:[#allocation10 + $0xe8] sm:$0xff]
    %v2094 = vld [vmem:[#allocation10 + $0xf0] sm:$0xff]
    %v2095 = vld [vmem:[#allocation10 + $0xf8] sm:$0xff]
    %v2096 = vld [vmem:[%s10] sm:$0xf]
    %v2098 = vlaneseq
    %v2099 = vshrl.u32 %v2098, 7
    %v2100 = vsub.s32 0, %v2099
    %v2101 = vrot.slane %v2096, %v2100
    %v2102 = vlaneseq
    %v2103 = vshrl.u32 %v2102, 7
    %v2104 = vsub.s32 1, %v2103
    %v2105 = vrot.slane %v2096, %v2104
    %v2106 = vlaneseq
    %v2107 = vshrl.u32 %v2106, 7
    %v2108 = vsub.s32 2, %v2107
    %v2109 = vrot.slane %v2096, %v2108
    %v2110 = vlaneseq
    %v2111 = vshrl.u32 %v2110, 7
    %v2112 = vsub.s32 3, %v2111
    %v2113 = vrot.slane %v2096, %v2112
    %v2150 = vunpack.c.l.b16 %v2064
    %v2151 = vunpack.c.h.b16 %v2064
    %v2152 = vunpack.c.l.b16 %v2065
    %v2153 = vunpack.c.h.b16 %v2065
    %v2154 = vunpack.c.l.b16 %v2066
    %v2155 = vunpack.c.h.b16 %v2066
    %v2156 = vunpack.c.l.b16 %v2067
    %v2157 = vunpack.c.h.b16 %v2067
    %v2158 = vunpack.c.l.b16 %v2068
    %v2159 = vunpack.c.h.b16 %v2068
    %v2160 = vunpack.c.l.b16 %v2069
    %v2161 = vunpack.c.h.b16 %v2069
    %v2162 = vunpack.c.l.b16 %v2070
    %v2163 = vunpack.c.h.b16 %v2070
    %v2164 = vunpack.c.l.b16 %v2071
    %v2165 = vunpack.c.h.b16 %v2071
    %v2166 = vunpack.c.l.b16 %v2072
    %v2167 = vunpack.c.h.b16 %v2072
    %v2168 = vunpack.c.l.b16 %v2073
    %v2169 = vunpack.c.h.b16 %v2073
    %v2170 = vunpack.c.l.b16 %v2074
    %v2171 = vunpack.c.h.b16 %v2074
    %v2172 = vunpack.c.l.b16 %v2075
    %v2173 = vunpack.c.h.b16 %v2075
    %v2174 = vunpack.c.l.b16 %v2076
    %v2175 = vunpack.c.h.b16 %v2076
    %v2176 = vunpack.c.l.b16 %v2077
    %v2177 = vunpack.c.h.b16 %v2077
    %v2178 = vunpack.c.l.b16 %v2078
    %v2179 = vunpack.c.h.b16 %v2078
    %v2180 = vunpack.c.l.b16 %v2079
    %v2181 = vunpack.c.h.b16 %v2079
    %v2182 = vunpack.c.l.b16 %v2080
    %v2183 = vunpack.c.h.b16 %v2080
    %v2184 = vunpack.c.l.b16 %v2081
    %v2185 = vunpack.c.h.b16 %v2081
    %v2186 = vunpack.c.l.b16 %v2082
    %v2187 = vunpack.c.h.b16 %v2082
    %v2188 = vunpack.c.l.b16 %v2083
    %v2189 = vunpack.c.h.b16 %v2083
    %v2190 = vunpack.c.l.b16 %v2084
    %v2191 = vunpack.c.h.b16 %v2084
    %v2192 = vunpack.c.l.b16 %v2085
    %v2193 = vunpack.c.h.b16 %v2085
    %v2194 = vunpack.c.l.b16 %v2086
    %v2195 = vunpack.c.h.b16 %v2086
    %v2196 = vunpack.c.l.b16 %v2087
    %v2197 = vunpack.c.h.b16 %v2087
    %v2198 = vunpack.c.l.b16 %v2088
    %v2199 = vunpack.c.h.b16 %v2088
    %v2200 = vunpack.c.l.b16 %v2089
    %v2201 = vunpack.c.h.b16 %v2089
    %v2202 = vunpack.c.l.b16 %v2090
    %v2203 = vunpack.c.h.b16 %v2090
    %v2204 = vunpack.c.l.b16 %v2091
    %v2205 = vunpack.c.h.b16 %v2091
    %v2206 = vunpack.c.l.b16 %v2092
    %v2207 = vunpack.c.h.b16 %v2092
    %v2208 = vunpack.c.l.b16 %v2093
    %v2209 = vunpack.c.h.b16 %v2093
    %v2210 = vunpack.c.l.b16 %v2094
    %v2211 = vunpack.c.h.b16 %v2094
    %v2212 = vunpack.c.l.b16 %v2095
    %v2213 = vunpack.c.h.b16 %v2095
    %v2214 = vpack.c.b16 %v2154, %v2150
    %v2215 = vpack.c.b16 %v2155, %v2151
    %v2216 = vpack.c.b16 %v2156, %v2152
    %v2217 = vpack.c.b16 %v2157, %v2153
    %v2218 = vpack.c.b16 %v2162, %v2158
    %v2219 = vpack.c.b16 %v2163, %v2159
    %v2220 = vpack.c.b16 %v2164, %v2160
    %v2221 = vpack.c.b16 %v2165, %v2161
    %v2222 = vpack.c.b16 %v2170, %v2166
    %v2223 = vpack.c.b16 %v2171, %v2167
    %v2224 = vpack.c.b16 %v2172, %v2168
    %v2225 = vpack.c.b16 %v2173, %v2169
    %v2226 = vpack.c.b16 %v2178, %v2174
    %v2227 = vpack.c.b16 %v2179, %v2175
    %v2228 = vpack.c.b16 %v2180, %v2176
    %v2229 = vpack.c.b16 %v2181, %v2177
    %v2230 = vpack.c.b16 %v2186, %v2182
    %v2231 = vpack.c.b16 %v2187, %v2183
    %v2232 = vpack.c.b16 %v2188, %v2184
    %v2233 = vpack.c.b16 %v2189, %v2185
    %v2234 = vpack.c.b16 %v2194, %v2190
    %v2235 = vpack.c.b16 %v2195, %v2191
    %v2236 = vpack.c.b16 %v2196, %v2192
    %v2237 = vpack.c.b16 %v2197, %v2193
    %v2238 = vpack.c.b16 %v2202, %v2198
    %v2239 = vpack.c.b16 %v2203, %v2199
    %v2240 = vpack.c.b16 %v2204, %v2200
    %v2241 = vpack.c.b16 %v2205, %v2201
    %v2242 = vpack.c.b16 %v2210, %v2206
    %v2243 = vpack.c.b16 %v2211, %v2207
    %v2244 = vpack.c.b16 %v2212, %v2208
    %v2245 = vpack.c.b16 %v2213, %v2209
    %2278 = vmatprep.subr.bf16.mxu0 %v2215
    %2279 = vmatpush1.bf16.msra.mxu0 %v2214
    %2280 = vmatprep.subr.bf16.mxu0 %v2219
    %2281 = vmatpush1.bf16.msra.mxu0 %v2218
    %2282 = vmatprep.subr.bf16.mxu0 %v2223
    %2283 = vmatpush1.bf16.msra.mxu0 %v2222
    %2284 = vmatprep.subr.bf16.mxu0 %v2227
    %2285 = vmatpush1.bf16.msra.mxu0 %v2226
    %2286 = vmatprep.subr.bf16.mxu0 %v2231
    %2287 = vmatpush1.bf16.msra.mxu0 %v2230
    %2288 = vmatprep.subr.bf16.mxu0 %v2235
    %2289 = vmatpush1.bf16.msra.mxu0 %v2234
    %2290 = vmatprep.subr.bf16.mxu0 %v2239
    %2291 = vmatpush1.bf16.msra.mxu0 %v2238
    %2292 = vmatprep.subr.bf16.mxu0 %v2243
    %2293 = vmatpush1.bf16.msra.mxu0 %v2242
    %2294 = vmatprep.subr.bf16.mxu0 0
    %2295 = vmatpush1.bf16.msra.mxu0 0
    %2296 = vmatprep.subr.bf16.mxu0 0
    %2297 = vmatpush1.bf16.msra.mxu0 0
    %2298 = vmatprep.subr.bf16.mxu0 0
    %2299 = vmatpush1.bf16.msra.mxu0 0
    %2300 = vmatprep.subr.bf16.mxu0 0
    %2301 = vmatpush1.bf16.msra.mxu0 0
    %2302 = vmatprep.subr.bf16.mxu0 0
    %2303 = vmatpush1.bf16.msra.mxu0 0
    %2304 = vmatprep.subr.bf16.mxu0 0
    %2305 = vmatpush1.bf16.msra.mxu0 0
    %2306 = vmatprep.subr.bf16.mxu0 0
    %2307 = vmatpush1.bf16.msra.mxu0 0
    %2308 = vmatprep.subr.bf16.mxu0 0
    %2309 = vmatpush1.bf16.msra.mxu0 0
    %2310 = vmatprep.mubr.bf16.mxu0 0
    %2311 = vmatmul.mubr.bf16.gmra.mrb[0].mxu0 %v2062
    %v2312 = vpop.f32.mrb[0].mxu0
    %v2313 = vadd.f32 %v2101, %v2312
    %v2314 = vpop.f32.mrb[0].mxu0
    %v2315 = vadd.f32 %v2105, %v2314
    %v2316 = vpop.f32.mrb[0].mxu0
    %v2317 = vadd.f32 %v2101, %v2316
    %v2318 = vpop.f32.mrb[0].mxu0
    %v2319 = vadd.f32 %v2105, %v2318
    %2320 = vmatprep.mubr.bf16.mxu0 0
    %2321 = vmatmul.mubr.bf16.gmra.mrb[0].mxu0 %v2063
    %v2322 = vpop.f32.mrb[0].mxu0
    %v2323 = vadd.f32 %v2101, %v2322
    %v2324 = vpop.f32.mrb[0].mxu0
    %v2325 = vadd.f32 %v2105, %v2324
    %v2326 = vpop.f32.mrb[0].mxu0
    %v2327 = vadd.f32 %v2101, %v2326
    %v2328 = vpop.f32.mrb[0].mxu0
    %v2329 = vadd.f32 %v2105, %v2328
    %2330 = vdwg.mxu0
    %2331 = vmatprep.subr.bf16.mxu0 %v2217
    %2332 = vmatpush1.bf16.msra.mxu0 %v2216
    %2333 = vmatprep.subr.bf16.mxu0 %v2221
    %2334 = vmatpush1.bf16.msra.mxu0 %v2220
    %2335 = vmatprep.subr.bf16.mxu0 %v2225
    %2336 = vmatpush1.bf16.msra.mxu0 %v2224
    %2337 = vmatprep.subr.bf16.mxu0 %v2229
    %2338 = vmatpush1.bf16.msra.mxu0 %v2228
    %2339 = vmatprep.subr.bf16.mxu0 %v2233
    %2340 = vmatpush1.bf16.msra.mxu0 %v2232
    %2341 = vmatprep.subr.bf16.mxu0 %v2237
    %2342 = vmatpush1.bf16.msra.mxu0 %v2236
    %2343 = vmatprep.subr.bf16.mxu0 %v2241
    %2344 = vmatpush1.bf16.msra.mxu0 %v2240
    %2345 = vmatprep.subr.bf16.mxu0 %v2245
    %2346 = vmatpush1.bf16.msra.mxu0 %v2244
    %2347 = vmatprep.subr.bf16.mxu0 0
    %2348 = vmatpush1.bf16.msra.mxu0 0
    %2349 = vmatprep.subr.bf16.mxu0 0
    %2350 = vmatpush1.bf16.msra.mxu0 0
    %2351 = vmatprep.subr.bf16.mxu0 0
    %2352 = vmatpush1.bf16.msra.mxu0 0
    %2353 = vmatprep.subr.bf16.mxu0 0
    %2354 = vmatpush1.bf16.msra.mxu0 0
    %2355 = vmatprep.subr.bf16.mxu0 0
    %2356 = vmatpush1.bf16.msra.mxu0 0
    %2357 = vmatprep.subr.bf16.mxu0 0
    %2358 = vmatpush1.bf16.msra.mxu0 0
    %2359 = vmatprep.subr.bf16.mxu0 0
    %2360 = vmatpush1.bf16.msra.mxu0 0
    %2361 = vmatprep.subr.bf16.mxu0 0
    %2362 = vmatpush1.bf16.msra.mxu0 0
    %2363 = vmatprep.mubr.bf16.mxu0 0
    %2364 = vmatmul.mubr.bf16.gmra.mrb[0].mxu0 %v2062
    %v2365 = vpop.f32.mrb[0].mxu0
    %v2366 = vadd.f32 %v2109, %v2365
    %v2367 = vpop.f32.mrb[0].mxu0
    %v2368 = vadd.f32 %v2113, %v2367
    %v2369 = vpop.f32.mrb[0].mxu0
    %v2370 = vadd.f32 %v2109, %v2369
    %v2371 = vpop.f32.mrb[0].mxu0
    %v2372 = vadd.f32 %v2113, %v2371
    %2373 = vmatprep.mubr.bf16.mxu0 0
    %2374 = vmatmul.mubr.bf16.gmra.mrb[0].mxu0 %v2063
    %v2375 = vpop.f32.mrb[0].mxu0
    %v2376 = vadd.f32 %v2109, %v2375
    %v2377 = vpop.f32.mrb[0].mxu0
    %v2378 = vadd.f32 %v2113, %v2377
    %v2379 = vpop.f32.mrb[0].mxu0
    %v2380 = vadd.f32 %v2109, %v2379
    %v2381 = vpop.f32.mrb[0].mxu0
    %v2382 = vadd.f32 %v2113, %v2381
    %2383 = vdwg.mxu0
    %v2384 = vmul.f32 %v2313, 0.5
    %v2385 = vmul.f32 %v2315, 0.5
    %v2386 = vmul.f32 %v2366, 0.5
    %v2387 = vmul.f32 %v2368, 0.5
    %v2388 = vmul.f32 %v2317, 0.5
    %v2389 = vmul.f32 %v2319, 0.5
    %v2390 = vmul.f32 %v2370, 0.5
    %v2391 = vmul.f32 %v2372, 0.5
    %v2392 = vmul.f32 %v2323, 0.5
    %v2393 = vmul.f32 %v2325, 0.5
    %v2394 = vmul.f32 %v2376, 0.5
    %v2395 = vmul.f32 %v2378, 0.5
    %v2396 = vmul.f32 %v2327, 0.5
    %v2397 = vmul.f32 %v2329, 0.5
    %v2398 = vmul.f32 %v2380, 0.5
    %v2399 = vmul.f32 %v2382, 0.5
    %v2400 = vmul.f32 %v2313, 0.044715
    %v2401 = vmul.f32 %v2315, 0.044715
    %v2402 = vmul.f32 %v2366, 0.044715
    %v2403 = vmul.f32 %v2368, 0.044715
    %v2404 = vmul.f32 %v2317, 0.044715
    %v2405 = vmul.f32 %v2319, 0.044715
    %v2406 = vmul.f32 %v2370, 0.044715
    %v2407 = vmul.f32 %v2372, 0.044715
    %v2408 = vmul.f32 %v2323, 0.044715
    %v2409 = vmul.f32 %v2325, 0.044715
    %v2410 = vmul.f32 %v2376, 0.044715
    %v2411 = vmul.f32 %v2378, 0.044715
    %v2412 = vmul.f32 %v2327, 0.044715
    %v2413 = vmul.f32 %v2329, 0.044715
    %v2414 = vmul.f32 %v2380, 0.044715
    %v2415 = vmul.f32 %v2382, 0.044715
    %v2416 = vmul.f32 %v2400, %v2313
    %v2417 = vmul.f32 %v2401, %v2315
    %v2418 = vmul.f32 %v2402, %v2366
    %v2419 = vmul.f32 %v2403, %v2368
    %v2420 = vmul.f32 %v2404, %v2317
    %v2421 = vmul.f32 %v2405, %v2319
    %v2422 = vmul.f32 %v2406, %v2370
    %v2423 = vmul.f32 %v2407, %v2372
    %v2424 = vmul.f32 %v2408, %v2323
    %v2425 = vmul.f32 %v2409, %v2325
    %v2426 = vmul.f32 %v2410, %v2376
    %v2427 = vmul.f32 %v2411, %v2378
    %v2428 = vmul.f32 %v2412, %v2327
    %v2429 = vmul.f32 %v2413, %v2329
    %v2430 = vmul.f32 %v2414, %v2380
    %v2431 = vmul.f32 %v2415, %v2382
    %v2432 = vmul.f32 %v2416, %v2313
    %v2433 = vmul.f32 %v2417, %v2315
    %v2434 = vmul.f32 %v2418, %v2366
    %v2435 = vmul.f32 %v2419, %v2368
    %v2436 = vmul.f32 %v2420, %v2317
    %v2437 = vmul.f32 %v2421, %v2319
    %v2438 = vmul.f32 %v2422, %v2370
    %v2439 = vmul.f32 %v2423, %v2372
    %v2440 = vmul.f32 %v2424, %v2323
    %v2441 = vmul.f32 %v2425, %v2325
    %v2442 = vmul.f32 %v2426, %v2376
    %v2443 = vmul.f32 %v2427, %v2378
    %v2444 = vmul.f32 %v2428, %v2327
    %v2445 = vmul.f32 %v2429, %v2329
    %v2446 = vmul.f32 %v2430, %v2380
    %v2447 = vmul.f32 %v2431, %v2382
    %v2448 = vadd.f32 %v2313, %v2432
    %v2449 = vadd.f32 %v2315, %v2433
    %v2450 = vadd.f32 %v2366, %v2434
    %v2451 = vadd.f32 %v2368, %v2435
    %v2452 = vadd.f32 %v2317, %v2436
    %v2453 = vadd.f32 %v2319, %v2437
    %v2454 = vadd.f32 %v2370, %v2438
    %v2455 = vadd.f32 %v2372, %v2439
    %v2456 = vadd.f32 %v2323, %v2440
    %v2457 = vadd.f32 %v2325, %v2441
    %v2458 = vadd.f32 %v2376, %v2442
    %v2459 = vadd.f32 %v2378, %v2443
    %v2460 = vadd.f32 %v2327, %v2444
    %v2461 = vadd.f32 %v2329, %v2445
    %v2462 = vadd.f32 %v2380, %v2446
    %v2463 = vadd.f32 %v2382, %v2447
    %v2464 = vmul.f32 %v2448, 0.7978846
    %v2465 = vmul.f32 %v2449, 0.7978846
    %v2466 = vmul.f32 %v2450, 0.7978846
    %v2467 = vmul.f32 %v2451, 0.7978846
    %v2468 = vmul.f32 %v2452, 0.7978846
    %v2469 = vmul.f32 %v2453, 0.7978846
    %v2470 = vmul.f32 %v2454, 0.7978846
    %v2471 = vmul.f32 %v2455, 0.7978846
    %v2472 = vmul.f32 %v2456, 0.7978846
    %v2473 = vmul.f32 %v2457, 0.7978846
    %v2474 = vmul.f32 %v2458, 0.7978846
    %v2475 = vmul.f32 %v2459, 0.7978846
    %v2476 = vmul.f32 %v2460, 0.7978846
    %v2477 = vmul.f32 %v2461, 0.7978846
    %v2478 = vmul.f32 %v2462, 0.7978846
    %v2479 = vmul.f32 %v2463, 0.7978846
    %v2480 = vtanh.pop %v2464
    %v2481 = vtanh.pop %v2465
    %v2482 = vtanh.pop %v2466
    %v2483 = vtanh.pop %v2467
    %v2484 = vtanh.pop %v2468
    %v2485 = vtanh.pop %v2469
    %v2486 = vtanh.pop %v2470
    %v2487 = vtanh.pop %v2471
    %v2488 = vtanh.pop %v2472
    %v2489 = vtanh.pop %v2473
    %v2490 = vtanh.pop %v2474
    %v2491 = vtanh.pop %v2475
    %v2492 = vtanh.pop %v2476
    %v2493 = vtanh.pop %v2477
    %v2494 = vtanh.pop %v2478
    %v2495 = vtanh.pop %v2479
    %v2496 = vadd.f32 %v2480, 1.0
    %v2497 = vadd.f32 %v2481, 1.0
    %v2498 = vadd.f32 %v2482, 1.0
    %v2499 = vadd.f32 %v2483, 1.0
    %v2500 = vadd.f32 %v2484, 1.0
    %v2501 = vadd.f32 %v2485, 1.0
    %v2502 = vadd.f32 %v2486, 1.0
    %v2503 = vadd.f32 %v2487, 1.0
    %v2504 = vadd.f32 %v2488, 1.0
    %v2505 = vadd.f32 %v2489, 1.0
    %v2506 = vadd.f32 %v2490, 1.0
    %v2507 = vadd.f32 %v2491, 1.0
    %v2508 = vadd.f32 %v2492, 1.0
    %v2509 = vadd.f32 %v2493, 1.0
    %v2510 = vadd.f32 %v2494, 1.0
    %v2511 = vadd.f32 %v2495, 1.0
    %v2512 = vmul.f32 %v2384, %v2496
    %v2513 = vmul.f32 %v2385, %v2497
    %v2514 = vmul.f32 %v2386, %v2498
    %v2515 = vmul.f32 %v2387, %v2499
    %v2516 = vmul.f32 %v2388, %v2500
    %v2517 = vmul.f32 %v2389, %v2501
    %v2518 = vmul.f32 %v2390, %v2502
    %v2519 = vmul.f32 %v2391, %v2503
    %v2520 = vmul.f32 %v2392, %v2504
    %v2521 = vmul.f32 %v2393, %v2505
    %v2522 = vmul.f32 %v2394, %v2506
    %v2523 = vmul.f32 %v2395, %v2507
    %v2524 = vmul.f32 %v2396, %v2508
    %v2525 = vmul.f32 %v2397, %v2509
    %v2526 = vmul.f32 %v2398, %v2510
    %v2527 = vmul.f32 %v2399, %v2511
    %v2528 = vpack.c.bf16 %v2516, %v2512
    %v2529 = vpack.c.bf16 %v2517, %v2513
    %v2530 = vpack.c.bf16 %v2518, %v2514
    %v2531 = vpack.c.bf16 %v2519, %v2515
    %v2532 = vpack.c.bf16 %v2524, %v2520
    %v2533 = vpack.c.bf16 %v2525, %v2521
    %v2534 = vpack.c.bf16 %v2526, %v2522
    %v2535 = vpack.c.bf16 %v2527, %v2523
    %v2536 = vld [vmem:[#allocation11] sm:$0xf]
    %v2537 = vld [vmem:[#allocation11 + $0x4] sm:$0xf]
    %v2538 = vld [vmem:[#allocation11 + $0x8] sm:$0xf]
    %v2539 = vld [vmem:[#allocation11 + $0xc] sm:$0xf]
    %v2540 = vld [vmem:[#allocation11 + $0x10] sm:$0xf]
    %v2541 = vld [vmem:[#allocation11 + $0x14] sm:$0xf]
    %v2542 = vld [vmem:[#allocation11 + $0x18] sm:$0xf]
    %v2543 = vld [vmem:[#allocation11 + $0x1c] sm:$0xf]
    %v2544 = vld [vmem:[#allocation11 + $0x20] sm:$0xf]
    %v2545 = vld [vmem:[#allocation11 + $0x24] sm:$0xf]
    %v2546 = vld [vmem:[#allocation11 + $0x28] sm:$0xf]
    %v2547 = vld [vmem:[#allocation11 + $0x2c] sm:$0xf]
    %v2548 = vld [vmem:[#allocation11 + $0x30] sm:$0xf]
    %v2549 = vld [vmem:[#allocation11 + $0x34] sm:$0xf]
    %v2550 = vld [vmem:[#allocation11 + $0x38] sm:$0xf]
    %v2551 = vld [vmem:[#allocation11 + $0x3c] sm:$0xf]
    %v2552 = vld [vmem:[#allocation11 + $0x40] sm:$0xf]
    %v2553 = vld [vmem:[#allocation11 + $0x44] sm:$0xf]
    %v2554 = vld [vmem:[#allocation11 + $0x48] sm:$0xf]
    %v2555 = vld [vmem:[#allocation11 + $0x4c] sm:$0xf]
    %v2556 = vld [vmem:[#allocation11 + $0x50] sm:$0xf]
    %v2557 = vld [vmem:[#allocation11 + $0x54] sm:$0xf]
    %v2558 = vld [vmem:[#allocation11 + $0x58] sm:$0xf]
    %v2559 = vld [vmem:[#allocation11 + $0x5c] sm:$0xf]
    %v2560 = vld [vmem:[#allocation11 + $0x60] sm:$0xf]
    %v2561 = vld [vmem:[#allocation11 + $0x64] sm:$0xf]
    %v2562 = vld [vmem:[#allocation11 + $0x68] sm:$0xf]
    %v2563 = vld [vmem:[#allocation11 + $0x6c] sm:$0xf]
    %v2564 = vld [vmem:[#allocation11 + $0x70] sm:$0xf]
    %v2565 = vld [vmem:[#allocation11 + $0x74] sm:$0xf]
    %v2566 = vld [vmem:[#allocation11 + $0x78] sm:$0xf]
    %v2567 = vld [vmem:[#allocation11 + $0x7c] sm:$0xf]
    %v2568 = vld [vmem:[#allocation11 + $0x80] sm:$0xf]
    %v2569 = vld [vmem:[#allocation11 + $0x84] sm:$0xf]
    %v2570 = vld [vmem:[#allocation11 + $0x88] sm:$0xf]
    %v2571 = vld [vmem:[#allocation11 + $0x8c] sm:$0xf]
    %v2572 = vld [vmem:[#allocation11 + $0x90] sm:$0xf]
    %v2573 = vld [vmem:[#allocation11 + $0x94] sm:$0xf]
    %v2574 = vld [vmem:[#allocation11 + $0x98] sm:$0xf]
    %v2575 = vld [vmem:[#allocation11 + $0x9c] sm:$0xf]
    %v2576 = vld [vmem:[#allocation11 + $0xa0] sm:$0xf]
    %v2577 = vld [vmem:[#allocation11 + $0xa4] sm:$0xf]
    %v2578 = vld [vmem:[#allocation11 + $0xa8] sm:$0xf]
    %v2579 = vld [vmem:[#allocation11 + $0xac] sm:$0xf]
    %v2580 = vld [vmem:[#allocation11 + $0xb0] sm:$0xf]
    %v2581 = vld [vmem:[#allocation11 + $0xb4] sm:$0xf]
    %v2582 = vld [vmem:[#allocation11 + $0xb8] sm:$0xf]
    %v2583 = vld [vmem:[#allocation11 + $0xbc] sm:$0xf]
    %v2584 = vld [vmem:[#allocation11 + $0xc0] sm:$0xf]
    %v2585 = vld [vmem:[#allocation11 + $0xc4] sm:$0xf]
    %v2586 = vld [vmem:[#allocation11 + $0xc8] sm:$0xf]
    %v2587 = vld [vmem:[#allocation11 + $0xcc] sm:$0xf]
    %v2588 = vld [vmem:[#allocation11 + $0xd0] sm:$0xf]
    %v2589 = vld [vmem:[#allocation11 + $0xd4] sm:$0xf]
    %v2590 = vld [vmem:[#allocation11 + $0xd8] sm:$0xf]
    %v2591 = vld [vmem:[#allocation11 + $0xdc] sm:$0xf]
    %v2592 = vld [vmem:[#allocation11 + $0xe0] sm:$0xf]
    %v2593 = vld [vmem:[#allocation11 + $0xe4] sm:$0xf]
    %v2594 = vld [vmem:[#allocation11 + $0xe8] sm:$0xf]
    %v2595 = vld [vmem:[#allocation11 + $0xec] sm:$0xf]
    %v2596 = vld [vmem:[#allocation11 + $0xf0] sm:$0xf]
    %v2597 = vld [vmem:[#allocation11 + $0xf4] sm:$0xf]
    %v2598 = vld [vmem:[#allocation11 + $0xf8] sm:$0xf]
    %v2599 = vld [vmem:[#allocation11 + $0xfc] sm:$0xf]
    %v2600 = vld [vmem:[%s12] sm:$0x1]
    %v2602 = vlaneseq
    %v2603 = vshrl.u32 %v2602, 7
    %v2604 = vsub.s32 0, %v2603
    %v2605 = vrot.slane %v2600, %v2604
    %v2671 = vunpack.c.l.b16 %v2536
    %v2672 = vunpack.c.l.b16 %v2537
    %v2673 = vunpack.c.l.b16 %v2538
    %v2674 = vunpack.c.l.b16 %v2539
    %v2675 = vunpack.c.l.b16 %v2540
    %v2676 = vunpack.c.l.b16 %v2541
    %v2677 = vunpack.c.l.b16 %v2542
    %v2678 = vunpack.c.l.b16 %v2543
    %v2679 = vunpack.c.l.b16 %v2544
    %v2680 = vunpack.c.l.b16 %v2545
    %v2681 = vunpack.c.l.b16 %v2546
    %v2682 = vunpack.c.l.b16 %v2547
    %v2683 = vunpack.c.l.b16 %v2548
    %v2684 = vunpack.c.l.b16 %v2549
    %v2685 = vunpack.c.l.b16 %v2550
    %v2686 = vunpack.c.l.b16 %v2551
    %v2687 = vunpack.c.l.b16 %v2552
    %v2688 = vunpack.c.l.b16 %v2553
    %v2689 = vunpack.c.l.b16 %v2554
    %v2690 = vunpack.c.l.b16 %v2555
    %v2691 = vunpack.c.l.b16 %v2556
    %v2692 = vunpack.c.l.b16 %v2557
    %v2693 = vunpack.c.l.b16 %v2558
    %v2694 = vunpack.c.l.b16 %v2559
    %v2695 = vunpack.c.l.b16 %v2560
    %v2696 = vunpack.c.l.b16 %v2561
    %v2697 = vunpack.c.l.b16 %v2562
    %v2698 = vunpack.c.l.b16 %v2563
    %v2699 = vunpack.c.l.b16 %v2564
    %v2700 = vunpack.c.l.b16 %v2565
    %v2701 = vunpack.c.l.b16 %v2566
    %v2702 = vunpack.c.l.b16 %v2567
    %v2703 = vunpack.c.l.b16 %v2568
    %v2704 = vunpack.c.l.b16 %v2569
    %v2705 = vunpack.c.l.b16 %v2570
    %v2706 = vunpack.c.l.b16 %v2571
    %v2707 = vunpack.c.l.b16 %v2572
    %v2708 = vunpack.c.l.b16 %v2573
    %v2709 = vunpack.c.l.b16 %v2574
    %v2710 = vunpack.c.l.b16 %v2575
    %v2711 = vunpack.c.l.b16 %v2576
    %v2712 = vunpack.c.l.b16 %v2577
    %v2713 = vunpack.c.l.b16 %v2578
    %v2714 = vunpack.c.l.b16 %v2579
    %v2715 = vunpack.c.l.b16 %v2580
    %v2716 = vunpack.c.l.b16 %v2581
    %v2717 = vunpack.c.l.b16 %v2582
    %v2718 = vunpack.c.l.b16 %v2583
    %v2719 = vunpack.c.l.b16 %v2584
    %v2720 = vunpack.c.l.b16 %v2585
    %v2721 = vunpack.c.l.b16 %v2586
    %v2722 = vunpack.c.l.b16 %v2587
    %v2723 = vunpack.c.l.b16 %v2588
    %v2724 = vunpack.c.l.b16 %v2589
    %v2725 = vunpack.c.l.b16 %v2590
    %v2726 = vunpack.c.l.b16 %v2591
    %v2727 = vunpack.c.l.b16 %v2592
    %v2728 = vunpack.c.l.b16 %v2593
    %v2729 = vunpack.c.l.b16 %v2594
    %v2730 = vunpack.c.l.b16 %v2595
    %v2731 = vunpack.c.l.b16 %v2596
    %v2732 = vunpack.c.l.b16 %v2597
    %v2733 = vunpack.c.l.b16 %v2598
    %v2734 = vunpack.c.l.b16 %v2599
    %v2735 = vpack.c.b16 %v2672, %v2671
    %v2736 = vpack.c.b16 %v2674, %v2673
    %v2737 = vpack.c.b16 %v2676, %v2675
    %v2738 = vpack.c.b16 %v2678, %v2677
    %v2739 = vpack.c.b16 %v2680, %v2679
    %v2740 = vpack.c.b16 %v2682, %v2681
    %v2741 = vpack.c.b16 %v2684, %v2683
    %v2742 = vpack.c.b16 %v2686, %v2685
    %v2743 = vpack.c.b16 %v2688, %v2687
    %v2744 = vpack.c.b16 %v2690, %v2689
    %v2745 = vpack.c.b16 %v2692, %v2691
    %v2746 = vpack.c.b16 %v2694, %v2693
    %v2747 = vpack.c.b16 %v2696, %v2695
    %v2748 = vpack.c.b16 %v2698, %v2697
    %v2749 = vpack.c.b16 %v2700, %v2699
    %v2750 = vpack.c.b16 %v2702, %v2701
    %v2751 = vpack.c.b16 %v2704, %v2703
    %v2752 = vpack.c.b16 %v2706, %v2705
    %v2753 = vpack.c.b16 %v2708, %v2707
    %v2754 = vpack.c.b16 %v2710, %v2709
    %v2755 = vpack.c.b16 %v2712, %v2711
    %v2756 = vpack.c.b16 %v2714, %v2713
    %v2757 = vpack.c.b16 %v2716, %v2715
    %v2758 = vpack.c.b16 %v2718, %v2717
    %v2759 = vpack.c.b16 %v2720, %v2719
    %v2760 = vpack.c.b16 %v2722, %v2721
    %v2761 = vpack.c.b16 %v2724, %v2723
    %v2762 = vpack.c.b16 %v2726, %v2725
    %v2763 = vpack.c.b16 %v2728, %v2727
    %v2764 = vpack.c.b16 %v2730, %v2729
    %v2765 = vpack.c.b16 %v2732, %v2731
    %v2766 = vpack.c.b16 %v2734, %v2733
    %2799 = vmatprep.subr.bf16.mxu0 0
    %2800 = vmatpush1.bf16.msra.mxu0 %v2735
    %2801 = vmatprep.subr.bf16.mxu0 0
    %2802 = vmatpush1.bf16.msra.mxu0 %v2736
    %2803 = vmatprep.subr.bf16.mxu0 0
    %2804 = vmatpush1.bf16.msra.mxu0 %v2737
    %2805 = vmatprep.subr.bf16.mxu0 0
    %2806 = vmatpush1.bf16.msra.mxu0 %v2738
    %2807 = vmatprep.subr.bf16.mxu0 0
    %2808 = vmatpush1.bf16.msra.mxu0 %v2739
    %2809 = vmatprep.subr.bf16.mxu0 0
    %2810 = vmatpush1.bf16.msra.mxu0 %v2740
    %2811 = vmatprep.subr.bf16.mxu0 0
    %2812 = vmatpush1.bf16.msra.mxu0 %v2741
    %2813 = vmatprep.subr.bf16.mxu0 0
    %2814 = vmatpush1.bf16.msra.mxu0 %v2742
    %2815 = vmatprep.subr.bf16.mxu0 0
    %2816 = vmatpush1.bf16.msra.mxu0 %v2743
    %2817 = vmatprep.subr.bf16.mxu0 0
    %2818 = vmatpush1.bf16.msra.mxu0 %v2744
    %2819 = vmatprep.subr.bf16.mxu0 0
    %2820 = vmatpush1.bf16.msra.mxu0 %v2745
    %2821 = vmatprep.subr.bf16.mxu0 0
    %2822 = vmatpush1.bf16.msra.mxu0 %v2746
    %2823 = vmatprep.subr.bf16.mxu0 0
    %2824 = vmatpush1.bf16.msra.mxu0 %v2747
    %2825 = vmatprep.subr.bf16.mxu0 0
    %2826 = vmatpush1.bf16.msra.mxu0 %v2748
    %2827 = vmatprep.subr.bf16.mxu0 0
    %2828 = vmatpush1.bf16.msra.mxu0 %v2749
    %2829 = vmatprep.subr.bf16.mxu0 0
    %2830 = vmatpush1.bf16.msra.mxu0 %v2750
    %2831 = vmatprep.mubr.bf16.mxu0 %v2529
    %2832 = vmatmul.mubr.bf16.gmra.mrb[0].mxu0 %v2528
    %v2833 = vpop.f32.mrb[0].mxu0
    %v2834 = vadd.f32 %v2605, %v2833
    %v2835 = vpop.f32.mrb[0].mxu0
    %v2836 = vpop.f32.mrb[0].mxu0
    %v2837 = vadd.f32 %v2605, %v2836
    %v2838 = vpop.f32.mrb[0].mxu0
    %2839 = vmatprep.mubr.bf16.mxu0 %v2533
    %2840 = vmatmul.mubr.bf16.gmra.mrb[0].mxu0 %v2532
    %v2841 = vpop.f32.mrb[0].mxu0
    %v2842 = vadd.f32 %v2605, %v2841
    %v2843 = vpop.f32.mrb[0].mxu0
    %v2844 = vpop.f32.mrb[0].mxu0
    %v2845 = vadd.f32 %v2605, %v2844
    %v2846 = vpop.f32.mrb[0].mxu0
    %2847 = vdwg.mxu0
    %2848 = vmatprep.subr.bf16.mxu0 0
    %2849 = vmatpush1.bf16.msra.mxu0 %v2751
    %2850 = vmatprep.subr.bf16.mxu0 0
    %2851 = vmatpush1.bf16.msra.mxu0 %v2752
    %2852 = vmatprep.subr.bf16.mxu0 0
    %2853 = vmatpush1.bf16.msra.mxu0 %v2753
    %2854 = vmatprep.subr.bf16.mxu0 0
    %2855 = vmatpush1.bf16.msra.mxu0 %v2754
    %2856 = vmatprep.subr.bf16.mxu0 0
    %2857 = vmatpush1.bf16.msra.mxu0 %v2755
    %2858 = vmatprep.subr.bf16.mxu0 0
    %2859 = vmatpush1.bf16.msra.mxu0 %v2756
    %2860 = vmatprep.subr.bf16.mxu0 0
    %2861 = vmatpush1.bf16.msra.mxu0 %v2757
    %2862 = vmatprep.subr.bf16.mxu0 0
    %2863 = vmatpush1.bf16.msra.mxu0 %v2758
    %2864 = vmatprep.subr.bf16.mxu0 0
    %2865 = vmatpush1.bf16.msra.mxu0 %v2759
    %2866 = vmatprep.subr.bf16.mxu0 0
    %2867 = vmatpush1.bf16.msra.mxu0 %v2760
    %2868 = vmatprep.subr.bf16.mxu0 0
    %2869 = vmatpush1.bf16.msra.mxu0 %v2761
    %2870 = vmatprep.subr.bf16.mxu0 0
    %2871 = vmatpush1.bf16.msra.mxu0 %v2762
    %2872 = vmatprep.subr.bf16.mxu0 0
    %2873 = vmatpush1.bf16.msra.mxu0 %v2763
    %2874 = vmatprep.subr.bf16.mxu0 0
    %2875 = vmatpush1.bf16.msra.mxu0 %v2764
    %2876 = vmatprep.subr.bf16.mxu0 0
    %2877 = vmatpush1.bf16.msra.mxu0 %v2765
    %2878 = vmatprep.subr.bf16.mxu0 0
    %2879 = vmatpush1.bf16.msra.mxu0 %v2766
    %2880 = vmatprep.mubr.bf16.mxu0 %v2531
    %2881 = vmatmul.mubr.bf16.gmra.mrb[0].mxu0 %v2530
    %v2882 = vpop.f32.mrb[0].mxu0
    %v2883 = vadd.f32 %v2834, %v2882
    %v2884 = vpop.f32.mrb[0].mxu0
    %v2885 = vpop.f32.mrb[0].mxu0
    %v2886 = vadd.f32 %v2837, %v2885
    %v2887 = vpop.f32.mrb[0].mxu0
    %2888 = vmatprep.mubr.bf16.mxu0 %v2535
    %2889 = vmatmul.mubr.bf16.gmra.mrb[0].mxu0 %v2534
    %v2890 = vpop.f32.mrb[0].mxu0
    %v2891 = vadd.f32 %v2842, %v2890
    %v2892 = vpop.f32.mrb[0].mxu0
    %v2893 = vpop.f32.mrb[0].mxu0
    %v2894 = vadd.f32 %v2845, %v2893
    %v2895 = vpop.f32.mrb[0].mxu0
    %2896 = vdwg.mxu0
    %v2897 = vadd.f32 %v1992, %v2883
    %v2898 = vadd.f32 %v1993, %v2886
    %v2899 = vadd.f32 %v1994, %v2891
    %v2900 = vadd.f32 %v1995, %v2894
    %2901 = vst [vmem:[#allocation13] sm:$0xff] %v2897
    %2902 = vst [vmem:[#allocation13 + $0x8] sm:$0xff] %v2898
    %2903 = vst [vmem:[#allocation13 + $0x10] sm:$0xff] %v2899
    %2904 = vst [vmem:[#allocation13 + $0x18] sm:$0xff] %v2900
    // Predicated region
    $region78: #{_block_forward_impl.1} parent=1 // pred_check
      _
    $region79: #{_block_forward_impl.1} parent=1 // pred_check_branch
      %2906 = sbr.rel (0) target = $region81
    $region80: #{_block_forward_impl.1} parent=1 // pred_region
      %s2908 = ssub.s32 512, 512
      %2909 = vsyncadd [#allocation4], %s2908
      %s2910 = sshll.u32 [#allocation13], 4
      %s2911 = int_to_ptr.vmem [resolvable:$true] %s2910
      %2916 = dma.vmem_to_hbm [thread:$0]  %s2911, 512, %s13, [#allocation4], 128, 128, 8
    $region81: #{_block_forward_impl.1} parent=1 // pred_fallthru
      _
    // Predicated region
    $region82: #{_block_forward_impl.1} parent=1 // pred_check
      _
    $region83: #{_block_forward_impl.1} parent=1 // pred_check_branch
      %2918 = sbr.rel (0) target = $region85
    $region84: #{_block_forward_impl.1} parent=1 // pred_region
      %s2920 = ssub.s32 2048, 2048
      %2921 = vsyncadd [#allocation15], %s2920
      %s2922 = sshll.u32 [#allocation14], 4
      %s2923 = int_to_ptr.vmem [resolvable:$true] %s2922
      %2928 = dma.vmem_to_hbm [thread:$0]  %s2923, 2048, %s14, [#allocation15], 128, 128, 8
    $region85: #{_block_forward_impl.1} parent=1 // pred_fallthru
      _
    // Predicated region
    $region86: #{_block_forward_impl.1} parent=1 // pred_check
      _
    $region87: #{_block_forward_impl.1} parent=1 // pred_check_branch
      %2930 = sbr.rel (0) target = $region89
    $region88: #{_block_forward_impl.1} parent=1 // pred_region
      %2931 = dma.done [#allocation4], 512
    $region89: #{_block_forward_impl.1} parent=1 // pred_fallthru
      _
    // Predicated region
    $region90: #{_block_forward_impl.1} parent=1 // pred_check
      _
    $region91: #{_block_forward_impl.1} parent=1 // pred_check_branch
      %2933 = sbr.rel (0) target = $region93
    $region92: #{_block_forward_impl.1} parent=1 // pred_region
      %2934 = dma.done [#allocation15], 2048
    $region93: #{_block_forward_impl.1} parent=1 // pred_fallthru
      _
    %2935 = vsyncpa [#allocation3], 1
    %2936 = vsyncpa [#allocation6], 1
    %2937 = vsyncpa [#allocation9], 1
    %2938 = vsyncpa [#allocation12], 1
    %2939 = vsyncpa [#allocation4], 1
    %2940 = vsyncpa [#allocation15], 1

</llo_original>
